<compile_context>
chip_gen: v6e
topology: v6e:2x2x1
jax: 0.10.0
libtpu: 0.0.40
codegen_flags: <defaults>
</compile_context>

<pallas_src>
import functools

import jax
import jax.numpy as jnp
from jax.experimental import pallas as pl
from jax.experimental.pallas import tpu as pltpu

NUM_CLASSES = 24
NUM_REGIONS = 5
WEIGHT_CE = 1.0
WEIGHT_DICE = 1.0
SMOOTH = 1e-5          # soft_dice_kwargs['smooth']
TOPK_PERCENT = 10      # ce_kwargs['k']

LABEL_MAPPING = {1: 1, 2: 1, 3: 1, 4: 1, 5: 1, 6: 1, 7: 2, 8: 2, 9: 2,
                 10: 3, 11: 3, 12: 3, 13: 3, 14: 3, 15: 3, 16: 3, 17: 3,
                 18: 4, 19: 4, 20: 4, 21: 4, 22: 4, 23: 4}


def _region_matrix():
    # M[r, c] = 1 if class c is summed into region r.  Row 0 stays all-zero:
    # remap_labels never adds channel 0 anywhere (background logit is exactly 0).
    m = [[0.0] * NUM_CLASSES for _ in range(NUM_REGIONS)]
    for old, new in LABEL_MAPPING.items():
        m[new][old] = 1.0
    return jnp.array(m, dtype=jnp.float32)  # (5, 24)


def _remap_target(tgt):
    # label_mapping as closed-form thresholds: 0->0, 1..6->1, 7..9->2, 10..17->3, 18..23->4
    return jnp.where(tgt == 0, 0,
           jnp.where(tgt <= 6, 1,
           jnp.where(tgt <= 9, 2,
           jnp.where(tgt <= 17, 3, 4)))).astype(jnp.int32)


def _loss_kernel(logits_ref, tgt_ref, rmap_ref,
                 ce_ref, rce_ref,
                 tp_ref, fp_ref, fn_ref,
                 rtp_ref, rfp_ref, rfn_ref):
    i = pl.program_id(1)   # voxel-tile index within this batch element

    @pl.when(i == 0)
    def _():
        tp_ref[...] = jnp.zeros_like(tp_ref)
        fp_ref[...] = jnp.zeros_like(fp_ref)
        fn_ref[...] = jnp.zeros_like(fn_ref)
        rtp_ref[...] = jnp.zeros_like(rtp_ref)
        rfp_ref[...] = jnp.zeros_like(rfp_ref)
        rfn_ref[...] = jnp.zeros_like(rfn_ref)

    logits = logits_ref[...].astype(jnp.float32)   # (24, T) f32 (input may be bf16)
    tgt = tgt_ref[...]                             # (1, T) i32
    T = logits.shape[1]

    # -------- 24-class path (softmax over channel/sublane axis) --------
    m = jnp.max(logits, axis=0, keepdims=True)     # (1, T)
    shifted = logits - m
    e = jnp.exp(shifted)
    s = jnp.sum(e, axis=0, keepdims=True)
    p = e * pl.reciprocal(s, approx=False)         # softmax_helper_dim1 (exact)
    logs = jnp.log(s)                              # (1, T)

    cls = jax.lax.broadcasted_iota(jnp.int32, (NUM_CLASSES, T), 0)
    onehot = (cls == tgt).astype(jnp.float32)      # scatter_(1, gt, 1) equivalent

    # per-voxel CE = log(sum exp) - (logit_at_target - max); no full logp materialized
    ce_ref[...] = logs - jnp.sum(shifted * onehot, axis=0, keepdims=True)

    tp_c = jnp.sum(p * onehot, axis=1, keepdims=True)              # (24, 1)
    tp_ref[...] += tp_c
    fp_ref[...] += jnp.sum(p, axis=1, keepdims=True) - tp_c        # sum p*(1-oh)
    fn_ref[...] += jnp.sum(onehot, axis=1, keepdims=True) - tp_c   # sum (1-p)*oh

    # -------- region (5-class) path --------
    # remap_labels(net_output): region logits = M @ logits on the (otherwise idle) MXU
    rlogits = jnp.dot(rmap_ref[...], logits, preferred_element_type=jnp.float32)  # (5, T)
    rtgt = _remap_target(tgt)

    rm = jnp.max(rlogits, axis=0, keepdims=True)
    rshift = rlogits - rm
    re_ = jnp.exp(rshift)
    rs = jnp.sum(re_, axis=0, keepdims=True)
    rp = re_ * pl.reciprocal(rs, approx=False)
    rlogs = jnp.log(rs)

    rcls = jax.lax.broadcasted_iota(jnp.int32, (NUM_REGIONS, T), 0)
    ronehot = (rcls == rtgt).astype(jnp.float32)

    rce_ref[...] = rlogs - jnp.sum(rshift * ronehot, axis=0, keepdims=True)

    rtp_c = jnp.sum(rp * ronehot, axis=1, keepdims=True)           # (5, 1)
    rtp_ref[...] += rtp_c
    rfp_ref[...] += jnp.sum(rp, axis=1, keepdims=True) - rtp_c
    rfn_ref[...] += jnp.sum(ronehot, axis=1, keepdims=True) - rtp_c


@functools.partial(jax.jit, static_argnames=("tile_n",))
def region_dc_and_topk_loss(net_output, target, weight_region, *, tile_n=2048):
    B, C, X, Y, Z = net_output.shape
    assert C == NUM_CLASSES
    assert target.shape == (B, 1, X, Y, Z)
    Nb = X * Y * Z
    N = B * Nb
    assert Nb % 128 == 0, "pad per-sample voxel count to a multiple of 128 (and mask pads)"

    # Largest voxel tile <= tile_n that is a multiple of 128 and divides Nb.
    tile = min(tile_n, Nb)
    tile -= tile % 128
    while Nb % tile:
        tile -= 128

    # Native layout: pure reshapes, no HBM transpose pass.  Logits keep their
    # incoming dtype (bf16 stays bf16 in HBM; cast to f32 happens in-kernel).
    logits3d = net_output.reshape(B, C, Nb)
    tgt3d = target.reshape(B, 1, Nb).astype(jnp.int32)
    rmap = _region_matrix()

    grid = (B, Nb // tile)
    out = pl.pallas_call(
        _loss_kernel,
        out_shape=(
            jax.ShapeDtypeStruct((B, 1, Nb), jnp.float32),            # per-voxel CE (24-class)
            jax.ShapeDtypeStruct((B, 1, Nb), jnp.float32),            # per-voxel CE (region)
            jax.ShapeDtypeStruct((B, NUM_CLASSES, 1), jnp.float32),   # tp   (per batch)
            jax.ShapeDtypeStruct((B, NUM_CLASSES, 1), jnp.float32),   # fp
            jax.ShapeDtypeStruct((B, NUM_CLASSES, 1), jnp.float32),   # fn
            jax.ShapeDtypeStruct((B, NUM_REGIONS, 1), jnp.float32),   # region tp
            jax.ShapeDtypeStruct((B, NUM_REGIONS, 1), jnp.float32),   # region fp
            jax.ShapeDtypeStruct((B, NUM_REGIONS, 1), jnp.float32),   # region fn
        ),
        grid_spec=pltpu.PrefetchScalarGridSpec(
            num_scalar_prefetch=0,
            grid=grid,
            in_specs=[
                pl.BlockSpec((None, NUM_CLASSES, tile), lambda b, i: (b, 0, i)),
                pl.BlockSpec((None, 1, tile), lambda b, i: (b, 0, i)),
                pl.BlockSpec((NUM_REGIONS, NUM_CLASSES), lambda b, i: (0, 0)),
            ],
            out_specs=[
                pl.BlockSpec((None, 1, tile), lambda b, i: (b, 0, i)),
                pl.BlockSpec((None, 1, tile), lambda b, i: (b, 0, i)),
                pl.BlockSpec((None, NUM_CLASSES, 1), lambda b, i: (b, 0, 0)),
                pl.BlockSpec((None, NUM_CLASSES, 1), lambda b, i: (b, 0, 0)),
                pl.BlockSpec((None, NUM_CLASSES, 1), lambda b, i: (b, 0, 0)),
                pl.BlockSpec((None, NUM_REGIONS, 1), lambda b, i: (b, 0, 0)),
                pl.BlockSpec((None, NUM_REGIONS, 1), lambda b, i: (b, 0, 0)),
                pl.BlockSpec((None, NUM_REGIONS, 1), lambda b, i: (b, 0, 0)),
            ],
        ),
        compiler_params=pltpu.CompilerParams(
            dimension_semantics=("parallel", "arbitrary")),
    )(logits3d, tgt3d, rmap)

    ce_map, rce_map, tp, fp, fn, rtp, rfp, rfn = out

    def soft_dice(tp, fp, fn):
        # batch_dice=True: collapse the batch axis before the dice ratio.
        tp = jnp.sum(tp, axis=0)[:, 0]
        fp = jnp.sum(fp, axis=0)[:, 0]
        fn = jnp.sum(fn, axis=0)[:, 0]
        nominator = 2.0 * tp
        denominator = 2.0 * tp + fp + fn
        dc = (nominator + SMOOTH) / jnp.maximum(denominator + SMOOTH, 1e-8)
        dc = dc[1:]                 # do_bg=False
        return -jnp.mean(dc)

    dc_loss = soft_dice(tp, fp, fn)
    region_dc_loss = soft_dice(rtp, rfp, rfn)

    # TODO(synk): top-k stays in plain JAX (exact semantics of torch.topk); at
    # production nnU-Net voxel counts a two-pass threshold select would avoid
    # the O(N log N) XLA sort on the per-voxel CE maps.
    k = int(N * TOPK_PERCENT / 100)
    ce_loss = jnp.mean(jax.lax.top_k(ce_map.reshape(-1), k)[0])
    region_ce_loss = jnp.mean(jax.lax.top_k(rce_map.reshape(-1), k)[0])

    target_result = WEIGHT_CE * ce_loss + WEIGHT_DICE * dc_loss
    region_result = WEIGHT_CE * region_ce_loss + WEIGHT_DICE * region_dc_loss
    return weight_region * region_result + (1.0 - weight_region) * target_result


def _reference_loss(net_output, target, weight_region):
    # Pure-JAX reference of the same forward pass (for a sanity check).
    B, C, X, Y, Z = net_output.shape
    N = B * X * Y * Z
    logits = jnp.transpose(net_output, (1, 0, 2, 3, 4)).reshape(C, N).astype(jnp.float32)
    tgt = target.reshape(N).astype(jnp.int32)
    k = int(N * TOPK_PERCENT / 100)

    def one_path(lg, t, nc):
        p = jax.nn.softmax(lg, axis=0)
        logp = jax.nn.log_softmax(lg, axis=0)
        oh = jax.nn.one_hot(t, nc, axis=0, dtype=jnp.float32)
        ce = -jnp.sum(logp * oh, axis=0)
        tp = jnp.sum(p * oh, axis=1)
        fp = jnp.sum(p * (1 - oh), axis=1)
        fn = jnp.sum((1 - p) * oh, axis=1)
        dc = (2 * tp + SMOOTH) / jnp.maximum(2 * tp + fp + fn + SMOOTH, 1e-8)
        dc_loss = -jnp.mean(dc[1:])
        ce_loss = jnp.mean(jax.lax.top_k(ce, k)[0])
        return WEIGHT_CE * ce_loss + WEIGHT_DICE * dc_loss

    target_result = one_path(logits, tgt, NUM_CLASSES)
    region_result = one_path(_region_matrix() @ logits, _remap_target(tgt), NUM_REGIONS)
    return weight_region * region_result + (1 - weight_region) * target_result


if __name__ == "__main__":
    key = jax.random.PRNGKey(0)
    k1, k2 = jax.random.split(key)
    B, C, X, Y, Z = 2, NUM_CLASSES, 16, 16, 16      # Nb = 4096 voxels/sample, grid (2, 2)
    net_output = jax.random.normal(k1, (B, C, X, Y, Z), dtype=jnp.float32)
    target = jax.random.randint(k2, (B, 1, X, Y, Z), 0, C, dtype=jnp.int32)
    weight_region = 0.5

    loss = region_dc_and_topk_loss(net_output, target, weight_region)
    loss = jax.block_until_ready(loss)

    ref = _reference_loss(net_output, target, weight_region)
    assert jnp.allclose(loss, ref, atol=1e-3, rtol=1e-3), (float(loss), float(ref))

    print("KERNEL_OK")
</pallas_src>

<mosaic_0001>
module attributes {stable_mosaic.version = 11 : i64} {
  func.func @_loss_kernel(%arg0: i32, %arg1: i32, %arg2: memref<1x24x2048xf32, #tpu.memory_space<vmem>>, %arg3: memref<1x1x2048xi32, #tpu.memory_space<vmem>>, %arg4: memref<5x24xf32, #tpu.memory_space<vmem>>, %arg5: memref<1x1x2048xf32, #tpu.memory_space<vmem>>, %arg6: memref<1x1x2048xf32, #tpu.memory_space<vmem>>, %arg7: memref<1x24x1xf32, #tpu.memory_space<vmem>>, %arg8: memref<1x24x1xf32, #tpu.memory_space<vmem>>, %arg9: memref<1x24x1xf32, #tpu.memory_space<vmem>>, %arg10: memref<1x5x1xf32, #tpu.memory_space<vmem>>, %arg11: memref<1x5x1xf32, #tpu.memory_space<vmem>>, %arg12: memref<1x5x1xf32, #tpu.memory_space<vmem>>) attributes {dimension_semantics = [#tpu.dimension_semantics<parallel>, #tpu.dimension_semantics<arbitrary>], iteration_bounds = array<i64: 2, 2>, scalar_prefetch = 0 : i64, scratch_operands = 0 : i64, tpu.core_type = #tpu.core_type<tc>, window_params = [{transform_indices = @transform_0, window_bounds = array<i64: 1, 24, 2048>}, {transform_indices = @transform_1, window_bounds = array<i64: 1, 1, 2048>}, {pipeline_mode = #tpu.pipeline_mode<synchronous>, transform_indices = @transform_2, window_bounds = array<i64: 5, 24>}, {transform_indices = @transform_3, window_bounds = array<i64: 1, 1, 2048>}, {transform_indices = @transform_4, window_bounds = array<i64: 1, 1, 2048>}, {transform_indices = @transform_5, window_bounds = array<i64: 1, 24, 1>}, {transform_indices = @transform_6, window_bounds = array<i64: 1, 24, 1>}, {transform_indices = @transform_7, window_bounds = array<i64: 1, 24, 1>}, {transform_indices = @transform_8, window_bounds = array<i64: 1, 5, 1>}, {transform_indices = @transform_9, window_bounds = array<i64: 1, 5, 1>}, {transform_indices = @transform_10, window_bounds = array<i64: 1, 5, 1>}]} {
    %c0_i32 = arith.constant 0 : i32
    %0 = arith.cmpi eq, %arg1, %c0_i32 : i32
    %1 = arith.extui %0 : i1 to i32
    %c0_i32_0 = arith.constant 0 : i32
    %2 = arith.cmpi ne, %1, %c0_i32_0 : i32
    scf.if %2 {
      %cst_64 = arith.constant 0.000000e+00 : f32
      %126 = vector.broadcast %cst_64 : f32 to vector<24x1xf32>
      %c0_65 = arith.constant 0 : index
      %c0_66 = arith.constant 0 : index
      %c0_67 = arith.constant 0 : index
      %127 = vector.load %arg7[%c0_65, %c0_66, %c0_67] : memref<1x24x1xf32, #tpu.memory_space<vmem>>, vector<1x24x1xf32>
      %128 = vector.shape_cast %127 : vector<1x24x1xf32> to vector<24x1xf32>
      %129 = vector.shape_cast %126 : vector<24x1xf32> to vector<1x24x1xf32>
      tpu.vector_store %arg7[%c0_65, %c0_66, %c0_67], %129 {strides = array<i32>} : memref<1x24x1xf32, #tpu.memory_space<vmem>>, vector<1x24x1xf32>,
      %cst_68 = arith.constant 0.000000e+00 : f32
      %130 = vector.broadcast %cst_68 : f32 to vector<24x1xf32>
      %c0_69 = arith.constant 0 : index
      %c0_70 = arith.constant 0 : index
      %c0_71 = arith.constant 0 : index
      %131 = vector.load %arg8[%c0_69, %c0_70, %c0_71] : memref<1x24x1xf32, #tpu.memory_space<vmem>>, vector<1x24x1xf32>
      %132 = vector.shape_cast %131 : vector<1x24x1xf32> to vector<24x1xf32>
      %133 = vector.shape_cast %130 : vector<24x1xf32> to vector<1x24x1xf32>
      tpu.vector_store %arg8[%c0_69, %c0_70, %c0_71], %133 {strides = array<i32>} : memref<1x24x1xf32, #tpu.memory_space<vmem>>, vector<1x24x1xf32>,
      %cst_72 = arith.constant 0.000000e+00 : f32
      %134 = vector.broadcast %cst_72 : f32 to vector<24x1xf32>
      %c0_73 = arith.constant 0 : index
      %c0_74 = arith.constant 0 : index
      %c0_75 = arith.constant 0 : index
      %135 = vector.load %arg9[%c0_73, %c0_74, %c0_75] : memref<1x24x1xf32, #tpu.memory_space<vmem>>, vector<1x24x1xf32>
      %136 = vector.shape_cast %135 : vector<1x24x1xf32> to vector<24x1xf32>
      %137 = vector.shape_cast %134 : vector<24x1xf32> to vector<1x24x1xf32>
      tpu.vector_store %arg9[%c0_73, %c0_74, %c0_75], %137 {strides = array<i32>} : memref<1x24x1xf32, #tpu.memory_space<vmem>>, vector<1x24x1xf32>,
      %cst_76 = arith.constant 0.000000e+00 : f32
      %138 = vector.broadcast %cst_76 : f32 to vector<5x1xf32>
      %c0_77 = arith.constant 0 : index
      %c0_78 = arith.constant 0 : index
      %c0_79 = arith.constant 0 : index
      %139 = vector.load %arg10[%c0_77, %c0_78, %c0_79] : memref<1x5x1xf32, #tpu.memory_space<vmem>>, vector<1x5x1xf32>
      %140 = vector.shape_cast %139 : vector<1x5x1xf32> to vector<5x1xf32>
      %141 = vector.shape_cast %138 : vector<5x1xf32> to vector<1x5x1xf32>
      tpu.vector_store %arg10[%c0_77, %c0_78, %c0_79], %141 {strides = array<i32>} : memref<1x5x1xf32, #tpu.memory_space<vmem>>, vector<1x5x1xf32>,
      %cst_80 = arith.constant 0.000000e+00 : f32
      %142 = vector.broadcast %cst_80 : f32 to vector<5x1xf32>
      %c0_81 = arith.constant 0 : index
      %c0_82 = arith.constant 0 : index
      %c0_83 = arith.constant 0 : index
      %143 = vector.load %arg11[%c0_81, %c0_82, %c0_83] : memref<1x5x1xf32, #tpu.memory_space<vmem>>, vector<1x5x1xf32>
      %144 = vector.shape_cast %143 : vector<1x5x1xf32> to vector<5x1xf32>
      %145 = vector.shape_cast %142 : vector<5x1xf32> to vector<1x5x1xf32>
      tpu.vector_store %arg11[%c0_81, %c0_82, %c0_83], %145 {strides = array<i32>} : memref<1x5x1xf32, #tpu.memory_space<vmem>>, vector<1x5x1xf32>,
      %cst_84 = arith.constant 0.000000e+00 : f32
      %146 = vector.broadcast %cst_84 : f32 to vector<5x1xf32>
      %c0_85 = arith.constant 0 : index
      %c0_86 = arith.constant 0 : index
      %c0_87 = arith.constant 0 : index
      %147 = vector.load %arg12[%c0_85, %c0_86, %c0_87] : memref<1x5x1xf32, #tpu.memory_space<vmem>>, vector<1x5x1xf32>
      %148 = vector.shape_cast %147 : vector<1x5x1xf32> to vector<5x1xf32>
      %149 = vector.shape_cast %146 : vector<5x1xf32> to vector<1x5x1xf32>
      tpu.vector_store %arg12[%c0_85, %c0_86, %c0_87], %149 {strides = array<i32>} : memref<1x5x1xf32, #tpu.memory_space<vmem>>, vector<1x5x1xf32>,
    } else {
    }
    %c0 = arith.constant 0 : index
    %c0_1 = arith.constant 0 : index
    %c0_2 = arith.constant 0 : index
    %3 = vector.load %arg2[%c0, %c0_1, %c0_2] : memref<1x24x2048xf32, #tpu.memory_space<vmem>>, vector<1x24x2048xf32>
    %4 = vector.shape_cast %3 : vector<1x24x2048xf32> to vector<24x2048xf32>
    %c0_3 = arith.constant 0 : index
    %c0_4 = arith.constant 0 : index
    %c0_5 = arith.constant 0 : index
    %5 = vector.load %arg3[%c0_3, %c0_4, %c0_5] : memref<1x1x2048xi32, #tpu.memory_space<vmem>>, vector<1x1x2048xi32>
    %6 = vector.shape_cast %5 : vector<1x1x2048xi32> to vector<1x2048xi32>
    %cst = arith.constant dense<0xFF800000> : vector<2048xf32>
    %7 = vector.multi_reduction <maximumf>, %4, %cst [0] : vector<24x2048xf32> to vector<2048xf32>
    %8 = vector.shape_cast %7 : vector<2048xf32> to vector<1x2048xf32>
    %9 = vector.broadcast %8 : vector<1x2048xf32> to vector<24x2048xf32>
    %10 = arith.subf %4, %9 : vector<24x2048xf32>
    %11 = math.exp %10 : vector<24x2048xf32>
    %cst_6 = arith.constant dense<0.000000e+00> : vector<2048xf32>
    %12 = vector.multi_reduction <add>, %11, %cst_6 [0] : vector<24x2048xf32> to vector<2048xf32>
    %13 = vector.shape_cast %12 : vector<2048xf32> to vector<1x2048xf32>
    %14 = tpu.reciprocal %13 : vector<1x2048xf32> -> vector<1x2048xf32>
    %15 = vector.broadcast %14 : vector<1x2048xf32> to vector<24x2048xf32>
    %16 = arith.mulf %11, %15 : vector<24x2048xf32>
    %17 = math.log %13 : vector<1x2048xf32>
    %18 = tpu.iota {dimensions = array<i32: 0>} : vector<24x2048xi32>
    %19 = vector.broadcast %6 : vector<1x2048xi32> to vector<24x2048xi32>
    %20 = arith.cmpi eq, %18, %19 : vector<24x2048xi32>
    %21 = arith.extui %20 : vector<24x2048xi1> to vector<24x2048xi32>
    %22 = arith.sitofp %21 : vector<24x2048xi32> to vector<24x2048xf32>
    %23 = arith.mulf %10, %22 : vector<24x2048xf32>
    %cst_7 = arith.constant dense<0.000000e+00> : vector<2048xf32>
    %24 = vector.multi_reduction <add>, %23, %cst_7 [0] : vector<24x2048xf32> to vector<2048xf32>
    %25 = vector.shape_cast %24 : vector<2048xf32> to vector<1x2048xf32>
    %26 = arith.subf %17, %25 : vector<1x2048xf32>
    %c0_8 = arith.constant 0 : index
    %c0_9 = arith.constant 0 : index
    %c0_10 = arith.constant 0 : index
    %27 = vector.load %arg5[%c0_8, %c0_9, %c0_10] : memref<1x1x2048xf32, #tpu.memory_space<vmem>>, vector<1x1x2048xf32>
    %28 = vector.shape_cast %27 : vector<1x1x2048xf32> to vector<1x2048xf32>
    %29 = vector.shape_cast %26 : vector<1x2048xf32> to vector<1x1x2048xf32>
    tpu.vector_store %arg5[%c0_8, %c0_9, %c0_10], %29 {strides = array<i32>} : memref<1x1x2048xf32, #tpu.memory_space<vmem>>, vector<1x1x2048xf32>,
    %30 = arith.mulf %16, %22 : vector<24x2048xf32>
    %cst_11 = arith.constant dense<0.000000e+00> : vector<24xf32>
    %31 = vector.multi_reduction <add>, %30, %cst_11 [1] : vector<24x2048xf32> to vector<24xf32>
    %32 = vector.shape_cast %31 : vector<24xf32> to vector<24x1xf32>
    %c0_12 = arith.constant 0 : index
    %c0_13 = arith.constant 0 : index
    %c0_14 = arith.constant 0 : index
    %33 = vector.load %arg7[%c0_12, %c0_13, %c0_14] : memref<1x24x1xf32, #tpu.memory_space<vmem>>, vector<1x24x1xf32>
    %34 = vector.shape_cast %33 : vector<1x24x1xf32> to vector<24x1xf32>
    %35 = arith.addf %34, %32 : vector<24x1xf32>
    %c0_15 = arith.constant 0 : index
    %c0_16 = arith.constant 0 : index
    %c0_17 = arith.constant 0 : index
    %36 = vector.load %arg7[%c0_15, %c0_16, %c0_17] : memref<1x24x1xf32, #tpu.memory_space<vmem>>, vector<1x24x1xf32>
    %37 = vector.shape_cast %36 : vector<1x24x1xf32> to vector<24x1xf32>
    %38 = vector.shape_cast %35 : vector<24x1xf32> to vector<1x24x1xf32>
    tpu.vector_store %arg7[%c0_15, %c0_16, %c0_17], %38 {strides = array<i32>} : memref<1x24x1xf32, #tpu.memory_space<vmem>>, vector<1x24x1xf32>,
    %c0_18 = arith.constant 0 : index
    %c0_19 = arith.constant 0 : index
    %c0_20 = arith.constant 0 : index
    %39 = vector.load %arg8[%c0_18, %c0_19, %c0_20] : memref<1x24x1xf32, #tpu.memory_space<vmem>>, vector<1x24x1xf32>
    %40 = vector.shape_cast %39 : vector<1x24x1xf32> to vector<24x1xf32>
    %cst_21 = arith.constant dense<0.000000e+00> : vector<24xf32>
    %41 = vector.multi_reduction <add>, %16, %cst_21 [1] : vector<24x2048xf32> to vector<24xf32>
    %42 = vector.shape_cast %41 : vector<24xf32> to vector<24x1xf32>
    %43 = arith.subf %42, %32 : vector<24x1xf32>
    %44 = arith.addf %40, %43 : vector<24x1xf32>
    %c0_22 = arith.constant 0 : index
    %c0_23 = arith.constant 0 : index
    %c0_24 = arith.constant 0 : index
    %45 = vector.load %arg8[%c0_22, %c0_23, %c0_24] : memref<1x24x1xf32, #tpu.memory_space<vmem>>, vector<1x24x1xf32>
    %46 = vector.shape_cast %45 : vector<1x24x1xf32> to vector<24x1xf32>
    %47 = vector.shape_cast %44 : vector<24x1xf32> to vector<1x24x1xf32>
    tpu.vector_store %arg8[%c0_22, %c0_23, %c0_24], %47 {strides = array<i32>} : memref<1x24x1xf32, #tpu.memory_space<vmem>>, vector<1x24x1xf32>,
    %c0_25 = arith.constant 0 : index
    %c0_26 = arith.constant 0 : index
    %c0_27 = arith.constant 0 : index
    %48 = vector.load %arg9[%c0_25, %c0_26, %c0_27] : memref<1x24x1xf32, #tpu.memory_space<vmem>>, vector<1x24x1xf32>
    %49 = vector.shape_cast %48 : vector<1x24x1xf32> to vector<24x1xf32>
    %cst_28 = arith.constant dense<0.000000e+00> : vector<24xf32>
    %50 = vector.multi_reduction <add>, %22, %cst_28 [1] : vector<24x2048xf32> to vector<24xf32>
    %51 = vector.shape_cast %50 : vector<24xf32> to vector<24x1xf32>
    %52 = arith.subf %51, %32 : vector<24x1xf32>
    %53 = arith.addf %49, %52 : vector<24x1xf32>
    %c0_29 = arith.constant 0 : index
    %c0_30 = arith.constant 0 : index
    %c0_31 = arith.constant 0 : index
    %54 = vector.load %arg9[%c0_29, %c0_30, %c0_31] : memref<1x24x1xf32, #tpu.memory_space<vmem>>, vector<1x24x1xf32>
    %55 = vector.shape_cast %54 : vector<1x24x1xf32> to vector<24x1xf32>
    %56 = vector.shape_cast %53 : vector<24x1xf32> to vector<1x24x1xf32>
    tpu.vector_store %arg9[%c0_29, %c0_30, %c0_31], %56 {strides = array<i32>} : memref<1x24x1xf32, #tpu.memory_space<vmem>>, vector<1x24x1xf32>,
    %c0_32 = arith.constant 0 : index
    %c0_33 = arith.constant 0 : index
    %57 = vector.load %arg4[%c0_32, %c0_33] : memref<5x24xf32, #tpu.memory_space<vmem>>, vector<5x24xf32>
    %cst_34 = arith.constant dense<0.000000e+00> : vector<5x2048xf32>
    %58 = tpu.matmul %57, %4, %cst_34 {dimension_numbers = #tpu.dot_dimension_numbers<[1], [0], [0], [1], [0, 0, 1, 1], [], []>} : vector<5x24xf32>, vector<24x2048xf32>, vector<5x2048xf32> -> vector<5x2048xf32>
    %c0_i32_35 = arith.constant 0 : i32
    %59 = vector.broadcast %c0_i32_35 : i32 to vector<1x2048xi32>
    %60 = arith.cmpi eq, %6, %59 : vector<1x2048xi32>
    %c6_i32 = arith.constant 6 : i32
    %61 = vector.broadcast %c6_i32 : i32 to vector<1x2048xi32>
    %62 = arith.cmpi sle, %6, %61 : vector<1x2048xi32>
    %c9_i32 = arith.constant 9 : i32
    %63 = vector.broadcast %c9_i32 : i32 to vector<1x2048xi32>
    %64 = arith.cmpi sle, %6, %63 : vector<1x2048xi32>
    %c17_i32 = arith.constant 17 : i32
    %65 = vector.broadcast %c17_i32 : i32 to vector<1x2048xi32>
    %66 = arith.cmpi sle, %6, %65 : vector<1x2048xi32>
    %c3_i32 = arith.constant 3 : i32
    %c4_i32 = arith.constant 4 : i32
    %67 = vector.broadcast %c3_i32 : i32 to vector<1x2048xi32>
    %68 = vector.broadcast %c4_i32 : i32 to vector<1x2048xi32>
    %69 = arith.select %66, %67, %68 : vector<1x2048xi1>, vector<1x2048xi32>
    %c2_i32 = arith.constant 2 : i32
    %70 = vector.broadcast %c2_i32 : i32 to vector<1x2048xi32>
    %71 = arith.select %64, %70, %69 : vector<1x2048xi1>, vector<1x2048xi32>
    %c1_i32 = arith.constant 1 : i32
    %72 = vector.broadcast %c1_i32 : i32 to vector<1x2048xi32>
    %73 = arith.select %62, %72, %71 : vector<1x2048xi1>, vector<1x2048xi32>
    %c0_i32_36 = arith.constant 0 : i32
    %74 = vector.broadcast %c0_i32_36 : i32 to vector<1x2048xi32>
    %75 = arith.select %60, %74, %73 : vector<1x2048xi1>, vector<1x2048xi32>
    %cst_37 = arith.constant dense<0xFF800000> : vector<2048xf32>
    %76 = vector.multi_reduction <maximumf>, %58, %cst_37 [0] : vector<5x2048xf32> to vector<2048xf32>
    %77 = vector.shape_cast %76 : vector<2048xf32> to vector<1x2048xf32>
    %78 = vector.broadcast %77 : vector<1x2048xf32> to vector<5x2048xf32>
    %79 = arith.subf %58, %78 : vector<5x2048xf32>
    %80 = math.exp %79 : vector<5x2048xf32>
    %cst_38 = arith.constant dense<0.000000e+00> : vector<2048xf32>
    %81 = vector.multi_reduction <add>, %80, %cst_38 [0] : vector<5x2048xf32> to vector<2048xf32>
    %82 = vector.shape_cast %81 : vector<2048xf32> to vector<1x2048xf32>
    %83 = tpu.reciprocal %82 : vector<1x2048xf32> -> vector<1x2048xf32>
    %84 = vector.broadcast %83 : vector<1x2048xf32> to vector<5x2048xf32>
    %85 = arith.mulf %80, %84 : vector<5x2048xf32>
    %86 = math.log %82 : vector<1x2048xf32>
    %87 = tpu.iota {dimensions = array<i32: 0>} : vector<5x2048xi32>
    %88 = vector.broadcast %75 : vector<1x2048xi32> to vector<5x2048xi32>
    %89 = arith.cmpi eq, %87, %88 : vector<5x2048xi32>
    %90 = arith.extui %89 : vector<5x2048xi1> to vector<5x2048xi32>
    %91 = arith.sitofp %90 : vector<5x2048xi32> to vector<5x2048xf32>
    %92 = arith.mulf %79, %91 : vector<5x2048xf32>
    %cst_39 = arith.constant dense<0.000000e+00> : vector<2048xf32>
    %93 = vector.multi_reduction <add>, %92, %cst_39 [0] : vector<5x2048xf32> to vector<2048xf32>
    %94 = vector.shape_cast %93 : vector<2048xf32> to vector<1x2048xf32>
    %95 = arith.subf %86, %94 : vector<1x2048xf32>
    %c0_40 = arith.constant 0 : index
    %c0_41 = arith.constant 0 : index
    %c0_42 = arith.constant 0 : index
    %96 = vector.load %arg6[%c0_40, %c0_41, %c0_42] : memref<1x1x2048xf32, #tpu.memory_space<vmem>>, vector<1x1x2048xf32>
    %97 = vector.shape_cast %96 : vector<1x1x2048xf32> to vector<1x2048xf32>
    %98 = vector.shape_cast %95 : vector<1x2048xf32> to vector<1x1x2048xf32>
    tpu.vector_store %arg6[%c0_40, %c0_41, %c0_42], %98 {strides = array<i32>} : memref<1x1x2048xf32, #tpu.memory_space<vmem>>, vector<1x1x2048xf32>,
    %99 = arith.mulf %85, %91 : vector<5x2048xf32>
    %cst_43 = arith.constant dense<0.000000e+00> : vector<5xf32>
    %100 = vector.multi_reduction <add>, %99, %cst_43 [1] : vector<5x2048xf32> to vector<5xf32>
    %101 = vector.shape_cast %100 : vector<5xf32> to vector<5x1xf32>
    %c0_44 = arith.constant 0 : index
    %c0_45 = arith.constant 0 : index
    %c0_46 = arith.constant 0 : index
    %102 = vector.load %arg10[%c0_44, %c0_45, %c0_46] : memref<1x5x1xf32, #tpu.memory_space<vmem>>, vector<1x5x1xf32>
    %103 = vector.shape_cast %102 : vector<1x5x1xf32> to vector<5x1xf32>
    %104 = arith.addf %103, %101 : vector<5x1xf32>
    %c0_47 = arith.constant 0 : index
    %c0_48 = arith.constant 0 : index
    %c0_49 = arith.constant 0 : index
    %105 = vector.load %arg10[%c0_47, %c0_48, %c0_49] : memref<1x5x1xf32, #tpu.memory_space<vmem>>, vector<1x5x1xf32>
    %106 = vector.shape_cast %105 : vector<1x5x1xf32> to vector<5x1xf32>
    %107 = vector.shape_cast %104 : vector<5x1xf32> to vector<1x5x1xf32>
    tpu.vector_store %arg10[%c0_47, %c0_48, %c0_49], %107 {strides = array<i32>} : memref<1x5x1xf32, #tpu.memory_space<vmem>>, vector<1x5x1xf32>,
    %c0_50 = arith.constant 0 : index
    %c0_51 = arith.constant 0 : index
    %c0_52 = arith.constant 0 : index
    %108 = vector.load %arg11[%c0_50, %c0_51, %c0_52] : memref<1x5x1xf32, #tpu.memory_space<vmem>>, vector<1x5x1xf32>
    %109 = vector.shape_cast %108 : vector<1x5x1xf32> to vector<5x1xf32>
    %cst_53 = arith.constant dense<0.000000e+00> : vector<5xf32>
    %110 = vector.multi_reduction <add>, %85, %cst_53 [1] : vector<5x2048xf32> to vector<5xf32>
    %111 = vector.shape_cast %110 : vector<5xf32> to vector<5x1xf32>
    %112 = arith.subf %111, %101 : vector<5x1xf32>
    %113 = arith.addf %109, %112 : vector<5x1xf32>
    %c0_54 = arith.constant 0 : index
    %c0_55 = arith.constant 0 : index
    %c0_56 = arith.constant 0 : index
    %114 = vector.load %arg11[%c0_54, %c0_55, %c0_56] : memref<1x5x1xf32, #tpu.memory_space<vmem>>, vector<1x5x1xf32>
    %115 = vector.shape_cast %114 : vector<1x5x1xf32> to vector<5x1xf32>
    %116 = vector.shape_cast %113 : vector<5x1xf32> to vector<1x5x1xf32>
    tpu.vector_store %arg11[%c0_54, %c0_55, %c0_56], %116 {strides = array<i32>} : memref<1x5x1xf32, #tpu.memory_space<vmem>>, vector<1x5x1xf32>,
    %c0_57 = arith.constant 0 : index
    %c0_58 = arith.constant 0 : index
    %c0_59 = arith.constant 0 : index
    %117 = vector.load %arg12[%c0_57, %c0_58, %c0_59] : memref<1x5x1xf32, #tpu.memory_space<vmem>>, vector<1x5x1xf32>
    %118 = vector.shape_cast %117 : vector<1x5x1xf32> to vector<5x1xf32>
    %cst_60 = arith.constant dense<0.000000e+00> : vector<5xf32>
    %119 = vector.multi_reduction <add>, %91, %cst_60 [1] : vector<5x2048xf32> to vector<5xf32>
    %120 = vector.shape_cast %119 : vector<5xf32> to vector<5x1xf32>
    %121 = arith.subf %120, %101 : vector<5x1xf32>
    %122 = arith.addf %118, %121 : vector<5x1xf32>
    %c0_61 = arith.constant 0 : index
    %c0_62 = arith.constant 0 : index
    %c0_63 = arith.constant 0 : index
    %123 = vector.load %arg12[%c0_61, %c0_62, %c0_63] : memref<1x5x1xf32, #tpu.memory_space<vmem>>, vector<1x5x1xf32>
    %124 = vector.shape_cast %123 : vector<1x5x1xf32> to vector<5x1xf32>
    %125 = vector.shape_cast %122 : vector<5x1xf32> to vector<1x5x1xf32>
    tpu.vector_store %arg12[%c0_61, %c0_62, %c0_63], %125 {strides = array<i32>} : memref<1x5x1xf32, #tpu.memory_space<vmem>>, vector<1x5x1xf32>,
    return
  }
  func.func @transform_0(%arg0: i32, %arg1: i32) -> (i32, i32, i32) {
    %c0_i32 = arith.constant 0 : i32
    %c0_i32_0 = arith.constant 0 : i32
    return %arg0, %c0_i32, %arg1 : i32, i32, i32
  }
  func.func @transform_1(%arg0: i32, %arg1: i32) -> (i32, i32, i32) {
    %c0_i32 = arith.constant 0 : i32
    %c0_i32_0 = arith.constant 0 : i32
    return %arg0, %c0_i32, %arg1 : i32, i32, i32
  }
  func.func @transform_2(%arg0: i32, %arg1: i32) -> (i32, i32) {
    %c0_i32 = arith.constant 0 : i32
    %c0_i32_0 = arith.constant 0 : i32
    %c0_i32_1 = arith.constant 0 : i32
    return %c0_i32, %c0_i32_0 : i32, i32
  }
  func.func @transform_3(%arg0: i32, %arg1: i32) -> (i32, i32, i32) {
    %c0_i32 = arith.constant 0 : i32
    %c0_i32_0 = arith.constant 0 : i32
    return %arg0, %c0_i32, %arg1 : i32, i32, i32
  }
  func.func @transform_4(%arg0: i32, %arg1: i32) -> (i32, i32, i32) {
    %c0_i32 = arith.constant 0 : i32
    %c0_i32_0 = arith.constant 0 : i32
    return %arg0, %c0_i32, %arg1 : i32, i32, i32
  }
  func.func @transform_5(%arg0: i32, %arg1: i32) -> (i32, i32, i32) {
    %c0_i32 = arith.constant 0 : i32
    %c0_i32_0 = arith.constant 0 : i32
    %c0_i32_1 = arith.constant 0 : i32
    return %arg0, %c0_i32, %c0_i32_0 : i32, i32, i32
  }
  func.func @transform_6(%arg0: i32, %arg1: i32) -> (i32, i32, i32) {
    %c0_i32 = arith.constant 0 : i32
    %c0_i32_0 = arith.constant 0 : i32
    %c0_i32_1 = arith.constant 0 : i32
    return %arg0, %c0_i32, %c0_i32_0 : i32, i32, i32
  }
  func.func @transform_7(%arg0: i32, %arg1: i32) -> (i32, i32, i32) {
    %c0_i32 = arith.constant 0 : i32
    %c0_i32_0 = arith.constant 0 : i32
    %c0_i32_1 = arith.constant 0 : i32
    return %arg0, %c0_i32, %c0_i32_0 : i32, i32, i32
  }
  func.func @transform_8(%arg0: i32, %arg1: i32) -> (i32, i32, i32) {
    %c0_i32 = arith.constant 0 : i32
    %c0_i32_0 = arith.constant 0 : i32
    %c0_i32_1 = arith.constant 0 : i32
    return %arg0, %c0_i32, %c0_i32_0 : i32, i32, i32
  }
  func.func @transform_9(%arg0: i32, %arg1: i32) -> (i32, i32, i32) {
    %c0_i32 = arith.constant 0 : i32
    %c0_i32_0 = arith.constant 0 : i32
    %c0_i32_1 = arith.constant 0 : i32
    return %arg0, %c0_i32, %c0_i32_0 : i32, i32, i32
  }
  func.func @transform_10(%arg0: i32, %arg1: i32) -> (i32, i32, i32) {
    %c0_i32 = arith.constant 0 : i32
    %c0_i32_0 = arith.constant 0 : i32
    %c0_i32_1 = arith.constant 0 : i32
    return %arg0, %c0_i32, %c0_i32_0 : i32, i32, i32
  }
}

</mosaic_0001>

<llo_original>
// kernel: region_dc_and_topk_loss.1
$region0: #{region_dc_and_topk_loss.1}
  #allocation0 [shape = 'u32[]', space=smem, size = 0x4, offset = 0x4, fixed_abs, tag = 'smem constant byte address 0x4 - core index']
  #allocation1 [shape = 'u32[144,128]{1,0:T(1,128)}', space=vmem, size = 0x12000, scoped, tag = 'internal scratch']
  %s0 = inlined_call_operand.vmem [shape: f32[2,24,4096], index: 0, kind: input, shape index: {}]
  %s1 = inlined_call_operand.vmem [shape: s32[2,1,4096], index: 1, kind: input, shape index: {}]
  %s2 = inlined_call_operand.vmem [shape: f32[5,24], index: 2, kind: input, shape index: {}]
  %s3 = inlined_call_operand.vmem [shape: f32[2,1,4096], index: 3, kind: output, shape index: {0}]
  %s4 = inlined_call_operand.vmem [shape: f32[2,1,4096], index: 4, kind: output, shape index: {1}]
  %s5 = inlined_call_operand.vmem [shape: f32[2,24,1], index: 5, kind: output, shape index: {2}]
  %s6 = inlined_call_operand.vmem [shape: f32[2,24,1], index: 6, kind: output, shape index: {3}]
  %s7 = inlined_call_operand.vmem [shape: f32[2,24,1], index: 7, kind: output, shape index: {4}]
  %s8 = inlined_call_operand.vmem [shape: f32[2,5,1], index: 8, kind: output, shape index: {5}]
  %s9 = inlined_call_operand.vmem [shape: f32[2,5,1], index: 9, kind: output, shape index: {6}]
  %s10 = inlined_call_operand.vmem [shape: f32[2,5,1], index: 10, kind: output, shape index: {7}]
  %11 = xla_tuple %s3, %s4, %s5, %s6, %s7, %s8, %s9, %s10
  %s12 = sld [smem:[#allocation0]]
  $region128: #{region_dc_and_topk_loss.1} parent=0
    _
  %s14 = ssub.s32 1, %s12
  %s15 = scalar_select 0, %s14, %s12
  $region1: #{region_dc_and_topk_loss.1} parent=0
    #allocation2 [shape = 'u8[393216]{0}', space=vmem, size = 0x60000, scoped, tag = 'input window, operand 0']
    loop: start=0, step=1, limit=6
    $region2: #{region_dc_and_topk_loss.1} parent=1 // loop_pre_header
      _
    $region3: #{region_dc_and_topk_loss.1} parent=1 // loop_header
      %s17 = sphi 0, %s21
      %p18 = scmp.ge.s32.totalorder %s17, 6
      %s24 = sphi 0, %s36
      %s25 = sphi 0, %s32
      %s26 = sphi 0, %s24
      %s27 = sphi 0, %s25
      %s28 = sphi 0, %s26
      %s29 = sphi 0, %s27
      %s41 = sphi 0, %s43
      %s44 = sphi 0, %s41
      %s45 = sphi 0, %s44
      %s61 = sphi 0, %s45
      %s69 = sphi 0, %s71
      %s72 = sphi 0, %s69
      %s73 = sphi 0, %s72
      %s89 = sphi 0, %s73
      %s93 = sphi 0, %s93
      %s95 = sphi 0, %s93
      %s96 = sphi 0, %s95
      %s110 = sphi 0, %s96
      %s118 = sphi 0, %s120
      %s121 = sphi 0, %s118
      %s122 = sphi 0, %s121
      %s138 = sphi 0, %s122
      %s146 = sphi 0, %s148
      %s149 = sphi 0, %s146
      %s150 = sphi 0, %s149
      %s166 = sphi 0, %s150
      %s172 = sphi 0, %s174
      %s175 = sphi 0, %s172
      %s176 = sphi 0, %s175
      %s192 = sphi 0, %s176
      %s198 = sphi 0, %s200
      %s201 = sphi 0, %s198
      %s202 = sphi 0, %s201
      %s218 = sphi 0, %s202
      %s224 = sphi 0, %s226
      %s227 = sphi 0, %s224
      %s228 = sphi 0, %s227
      %s244 = sphi 0, %s228
      %s250 = sphi 0, %s252
      %s253 = sphi 0, %s250
      %s254 = sphi 0, %s253
      %s270 = sphi 0, %s254
      %s276 = sphi 0, %s278
      %s279 = sphi 0, %s276
      %s280 = sphi 0, %s279
      %s296 = sphi 0, %s280
      %s302 = sphi 0, %s304
      %s305 = sphi 0, %s302
      %s306 = sphi 0, %s305
      %s322 = sphi 0, %s306
    $region4: #{region_dc_and_topk_loss.1} parent=1 // loop_header_branch
      %20 = sbr.rel (%p18) target = $region8
    $region5: #{region_dc_and_topk_loss.1} parent=1 // loop_body
      %s22 = ssub.s32 %s17, 1
      %s23 = ssub.s32 %s17, 2
      %s30 = sadd.s32 1, %s25
      %p31 = scmp.ge.s32.totalorder %s30, 2
      %s32 = scalar_select %p31, 0, %s30
      %s33 = sadd.s32 1, %s24
      %s34 = scalar_select %p31, %s33, %s24
      %p35 = scmp.ge.s32.totalorder %s34, 2
      %s36 = scalar_select %p35, 0, %s34
      %s37 = ssub.s32 %s24, %s36
      %s38 = ssub.s32 %s25, %s32
      %s39 = sor.u32 %s37, %s38
      %p40 = scmp.eq.s32.totalorder %s39, 0
      %s42 = sadd.s32 %s41, 1
      %s43 = scalar_select %p40, %s41, %s42
      %p46 = pneg %p40
      %p47 = scmp.eq.s32.totalorder %s17, 3
      %p48 = por %p46, %p47
      %p49 = scmp.ne.s32.totalorder %s41, %s44
      %p50 = scmp.eq.s32.totalorder %s17, 0
      %p51 = por %p49, %p50
      %p52 = scmp.ne.s32.totalorder %s41, %s44
      %p53 = scmp.eq.s32.totalorder %s22, 3
      %p54 = por %p52, %p53
      %p55 = scmp.ne.s32.totalorder %s44, %s45
      %p56 = scmp.eq.s32.totalorder %s22, 0
      %p57 = por %p55, %p56
      %p58 = scmp.ne.s32.totalorder %s44, %s45
      %p59 = scmp.eq.s32.totalorder %s23, 3
      %p60 = por %p58, %p59
      %p62 = scmp.ne.s32.totalorder %s45, %s61
      %p63 = scmp.eq.s32.totalorder %s23, 0
      %p64 = por %p62, %p63
      %s65 = ssub.s32 %s24, %s36
      %s66 = ssub.s32 %s25, %s32
      %s67 = sor.u32 %s65, %s66
      %p68 = scmp.eq.s32.totalorder %s67, 0
      %s70 = sadd.s32 %s69, 1
      %s71 = scalar_select %p68, %s69, %s70
      %p74 = pneg %p68
      %p75 = scmp.eq.s32.totalorder %s17, 3
      %p76 = por %p74, %p75
      %p77 = scmp.ne.s32.totalorder %s69, %s72
      %p78 = scmp.eq.s32.totalorder %s17, 0
      %p79 = por %p77, %p78
      %p80 = scmp.ne.s32.totalorder %s69, %s72
      %p81 = scmp.eq.s32.totalorder %s22, 3
      %p82 = por %p80, %p81
      %p83 = scmp.ne.s32.totalorder %s72, %s73
      %p84 = scmp.eq.s32.totalorder %s22, 0
      %p85 = por %p83, %p84
      %p86 = scmp.ne.s32.totalorder %s72, %s73
      %p87 = scmp.eq.s32.totalorder %s23, 3
      %p88 = por %p86, %p87
      %p90 = scmp.ne.s32.totalorder %s73, %s89
      %p91 = scmp.eq.s32.totalorder %s23, 0
      %p92 = por %p90, %p91
      %s94 = sadd.s32 %s93, 1
      %p97 = scmp.eq.s32.totalorder %s17, 3
      %p98 = scmp.ne.s32.totalorder %s93, %s95
      %p99 = scmp.eq.s32.totalorder %s17, 0
      %p100 = por %p98, %p99
      %p101 = scmp.ne.s32.totalorder %s93, %s95
      %p102 = scmp.eq.s32.totalorder %s22, 3
      %p103 = por %p101, %p102
      %p104 = scmp.ne.s32.totalorder %s95, %s96
      %p105 = scmp.eq.s32.totalorder %s22, 0
      %p106 = por %p104, %p105
      %p107 = scmp.ne.s32.totalorder %s95, %s96
      %p108 = scmp.eq.s32.totalorder %s23, 3
      %p109 = por %p107, %p108
      %p111 = scmp.ne.s32.totalorder %s96, %s110
      %p112 = scmp.eq.s32.totalorder %s23, 0
      %p113 = por %p111, %p112
      %s114 = ssub.s32 %s24, %s36
      %s115 = ssub.s32 %s25, %s32
      %s116 = sor.u32 %s114, %s115
      %p117 = scmp.eq.s32.totalorder %s116, 0
      %s119 = sadd.s32 %s118, 1
      %s120 = scalar_select %p117, %s118, %s119
      %p123 = pneg %p117
      %p124 = scmp.eq.s32.totalorder %s17, 3
      %p125 = por %p123, %p124
      %p126 = scmp.ne.s32.totalorder %s118, %s121
      %p127 = scmp.eq.s32.totalorder %s17, 0
      %p128 = por %p126, %p127
      %p129 = scmp.ne.s32.totalorder %s118, %s121
      %p130 = scmp.eq.s32.totalorder %s22, 3
      %p131 = por %p129, %p130
      %p132 = scmp.ne.s32.totalorder %s121, %s122
      %p133 = scmp.eq.s32.totalorder %s22, 0
      %p134 = por %p132, %p133
      %p135 = scmp.ne.s32.totalorder %s121, %s122
      %p136 = scmp.eq.s32.totalorder %s23, 3
      %p137 = por %p135, %p136
      %p139 = scmp.ne.s32.totalorder %s122, %s138
      %p140 = scmp.eq.s32.totalorder %s23, 0
      %p141 = por %p139, %p140
      %s142 = ssub.s32 %s24, %s36
      %s143 = ssub.s32 %s25, %s32
      %s144 = sor.u32 %s142, %s143
      %p145 = scmp.eq.s32.totalorder %s144, 0
      %s147 = sadd.s32 %s146, 1
      %s148 = scalar_select %p145, %s146, %s147
      %p151 = pneg %p145
      %p152 = scmp.eq.s32.totalorder %s17, 3
      %p153 = por %p151, %p152
      %p154 = scmp.ne.s32.totalorder %s146, %s149
      %p155 = scmp.eq.s32.totalorder %s17, 0
      %p156 = por %p154, %p155
      %p157 = scmp.ne.s32.totalorder %s146, %s149
      %p158 = scmp.eq.s32.totalorder %s22, 3
      %p159 = por %p157, %p158
      %p160 = scmp.ne.s32.totalorder %s149, %s150
      %p161 = scmp.eq.s32.totalorder %s22, 0
      %p162 = por %p160, %p161
      %p163 = scmp.ne.s32.totalorder %s149, %s150
      %p164 = scmp.eq.s32.totalorder %s23, 3
      %p165 = por %p163, %p164
      %p167 = scmp.ne.s32.totalorder %s150, %s166
      %p168 = scmp.eq.s32.totalorder %s23, 0
      %p169 = por %p167, %p168
      %s170 = ssub.s32 %s24, %s36
      %p171 = scmp.eq.s32.totalorder %s170, 0
      %s173 = sadd.s32 %s172, 1
      %s174 = scalar_select %p171, %s172, %s173
      %p177 = pneg %p171
      %p178 = scmp.eq.s32.totalorder %s17, 3
      %p179 = por %p177, %p178
      %p180 = scmp.ne.s32.totalorder %s172, %s175
      %p181 = scmp.eq.s32.totalorder %s17, 0
      %p182 = por %p180, %p181
      %p183 = scmp.ne.s32.totalorder %s172, %s175
      %p184 = scmp.eq.s32.totalorder %s22, 3
      %p185 = por %p183, %p184
      %p186 = scmp.ne.s32.totalorder %s175, %s176
      %p187 = scmp.eq.s32.totalorder %s22, 0
      %p188 = por %p186, %p187
      %p189 = scmp.ne.s32.totalorder %s175, %s176
      %p190 = scmp.eq.s32.totalorder %s23, 3
      %p191 = por %p189, %p190
      %p193 = scmp.ne.s32.totalorder %s176, %s192
      %p194 = scmp.eq.s32.totalorder %s23, 0
      %p195 = por %p193, %p194
      %s196 = ssub.s32 %s24, %s36
      %p197 = scmp.eq.s32.totalorder %s196, 0
      %s199 = sadd.s32 %s198, 1
      %s200 = scalar_select %p197, %s198, %s199
      %p203 = pneg %p197
      %p204 = scmp.eq.s32.totalorder %s17, 3
      %p205 = por %p203, %p204
      %p206 = scmp.ne.s32.totalorder %s198, %s201
      %p207 = scmp.eq.s32.totalorder %s17, 0
      %p208 = por %p206, %p207
      %p209 = scmp.ne.s32.totalorder %s198, %s201
      %p210 = scmp.eq.s32.totalorder %s22, 3
      %p211 = por %p209, %p210
      %p212 = scmp.ne.s32.totalorder %s201, %s202
      %p213 = scmp.eq.s32.totalorder %s22, 0
      %p214 = por %p212, %p213
      %p215 = scmp.ne.s32.totalorder %s201, %s202
      %p216 = scmp.eq.s32.totalorder %s23, 3
      %p217 = por %p215, %p216
      %p219 = scmp.ne.s32.totalorder %s202, %s218
      %p220 = scmp.eq.s32.totalorder %s23, 0
      %p221 = por %p219, %p220
      %s222 = ssub.s32 %s24, %s36
      %p223 = scmp.eq.s32.totalorder %s222, 0
      %s225 = sadd.s32 %s224, 1
      %s226 = scalar_select %p223, %s224, %s225
      %p229 = pneg %p223
      %p230 = scmp.eq.s32.totalorder %s17, 3
      %p231 = por %p229, %p230
      %p232 = scmp.ne.s32.totalorder %s224, %s227
      %p233 = scmp.eq.s32.totalorder %s17, 0
      %p234 = por %p232, %p233
      %p235 = scmp.ne.s32.totalorder %s224, %s227
      %p236 = scmp.eq.s32.totalorder %s22, 3
      %p237 = por %p235, %p236
      %p238 = scmp.ne.s32.totalorder %s227, %s228
      %p239 = scmp.eq.s32.totalorder %s22, 0
      %p240 = por %p238, %p239
      %p241 = scmp.ne.s32.totalorder %s227, %s228
      %p242 = scmp.eq.s32.totalorder %s23, 3
      %p243 = por %p241, %p242
      %p245 = scmp.ne.s32.totalorder %s228, %s244
      %p246 = scmp.eq.s32.totalorder %s23, 0
      %p247 = por %p245, %p246
      %s248 = ssub.s32 %s24, %s36
      %p249 = scmp.eq.s32.totalorder %s248, 0
      %s251 = sadd.s32 %s250, 1
      %s252 = scalar_select %p249, %s250, %s251
      %p255 = pneg %p249
      %p256 = scmp.eq.s32.totalorder %s17, 3
      %p257 = por %p255, %p256
      %p258 = scmp.ne.s32.totalorder %s250, %s253
      %p259 = scmp.eq.s32.totalorder %s17, 0
      %p260 = por %p258, %p259
      %p261 = scmp.ne.s32.totalorder %s250, %s253
      %p262 = scmp.eq.s32.totalorder %s22, 3
      %p263 = por %p261, %p262
      %p264 = scmp.ne.s32.totalorder %s253, %s254
      %p265 = scmp.eq.s32.totalorder %s22, 0
      %p266 = por %p264, %p265
      %p267 = scmp.ne.s32.totalorder %s253, %s254
      %p268 = scmp.eq.s32.totalorder %s23, 3
      %p269 = por %p267, %p268
      %p271 = scmp.ne.s32.totalorder %s254, %s270
      %p272 = scmp.eq.s32.totalorder %s23, 0
      %p273 = por %p271, %p272
      %s274 = ssub.s32 %s24, %s36
      %p275 = scmp.eq.s32.totalorder %s274, 0
      %s277 = sadd.s32 %s276, 1
      %s278 = scalar_select %p275, %s276, %s277
      %p281 = pneg %p275
      %p282 = scmp.eq.s32.totalorder %s17, 3
      %p283 = por %p281, %p282
      %p284 = scmp.ne.s32.totalorder %s276, %s279
      %p285 = scmp.eq.s32.totalorder %s17, 0
      %p286 = por %p284, %p285
      %p287 = scmp.ne.s32.totalorder %s276, %s279
      %p288 = scmp.eq.s32.totalorder %s22, 3
      %p289 = por %p287, %p288
      %p290 = scmp.ne.s32.totalorder %s279, %s280
      %p291 = scmp.eq.s32.totalorder %s22, 0
      %p292 = por %p290, %p291
      %p293 = scmp.ne.s32.totalorder %s279, %s280
      %p294 = scmp.eq.s32.totalorder %s23, 3
      %p295 = por %p293, %p294
      %p297 = scmp.ne.s32.totalorder %s280, %s296
      %p298 = scmp.eq.s32.totalorder %s23, 0
      %p299 = por %p297, %p298
      %s300 = ssub.s32 %s24, %s36
      %p301 = scmp.eq.s32.totalorder %s300, 0
      %s303 = sadd.s32 %s302, 1
      %s304 = scalar_select %p301, %s302, %s303
      %p307 = pneg %p301
      %p308 = scmp.eq.s32.totalorder %s17, 3
      %p309 = por %p307, %p308
      %p310 = scmp.ne.s32.totalorder %s302, %s305
      %p311 = scmp.eq.s32.totalorder %s17, 0
      %p312 = por %p310, %p311
      %p313 = scmp.ne.s32.totalorder %s302, %s305
      %p314 = scmp.eq.s32.totalorder %s22, 3
      %p315 = por %p313, %p314
      %p316 = scmp.ne.s32.totalorder %s305, %s306
      %p317 = scmp.eq.s32.totalorder %s22, 0
      %p318 = por %p316, %p317
      %p319 = scmp.ne.s32.totalorder %s305, %s306
      %p320 = scmp.eq.s32.totalorder %s23, 3
      %p321 = por %p319, %p320
      %p323 = scmp.ne.s32.totalorder %s306, %s322
      %p324 = scmp.eq.s32.totalorder %s23, 0
      %p325 = por %p323, %p324
      %p326 = scmp.le.s32.totalorder 1, %s17
      %p327 = scmp.lt.s32.totalorder %s17, 5
      %p328 = pnand %p326, %p327
      %p329 = pneg %p328
      // Predicated region
      $region9: #{region_dc_and_topk_loss.1} parent=5 // pred_check
        _
      $region10: #{region_dc_and_topk_loss.1} parent=5 // pred_check_branch
        %331 = sbr.rel (%p328) target = $region12
      $region11: #{region_dc_and_topk_loss.1} parent=5 // pred_region
        %s332 = ssub.s32 %s17, 1
        // Predicated region
        $region13: #{region_dc_and_topk_loss.1} parent=11 // pred_check
          %p333 = pneg %p106
        $region14: #{region_dc_and_topk_loss.1} parent=11 // pred_check_branch
          %335 = sbr.rel (%p333) target = $region16
        $region15: #{region_dc_and_topk_loss.1} parent=11 // pred_region
          _
        $region16: #{region_dc_and_topk_loss.1} parent=11 // pred_fallthru
          _
      $region12: #{region_dc_and_topk_loss.1} parent=5 // pred_fallthru
        _
      %p336 = scmp.lt.s32.totalorder %s17, 4
      // Predicated region
      $region17: #{region_dc_and_topk_loss.1} parent=5 // pred_check
        %p337 = pneg %p336
      $region18: #{region_dc_and_topk_loss.1} parent=5 // pred_check_branch
        %339 = sbr.rel (%p337) target = $region20
      $region19: #{region_dc_and_topk_loss.1} parent=5 // pred_region
        // Predicated region
        $region21: #{region_dc_and_topk_loss.1} parent=19 // pred_check
          %p340 = pneg %p51
        $region22: #{region_dc_and_topk_loss.1} parent=19 // pred_check_branch
          %342 = sbr.rel (%p340) target = $region24
        $region23: #{region_dc_and_topk_loss.1} parent=19 // pred_region
          %s343 = sand.u32 %s41, 1
          %s344 = sand.u32 %s41, 1
          %s345 = smul.addr %s344, 384
          %s346 = scalar_lea.vmem [#allocation2], %s345
          %s347 = smul.u32 16, %s25
          %s348 = smul.addr %s24, 96
          %s349 = sadd.s32 %s347, %s348
          %s350 = smul.addr %s349, 8
          %s351 = scalar_lea.vmem %s0, %s350
          // Predicated region
          $region25: #{region_dc_and_topk_loss.1} parent=23 // pred_check
            _
          $region26: #{region_dc_and_topk_loss.1} parent=23 // pred_check_branch
            %353 = sbr.rel (0) target = $region28
          $region27: #{region_dc_and_topk_loss.1} parent=23 // pred_region
            // Predicated region
            $region29: #{region_dc_and_topk_loss.1} parent=27 // pred_check
              _
            $region30: #{region_dc_and_topk_loss.1} parent=27 // pred_check_branch
              %355 = sbr.rel (0) target = $region32
            $region31: #{region_dc_and_topk_loss.1} parent=27 // pred_region
              loop: start=0, step=1, limit=1
              $region33: #{region_dc_and_topk_loss.1} parent=31 // loop_pre_header
                _
              $region34: #{region_dc_and_topk_loss.1} parent=31 // loop_header
                %s357 = sphi 0, %s361
                %p358 = scmp.ge.s32.totalorder %s357, 1
                %s362 = sphi %s351, %s351
                %s363 = sphi %s346, %s346
              $region35: #{region_dc_and_topk_loss.1} parent=31 // loop_header_branch
                %360 = sbr.rel (%p358) target = $region39
              $region36: #{region_dc_and_topk_loss.1} parent=31 // loop_body
                %v364 = vld [vmem:[%s362] sm:$0xff]
                %365 = vst [vmem:[%s363] sm:$0xff] %v364
                %v366 = vld [vmem:[%s362 + $0x8] sm:$0xff]
                %367 = vst [vmem:[%s363 + $0x8] sm:$0xff] %v366
                %v368 = vld [vmem:[%s362 + $0x10] sm:$0xff]
                %369 = vst [vmem:[%s363 + $0x10] sm:$0xff] %v368
                %v370 = vld [vmem:[%s362 + $0x18] sm:$0xff]
                %371 = vst [vmem:[%s363 + $0x18] sm:$0xff] %v370
                %v372 = vld [vmem:[%s362 + $0x20] sm:$0xff]
                %373 = vst [vmem:[%s363 + $0x20] sm:$0xff] %v372
                %v374 = vld [vmem:[%s362 + $0x28] sm:$0xff]
                %375 = vst [vmem:[%s363 + $0x28] sm:$0xff] %v374
                %v376 = vld [vmem:[%s362 + $0x30] sm:$0xff]
                %377 = vst [vmem:[%s363 + $0x30] sm:$0xff] %v376
                %v378 = vld [vmem:[%s362 + $0x38] sm:$0xff]
                %379 = vst [vmem:[%s363 + $0x38] sm:$0xff] %v378
                %v380 = vld [vmem:[%s362 + $0x40] sm:$0xff]
                %381 = vst [vmem:[%s363 + $0x40] sm:$0xff] %v380
                %v382 = vld [vmem:[%s362 + $0x48] sm:$0xff]
                %383 = vst [vmem:[%s363 + $0x48] sm:$0xff] %v382
                %v384 = vld [vmem:[%s362 + $0x50] sm:$0xff]
                %385 = vst [vmem:[%s363 + $0x50] sm:$0xff] %v384
                %v386 = vld [vmem:[%s362 + $0x58] sm:$0xff]
                %387 = vst [vmem:[%s363 + $0x58] sm:$0xff] %v386
                %v388 = vld [vmem:[%s362 + $0x60] sm:$0xff]
                %389 = vst [vmem:[%s363 + $0x60] sm:$0xff] %v388
                %v390 = vld [vmem:[%s362 + $0x68] sm:$0xff]
                %391 = vst [vmem:[%s363 + $0x68] sm:$0xff] %v390
                %v392 = vld [vmem:[%s362 + $0x70] sm:$0xff]
                %393 = vst [vmem:[%s363 + $0x70] sm:$0xff] %v392
                %v394 = vld [vmem:[%s362 + $0x78] sm:$0xff]
                %395 = vst [vmem:[%s363 + $0x78] sm:$0xff] %v394
                %v396 = vld [vmem:[%s362 + $0x100] sm:$0xff]
                %397 = vst [vmem:[%s363 + $0x80] sm:$0xff] %v396
                %v398 = vld [vmem:[%s362 + $0x108] sm:$0xff]
                %399 = vst [vmem:[%s363 + $0x88] sm:$0xff] %v398
                %v400 = vld [vmem:[%s362 + $0x110] sm:$0xff]
                %401 = vst [vmem:[%s363 + $0x90] sm:$0xff] %v400
                %v402 = vld [vmem:[%s362 + $0x118] sm:$0xff]
                %403 = vst [vmem:[%s363 + $0x98] sm:$0xff] %v402
                %v404 = vld [vmem:[%s362 + $0x120] sm:$0xff]
                %405 = vst [vmem:[%s363 + $0xa0] sm:$0xff] %v404
                %v406 = vld [vmem:[%s362 + $0x128] sm:$0xff]
                %407 = vst [vmem:[%s363 + $0xa8] sm:$0xff] %v406
                %v408 = vld [vmem:[%s362 + $0x130] sm:$0xff]
                %409 = vst [vmem:[%s363 + $0xb0] sm:$0xff] %v408
                %v410 = vld [vmem:[%s362 + $0x138] sm:$0xff]
                %411 = vst [vmem:[%s363 + $0xb8] sm:$0xff] %v410
                %v412 = vld [vmem:[%s362 + $0x140] sm:$0xff]
                %413 = vst [vmem:[%s363 + $0xc0] sm:$0xff] %v412
                %v414 = vld [vmem:[%s362 + $0x148] sm:$0xff]
                %415 = vst [vmem:[%s363 + $0xc8] sm:$0xff] %v414
                %v416 = vld [vmem:[%s362 + $0x150] sm:$0xff]
                %417 = vst [vmem:[%s363 + $0xd0] sm:$0xff] %v416
                %v418 = vld [vmem:[%s362 + $0x158] sm:$0xff]
                %419 = vst [vmem:[%s363 + $0xd8] sm:$0xff] %v418
                %v420 = vld [vmem:[%s362 + $0x160] sm:$0xff]
                %421 = vst [vmem:[%s363 + $0xe0] sm:$0xff] %v420
                %v422 = vld [vmem:[%s362 + $0x168] sm:$0xff]
                %423 = vst [vmem:[%s363 + $0xe8] sm:$0xff] %v422
                %v424 = vld [vmem:[%s362 + $0x170] sm:$0xff]
                %425 = vst [vmem:[%s363 + $0xf0] sm:$0xff] %v424
                %v426 = vld [vmem:[%s362 + $0x178] sm:$0xff]
                %427 = vst [vmem:[%s363 + $0xf8] sm:$0xff] %v426
                %v428 = vld [vmem:[%s362 + $0x200] sm:$0xff]
                %429 = vst [vmem:[%s363 + $0x100] sm:$0xff] %v428
                %v430 = vld [vmem:[%s362 + $0x208] sm:$0xff]
                %431 = vst [vmem:[%s363 + $0x108] sm:$0xff] %v430
                %v432 = vld [vmem:[%s362 + $0x210] sm:$0xff]
                %433 = vst [vmem:[%s363 + $0x110] sm:$0xff] %v432
                %v434 = vld [vmem:[%s362 + $0x218] sm:$0xff]
                %435 = vst [vmem:[%s363 + $0x118] sm:$0xff] %v434
                %v436 = vld [vmem:[%s362 + $0x220] sm:$0xff]
                %437 = vst [vmem:[%s363 + $0x120] sm:$0xff] %v436
                %v438 = vld [vmem:[%s362 + $0x228] sm:$0xff]
                %439 = vst [vmem:[%s363 + $0x128] sm:$0xff] %v438
                %v440 = vld [vmem:[%s362 + $0x230] sm:$0xff]
                %441 = vst [vmem:[%s363 + $0x130] sm:$0xff] %v440
                %v442 = vld [vmem:[%s362 + $0x238] sm:$0xff]
                %443 = vst [vmem:[%s363 + $0x138] sm:$0xff] %v442
                %v444 = vld [vmem:[%s362 + $0x240] sm:$0xff]
                %445 = vst [vmem:[%s363 + $0x140] sm:$0xff] %v444
                %v446 = vld [vmem:[%s362 + $0x248] sm:$0xff]
                %447 = vst [vmem:[%s363 + $0x148] sm:$0xff] %v446
                %v448 = vld [vmem:[%s362 + $0x250] sm:$0xff]
                %449 = vst [vmem:[%s363 + $0x150] sm:$0xff] %v448
                %v450 = vld [vmem:[%s362 + $0x258] sm:$0xff]
                %451 = vst [vmem:[%s363 + $0x158] sm:$0xff] %v450
                %v452 = vld [vmem:[%s362 + $0x260] sm:$0xff]
                %453 = vst [vmem:[%s363 + $0x160] sm:$0xff] %v452
                %v454 = vld [vmem:[%s362 + $0x268] sm:$0xff]
                %455 = vst [vmem:[%s363 + $0x168] sm:$0xff] %v454
                %v456 = vld [vmem:[%s362 + $0x270] sm:$0xff]
                %457 = vst [vmem:[%s363 + $0x170] sm:$0xff] %v456
                %v458 = vld [vmem:[%s362 + $0x278] sm:$0xff]
                %459 = vst [vmem:[%s363 + $0x178] sm:$0xff] %v458
              $region37: #{region_dc_and_topk_loss.1} parent=31 // loop_footer
                %s361 = sadd.s32 1, %s357
              $region38: #{region_dc_and_topk_loss.1} parent=31 // loop_footer_branch
                %356 = sbr.rel target = $region34
              $region39: #{region_dc_and_topk_loss.1} parent=31 // loop_exit
                _
            $region32: #{region_dc_and_topk_loss.1} parent=27 // pred_fallthru
              _
            // Predicated region
            $region40: #{region_dc_and_topk_loss.1} parent=27 // pred_check
              _
            $region41: #{region_dc_and_topk_loss.1} parent=27 // pred_check_branch
              %461 = sbr.rel target = $region43
            $region42: #{region_dc_and_topk_loss.1} parent=27 // pred_region
              _
            $region43: #{region_dc_and_topk_loss.1} parent=27 // pred_fallthru
              _
          $region28: #{region_dc_and_topk_loss.1} parent=23 // pred_fallthru
            _
          %462 = vnop
        $region24: #{region_dc_and_topk_loss.1} parent=19 // pred_fallthru
          _
        // Predicated region
        $region44: #{region_dc_and_topk_loss.1} parent=19 // pred_check
          %p463 = pneg %p79
        $region45: #{region_dc_and_topk_loss.1} parent=19 // pred_check_branch
          %465 = sbr.rel (%p463) target = $region47
        $region46: #{region_dc_and_topk_loss.1} parent=19 // pred_region
          %s466 = smul.u32 16, %s25
          %p467 = scmp.lt.s32.totalorder %s24, 1
          %s468 = scalar_select %p467, %s24, 1
          %p469 = scmp.lt.s32.totalorder %s466, 31
          %s470 = scalar_select %p469, %s466, 31
          %s471 = smul.addr %s468, 32
          %s472 = sadd.s32 %s470, %s471
          %s473 = scalar_lea.vmem %s1, %s472
          %s474 = smul.u32 16, %s25
        $region47: #{region_dc_and_topk_loss.1} parent=19 // pred_fallthru
          _
      $region20: #{region_dc_and_topk_loss.1} parent=5 // pred_fallthru
        _
      %p475 = scmp.le.s32.totalorder 1, %s17
      %p476 = scmp.lt.s32.totalorder %s17, 5
      %p477 = pnand %p475, %p476
      %p478 = pneg %p477
      // Predicated region
      $region48: #{region_dc_and_topk_loss.1} parent=5 // pred_check
        _
      $region49: #{region_dc_and_topk_loss.1} parent=5 // pred_check_branch
        %480 = sbr.rel (%p477) target = $region51
      $region50: #{region_dc_and_topk_loss.1} parent=5 // pred_region
        %s481 = ssub.s32 %s17, 1
        %s482 = sand.u32 %s44, 1
        %s483 = sand.u32 %s44, 1
        %s484 = smul.addr %s483, 384
        %s485 = scalar_lea.vmem [#allocation2], %s484
        // Predicated region
        $region52: #{region_dc_and_topk_loss.1} parent=50 // pred_check
          %p486 = pneg %p57
        $region53: #{region_dc_and_topk_loss.1} parent=50 // pred_check_branch
          %488 = sbr.rel (%p486) target = $region55
        $region54: #{region_dc_and_topk_loss.1} parent=50 // pred_region
          _
        $region55: #{region_dc_and_topk_loss.1} parent=50 // pred_fallthru
          _
        %s489 = sand.u32 %s44, 1
        %s490 = sand.u32 %s44, 1
        %s491 = smul.addr %s490, 384
        %s492 = scalar_lea.vmem [#allocation2], %s491
        %p493 = pneg %p57
        %p494 = pneg %p54
        %s495 = smul.u32 16, %s27
        %p496 = scmp.lt.s32.totalorder %s26, 1
        %s497 = scalar_select %p496, %s26, 1
        %p498 = scmp.lt.s32.totalorder %s495, 31
        %s499 = scalar_select %p498, %s495, 31
        %s500 = smul.addr %s497, 32
        %s501 = sadd.s32 %s499, %s500
        %s502 = scalar_lea.vmem %s1, %s501
        %p503 = pneg %p85
        %p504 = pneg %p82
        %p505 = pneg %p106
        %p506 = pneg %p103
        %p507 = pneg %p134
        %p508 = pneg %p131
        %s509 = smul.u32 16, %s27
        %p510 = scmp.lt.s32.totalorder %s26, 1
        %s511 = scalar_select %p510, %s26, 1
        %p512 = scmp.lt.s32.totalorder %s509, 31
        %s513 = scalar_select %p512, %s509, 31
        %s514 = smul.addr %s511, 32
        %s515 = sadd.s32 %s513, %s514
        %s516 = scalar_lea.vmem %s3, %s515
        %p517 = pneg %p162
        %p518 = pneg %p159
        %s519 = smul.u32 16, %s27
        %p520 = scmp.lt.s32.totalorder %s26, 1
        %s521 = scalar_select %p520, %s26, 1
        %p522 = scmp.lt.s32.totalorder %s519, 31
        %s523 = scalar_select %p522, %s519, 31
        %s524 = smul.addr %s521, 32
        %s525 = sadd.s32 %s523, %s524
        %s526 = scalar_lea.vmem %s4, %s525
        %p527 = pneg %p188
        %p528 = pneg %p185
        %p529 = scmp.lt.s32.totalorder %s26, 1
        %s530 = scalar_select %p529, %s26, 1
        %s531 = smul.addr %s530, 3
        %s532 = smul.addr %s531, 8
        %s533 = scalar_lea.vmem %s5, %s532
        %p534 = pneg %p214
        %p535 = pneg %p211
        %p536 = scmp.lt.s32.totalorder %s26, 1
        %s537 = scalar_select %p536, %s26, 1
        %s538 = smul.addr %s537, 3
        %s539 = smul.addr %s538, 8
        %s540 = scalar_lea.vmem %s6, %s539
        %p541 = pneg %p240
        %p542 = pneg %p237
        %p543 = scmp.lt.s32.totalorder %s26, 1
        %s544 = scalar_select %p543, %s26, 1
        %s545 = smul.addr %s544, 3
        %s546 = smul.addr %s545, 8
        %s547 = scalar_lea.vmem %s7, %s546
        %p548 = pneg %p266
        %p549 = pneg %p263
        %p550 = scmp.lt.s32.totalorder %s26, 1
        %s551 = scalar_select %p550, %s26, 1
        %s552 = smul.addr %s551, 8
        %s553 = scalar_lea.vmem %s8, %s552
        %p554 = pneg %p292
        %p555 = pneg %p289
        %p556 = scmp.lt.s32.totalorder %s26, 1
        %s557 = scalar_select %p556, %s26, 1
        %s558 = smul.addr %s557, 8
        %s559 = scalar_lea.vmem %s9, %s558
        %p560 = pneg %p318
        %p561 = pneg %p315
        %p562 = scmp.lt.s32.totalorder %s26, 1
        %s563 = scalar_select %p562, %s26, 1
        %s564 = smul.addr %s563, 8
        %s565 = scalar_lea.vmem %s10, %s564
        %s566 = smul.u32 16, %s27
        %s567 = smul.u32 16, %s27
        %p568 = scmp.lt.s32.totalorder %s26, 1
        %s569 = scalar_select %p568, %s26, 1
        %p570 = scmp.lt.s32.totalorder %s567, 31
        %s571 = scalar_select %p570, %s567, 31
        %s572 = smul.addr %s569, 32
        %s573 = sadd.s32 %s571, %s572
        %s574 = scalar_lea.vmem %s1, %s573
        %s575 = smul.u32 16, %s27
        %s576 = smul.u32 16, %s27
        %p577 = scmp.lt.s32.totalorder %s26, 1
        %s578 = scalar_select %p577, %s26, 1
        %p579 = scmp.lt.s32.totalorder %s576, 31
        %s580 = scalar_select %p579, %s576, 31
        %s581 = smul.addr %s578, 32
        %s582 = sadd.s32 %s580, %s581
        %s583 = scalar_lea.vmem %s3, %s582
        %s584 = smul.u32 16, %s27
        %s585 = smul.u32 16, %s27
        %p586 = scmp.lt.s32.totalorder %s26, 1
        %s587 = scalar_select %p586, %s26, 1
        %p588 = scmp.lt.s32.totalorder %s585, 31
        %s589 = scalar_select %p588, %s585, 31
        %s590 = smul.addr %s587, 32
        %s591 = sadd.s32 %s589, %s590
        %s592 = scalar_lea.vmem %s4, %s591
        %s593 = smul.u32 16, %s27
        %p594 = scmp.lt.s32.totalorder %s26, 1
        %s595 = scalar_select %p594, %s26, 1
        %s596 = smul.addr %s595, 3
        %s597 = smul.addr %s596, 8
        %s598 = scalar_lea.vmem %s5, %s597
        %p599 = scmp.lt.s32.totalorder %s26, 1
        %s600 = scalar_select %p599, %s26, 1
        %s601 = smul.addr %s600, 3
        %s602 = smul.addr %s601, 8
        %s603 = scalar_lea.vmem %s6, %s602
        %p604 = scmp.lt.s32.totalorder %s26, 1
        %s605 = scalar_select %p604, %s26, 1
        %s606 = smul.addr %s605, 3
        %s607 = smul.addr %s606, 8
        %s608 = scalar_lea.vmem %s7, %s607
        %p609 = scmp.lt.s32.totalorder %s26, 1
        %s610 = scalar_select %p609, %s26, 1
        %s611 = smul.addr %s610, 8
        %s612 = scalar_lea.vmem %s8, %s611
        %p613 = scmp.lt.s32.totalorder %s26, 1
        %s614 = scalar_select %p613, %s26, 1
        %s615 = smul.addr %s614, 8
        %s616 = scalar_lea.vmem %s9, %s615
        %p617 = scmp.lt.s32.totalorder %s26, 1
        %s618 = scalar_select %p617, %s26, 1
        %s619 = smul.addr %s618, 8
        %s620 = scalar_lea.vmem %s10, %s619
        %p621 = scmp.eq.s32.totalorder %s27, 0
        // Predicated region
        $region56: #{region_dc_and_topk_loss.1} parent=50 // pred_check
          %p622 = pneg %p621
        $region57: #{region_dc_and_topk_loss.1} parent=50 // pred_check_branch
          %624 = sbr.rel (%p622) target = $region59
        $region58: #{region_dc_and_topk_loss.1} parent=50 // pred_region
          %vm625 = vcmask 7168
          %626 = vst.msk [vmem:[%s598] sm:$0xff] %vm625, 0.0
          %627 = vst.msk [vmem:[%s598 + $0x8] sm:$0xff] %vm625, 0.0
          %628 = vst.msk [vmem:[%s598 + $0x10] sm:$0xff] %vm625, 0.0
          %629 = vst.msk [vmem:[%s603] sm:$0xff] %vm625, 0.0
          %630 = vst.msk [vmem:[%s603 + $0x8] sm:$0xff] %vm625, 0.0
          %631 = vst.msk [vmem:[%s603 + $0x10] sm:$0xff] %vm625, 0.0
          %632 = vst.msk [vmem:[%s608] sm:$0xff] %vm625, 0.0
          %633 = vst.msk [vmem:[%s608 + $0x8] sm:$0xff] %vm625, 0.0
          %634 = vst.msk [vmem:[%s608 + $0x10] sm:$0xff] %vm625, 0.0
          %vm635 = vcmask 4096
          %636 = vst.msk [vmem:[%s612] sm:$0x1f] %vm635, 0.0
          %637 = vst.msk [vmem:[%s616] sm:$0x1f] %vm635, 0.0
          %638 = vst.msk [vmem:[%s620] sm:$0x1f] %vm635, 0.0
        $region59: #{region_dc_and_topk_loss.1} parent=50 // pred_fallthru
          _
        %v639 = vld [vmem:[%s485] sm:$0xff]
        %v640 = vld [vmem:[%s485 + $0x8] sm:$0xff]
        %v641 = vld [vmem:[%s485 + $0x10] sm:$0xff]
        %v642 = vld [vmem:[%s485 + $0x18] sm:$0xff]
        %v643 = vld [vmem:[%s485 + $0x20] sm:$0xff]
        %v644 = vld [vmem:[%s485 + $0x28] sm:$0xff]
        %v645 = vld [vmem:[%s485 + $0x30] sm:$0xff]
        %v646 = vld [vmem:[%s485 + $0x38] sm:$0xff]
        %v647 = vld [vmem:[%s485 + $0x40] sm:$0xff]
        %v648 = vld [vmem:[%s485 + $0x48] sm:$0xff]
        %v649 = vld [vmem:[%s485 + $0x50] sm:$0xff]
        %v650 = vld [vmem:[%s485 + $0x58] sm:$0xff]
        %v651 = vld [vmem:[%s485 + $0x60] sm:$0xff]
        %v652 = vld [vmem:[%s485 + $0x68] sm:$0xff]
        %v653 = vld [vmem:[%s485 + $0x70] sm:$0xff]
        %v654 = vld [vmem:[%s485 + $0x78] sm:$0xff]
        %v655 = vld [vmem:[%s485 + $0x80] sm:$0xff]
        %v656 = vld [vmem:[%s485 + $0x88] sm:$0xff]
        %v657 = vld [vmem:[%s485 + $0x90] sm:$0xff]
        %v658 = vld [vmem:[%s485 + $0x98] sm:$0xff]
        %v659 = vld [vmem:[%s485 + $0xa0] sm:$0xff]
        %v660 = vld [vmem:[%s485 + $0xa8] sm:$0xff]
        %v661 = vld [vmem:[%s485 + $0xb0] sm:$0xff]
        %v662 = vld [vmem:[%s485 + $0xb8] sm:$0xff]
        %v663 = vld [vmem:[%s485 + $0xc0] sm:$0xff]
        %v664 = vld [vmem:[%s485 + $0xc8] sm:$0xff]
        %v665 = vld [vmem:[%s485 + $0xd0] sm:$0xff]
        %v666 = vld [vmem:[%s485 + $0xd8] sm:$0xff]
        %v667 = vld [vmem:[%s485 + $0xe0] sm:$0xff]
        %v668 = vld [vmem:[%s485 + $0xe8] sm:$0xff]
        %v669 = vld [vmem:[%s485 + $0xf0] sm:$0xff]
        %v670 = vld [vmem:[%s485 + $0xf8] sm:$0xff]
        %v671 = vld [vmem:[%s485 + $0x100] sm:$0xff]
        %v672 = vld [vmem:[%s485 + $0x108] sm:$0xff]
        %v673 = vld [vmem:[%s485 + $0x110] sm:$0xff]
        %v674 = vld [vmem:[%s485 + $0x118] sm:$0xff]
        %v675 = vld [vmem:[%s485 + $0x120] sm:$0xff]
        %v676 = vld [vmem:[%s485 + $0x128] sm:$0xff]
        %v677 = vld [vmem:[%s485 + $0x130] sm:$0xff]
        %v678 = vld [vmem:[%s485 + $0x138] sm:$0xff]
        %v679 = vld [vmem:[%s485 + $0x140] sm:$0xff]
        %v680 = vld [vmem:[%s485 + $0x148] sm:$0xff]
        %v681 = vld [vmem:[%s485 + $0x150] sm:$0xff]
        %v682 = vld [vmem:[%s485 + $0x158] sm:$0xff]
        %v683 = vld [vmem:[%s485 + $0x160] sm:$0xff]
        %v684 = vld [vmem:[%s485 + $0x168] sm:$0xff]
        %v685 = vld [vmem:[%s485 + $0x170] sm:$0xff]
        %v686 = vld [vmem:[%s485 + $0x178] sm:$0xff]
        %v687 = vld [vmem:[%s574] sm:$0xff]
        %v688 = vld [vmem:[%s574 + $0x8] sm:$0xff]
        %v689 = vmax.f32 %v639, %v655
        %v690 = vmax.f32 %v689, %v671
        %v691 = vrot.slane %v690, 4
        %v692 = vmax.f32 %v690, %v691
        %v693 = vrot.slane %v692, 2
        %v694 = vmax.f32 %v692, %v693
        %v695 = vrot.slane %v694, 1
        %v696 = vmax.f32 %v694, %v695
        %v697 = vmax.f32 %v640, %v656
        %v698 = vmax.f32 %v697, %v672
        %v699 = vrot.slane %v698, 4
        %v700 = vmax.f32 %v698, %v699
        %v701 = vrot.slane %v700, 2
        %v702 = vmax.f32 %v700, %v701
        %v703 = vrot.slane %v702, 1
        %v704 = vmax.f32 %v702, %v703
        %v705 = vmax.f32 %v641, %v657
        %v706 = vmax.f32 %v705, %v673
        %v707 = vrot.slane %v706, 4
        %v708 = vmax.f32 %v706, %v707
        %v709 = vrot.slane %v708, 2
        %v710 = vmax.f32 %v708, %v709
        %v711 = vrot.slane %v710, 1
        %v712 = vmax.f32 %v710, %v711
        %v713 = vmax.f32 %v642, %v658
        %v714 = vmax.f32 %v713, %v674
        %v715 = vrot.slane %v714, 4
        %v716 = vmax.f32 %v714, %v715
        %v717 = vrot.slane %v716, 2
        %v718 = vmax.f32 %v716, %v717
        %v719 = vrot.slane %v718, 1
        %v720 = vmax.f32 %v718, %v719
        %v721 = vmax.f32 %v643, %v659
        %v722 = vmax.f32 %v721, %v675
        %v723 = vrot.slane %v722, 4
        %v724 = vmax.f32 %v722, %v723
        %v725 = vrot.slane %v724, 2
        %v726 = vmax.f32 %v724, %v725
        %v727 = vrot.slane %v726, 1
        %v728 = vmax.f32 %v726, %v727
        %v729 = vmax.f32 %v644, %v660
        %v730 = vmax.f32 %v729, %v676
        %v731 = vrot.slane %v730, 4
        %v732 = vmax.f32 %v730, %v731
        %v733 = vrot.slane %v732, 2
        %v734 = vmax.f32 %v732, %v733
        %v735 = vrot.slane %v734, 1
        %v736 = vmax.f32 %v734, %v735
        %v737 = vmax.f32 %v645, %v661
        %v738 = vmax.f32 %v737, %v677
        %v739 = vrot.slane %v738, 4
        %v740 = vmax.f32 %v738, %v739
        %v741 = vrot.slane %v740, 2
        %v742 = vmax.f32 %v740, %v741
        %v743 = vrot.slane %v742, 1
        %v744 = vmax.f32 %v742, %v743
        %v745 = vmax.f32 %v646, %v662
        %v746 = vmax.f32 %v745, %v678
        %v747 = vrot.slane %v746, 4
        %v748 = vmax.f32 %v746, %v747
        %v749 = vrot.slane %v748, 2
        %v750 = vmax.f32 %v748, %v749
        %v751 = vrot.slane %v750, 1
        %v752 = vmax.f32 %v750, %v751
        %v753 = vmax.f32 %v647, %v663
        %v754 = vmax.f32 %v753, %v679
        %v755 = vrot.slane %v754, 4
        %v756 = vmax.f32 %v754, %v755
        %v757 = vrot.slane %v756, 2
        %v758 = vmax.f32 %v756, %v757
        %v759 = vrot.slane %v758, 1
        %v760 = vmax.f32 %v758, %v759
        %v761 = vmax.f32 %v648, %v664
        %v762 = vmax.f32 %v761, %v680
        %v763 = vrot.slane %v762, 4
        %v764 = vmax.f32 %v762, %v763
        %v765 = vrot.slane %v764, 2
        %v766 = vmax.f32 %v764, %v765
        %v767 = vrot.slane %v766, 1
        %v768 = vmax.f32 %v766, %v767
        %v769 = vmax.f32 %v649, %v665
        %v770 = vmax.f32 %v769, %v681
        %v771 = vrot.slane %v770, 4
        %v772 = vmax.f32 %v770, %v771
        %v773 = vrot.slane %v772, 2
        %v774 = vmax.f32 %v772, %v773
        %v775 = vrot.slane %v774, 1
        %v776 = vmax.f32 %v774, %v775
        %v777 = vmax.f32 %v650, %v666
        %v778 = vmax.f32 %v777, %v682
        %v779 = vrot.slane %v778, 4
        %v780 = vmax.f32 %v778, %v779
        %v781 = vrot.slane %v780, 2
        %v782 = vmax.f32 %v780, %v781
        %v783 = vrot.slane %v782, 1
        %v784 = vmax.f32 %v782, %v783
        %v785 = vmax.f32 %v651, %v667
        %v786 = vmax.f32 %v785, %v683
        %v787 = vrot.slane %v786, 4
        %v788 = vmax.f32 %v786, %v787
        %v789 = vrot.slane %v788, 2
        %v790 = vmax.f32 %v788, %v789
        %v791 = vrot.slane %v790, 1
        %v792 = vmax.f32 %v790, %v791
        %v793 = vmax.f32 %v652, %v668
        %v794 = vmax.f32 %v793, %v684
        %v795 = vrot.slane %v794, 4
        %v796 = vmax.f32 %v794, %v795
        %v797 = vrot.slane %v796, 2
        %v798 = vmax.f32 %v796, %v797
        %v799 = vrot.slane %v798, 1
        %v800 = vmax.f32 %v798, %v799
        %v801 = vmax.f32 %v653, %v669
        %v802 = vmax.f32 %v801, %v685
        %v803 = vrot.slane %v802, 4
        %v804 = vmax.f32 %v802, %v803
        %v805 = vrot.slane %v804, 2
        %v806 = vmax.f32 %v804, %v805
        %v807 = vrot.slane %v806, 1
        %v808 = vmax.f32 %v806, %v807
        %v809 = vmax.f32 %v654, %v670
        %v810 = vmax.f32 %v809, %v686
        %v811 = vrot.slane %v810, 4
        %v812 = vmax.f32 %v810, %v811
        %v813 = vrot.slane %v812, 2
        %v814 = vmax.f32 %v812, %v813
        %v815 = vrot.slane %v814, 1
        %v816 = vmax.f32 %v814, %v815
        %v817 = vsub.f32 %v639, %v696
        %v818 = vsub.f32 %v640, %v704
        %v819 = vsub.f32 %v641, %v712
        %v820 = vsub.f32 %v642, %v720
        %v821 = vsub.f32 %v643, %v728
        %v822 = vsub.f32 %v644, %v736
        %v823 = vsub.f32 %v645, %v744
        %v824 = vsub.f32 %v646, %v752
        %v825 = vsub.f32 %v647, %v760
        %v826 = vsub.f32 %v648, %v768
        %v827 = vsub.f32 %v649, %v776
        %v828 = vsub.f32 %v650, %v784
        %v829 = vsub.f32 %v651, %v792
        %v830 = vsub.f32 %v652, %v800
        %v831 = vsub.f32 %v653, %v808
        %v832 = vsub.f32 %v654, %v816
        %v833 = vsub.f32 %v655, %v696
        %v834 = vsub.f32 %v656, %v704
        %v835 = vsub.f32 %v657, %v712
        %v836 = vsub.f32 %v658, %v720
        %v837 = vsub.f32 %v659, %v728
        %v838 = vsub.f32 %v660, %v736
        %v839 = vsub.f32 %v661, %v744
        %v840 = vsub.f32 %v662, %v752
        %v841 = vsub.f32 %v663, %v760
        %v842 = vsub.f32 %v664, %v768
        %v843 = vsub.f32 %v665, %v776
        %v844 = vsub.f32 %v666, %v784
        %v845 = vsub.f32 %v667, %v792
        %v846 = vsub.f32 %v668, %v800
        %v847 = vsub.f32 %v669, %v808
        %v848 = vsub.f32 %v670, %v816
        %v849 = vsub.f32 %v671, %v696
        %v850 = vsub.f32 %v672, %v704
        %v851 = vsub.f32 %v673, %v712
        %v852 = vsub.f32 %v674, %v720
        %v853 = vsub.f32 %v675, %v728
        %v854 = vsub.f32 %v676, %v736
        %v855 = vsub.f32 %v677, %v744
        %v856 = vsub.f32 %v678, %v752
        %v857 = vsub.f32 %v679, %v760
        %v858 = vsub.f32 %v680, %v768
        %v859 = vsub.f32 %v681, %v776
        %v860 = vsub.f32 %v682, %v784
        %v861 = vsub.f32 %v683, %v792
        %v862 = vsub.f32 %v684, %v800
        %v863 = vsub.f32 %v685, %v808
        %v864 = vsub.f32 %v686, %v816
        %v865 = vmul.f32 %v817, 1.442695
        %v866 = vpow.pop %v865
        %v867 = vmul.f32 %v818, 1.442695
        %v868 = vpow.pop %v867
        %v869 = vmul.f32 %v819, 1.442695
        %v870 = vpow.pop %v869
        %v871 = vmul.f32 %v820, 1.442695
        %v872 = vpow.pop %v871
        %v873 = vmul.f32 %v821, 1.442695
        %v874 = vpow.pop %v873
        %v875 = vmul.f32 %v822, 1.442695
        %v876 = vpow.pop %v875
        %v877 = vmul.f32 %v823, 1.442695
        %v878 = vpow.pop %v877
        %v879 = vmul.f32 %v824, 1.442695
        %v880 = vpow.pop %v879
        %v881 = vmul.f32 %v825, 1.442695
        %v882 = vpow.pop %v881
        %v883 = vmul.f32 %v826, 1.442695
        %v884 = vpow.pop %v883
        %v885 = vmul.f32 %v827, 1.442695
        %v886 = vpow.pop %v885
        %v887 = vmul.f32 %v828, 1.442695
        %v888 = vpow.pop %v887
        %v889 = vmul.f32 %v829, 1.442695
        %v890 = vpow.pop %v889
        %v891 = vmul.f32 %v830, 1.442695
        %v892 = vpow.pop %v891
        %v893 = vmul.f32 %v831, 1.442695
        %v894 = vpow.pop %v893
        %v895 = vmul.f32 %v832, 1.442695
        %v896 = vpow.pop %v895
        %v897 = vmul.f32 %v833, 1.442695
        %v898 = vpow.pop %v897
        %v899 = vmul.f32 %v834, 1.442695
        %v900 = vpow.pop %v899
        %v901 = vmul.f32 %v835, 1.442695
        %v902 = vpow.pop %v901
        %v903 = vmul.f32 %v836, 1.442695
        %v904 = vpow.pop %v903
        %v905 = vmul.f32 %v837, 1.442695
        %v906 = vpow.pop %v905
        %v907 = vmul.f32 %v838, 1.442695
        %v908 = vpow.pop %v907
        %v909 = vmul.f32 %v839, 1.442695
        %v910 = vpow.pop %v909
        %v911 = vmul.f32 %v840, 1.442695
        %v912 = vpow.pop %v911
        %v913 = vmul.f32 %v841, 1.442695
        %v914 = vpow.pop %v913
        %v915 = vmul.f32 %v842, 1.442695
        %v916 = vpow.pop %v915
        %v917 = vmul.f32 %v843, 1.442695
        %v918 = vpow.pop %v917
        %v919 = vmul.f32 %v844, 1.442695
        %v920 = vpow.pop %v919
        %v921 = vmul.f32 %v845, 1.442695
        %v922 = vpow.pop %v921
        %v923 = vmul.f32 %v846, 1.442695
        %v924 = vpow.pop %v923
        %v925 = vmul.f32 %v847, 1.442695
        %v926 = vpow.pop %v925
        %v927 = vmul.f32 %v848, 1.442695
        %v928 = vpow.pop %v927
        %v929 = vmul.f32 %v849, 1.442695
        %v930 = vpow.pop %v929
        %v931 = vmul.f32 %v850, 1.442695
        %v932 = vpow.pop %v931
        %v933 = vmul.f32 %v851, 1.442695
        %v934 = vpow.pop %v933
        %v935 = vmul.f32 %v852, 1.442695
        %v936 = vpow.pop %v935
        %v937 = vmul.f32 %v853, 1.442695
        %v938 = vpow.pop %v937
        %v939 = vmul.f32 %v854, 1.442695
        %v940 = vpow.pop %v939
        %v941 = vmul.f32 %v855, 1.442695
        %v942 = vpow.pop %v941
        %v943 = vmul.f32 %v856, 1.442695
        %v944 = vpow.pop %v943
        %v945 = vmul.f32 %v857, 1.442695
        %v946 = vpow.pop %v945
        %v947 = vmul.f32 %v858, 1.442695
        %v948 = vpow.pop %v947
        %v949 = vmul.f32 %v859, 1.442695
        %v950 = vpow.pop %v949
        %v951 = vmul.f32 %v860, 1.442695
        %v952 = vpow.pop %v951
        %v953 = vmul.f32 %v861, 1.442695
        %v954 = vpow.pop %v953
        %v955 = vmul.f32 %v862, 1.442695
        %v956 = vpow.pop %v955
        %v957 = vmul.f32 %v863, 1.442695
        %v958 = vpow.pop %v957
        %v959 = vmul.f32 %v864, 1.442695
        %v960 = vpow.pop %v959
        %v961 = vadd.f32 %v866, %v898
        %v962 = vadd.f32 %v961, %v930
        %v963 = vrot.slane %v962, 4
        %v964 = vadd.f32 %v962, %v963
        %v965 = vrot.slane %v964, 2
        %v966 = vadd.f32 %v964, %v965
        %v967 = vrot.slane %v966, 1
        %v968 = vadd.f32 %v966, %v967
        %v969 = vadd.f32 %v868, %v900
        %v970 = vadd.f32 %v969, %v932
        %v971 = vrot.slane %v970, 4
        %v972 = vadd.f32 %v970, %v971
        %v973 = vrot.slane %v972, 2
        %v974 = vadd.f32 %v972, %v973
        %v975 = vrot.slane %v974, 1
        %v976 = vadd.f32 %v974, %v975
        %v977 = vadd.f32 %v870, %v902
        %v978 = vadd.f32 %v977, %v934
        %v979 = vrot.slane %v978, 4
        %v980 = vadd.f32 %v978, %v979
        %v981 = vrot.slane %v980, 2
        %v982 = vadd.f32 %v980, %v981
        %v983 = vrot.slane %v982, 1
        %v984 = vadd.f32 %v982, %v983
        %v985 = vadd.f32 %v872, %v904
        %v986 = vadd.f32 %v985, %v936
        %v987 = vrot.slane %v986, 4
        %v988 = vadd.f32 %v986, %v987
        %v989 = vrot.slane %v988, 2
        %v990 = vadd.f32 %v988, %v989
        %v991 = vrot.slane %v990, 1
        %v992 = vadd.f32 %v990, %v991
        %v993 = vadd.f32 %v874, %v906
        %v994 = vadd.f32 %v993, %v938
        %v995 = vrot.slane %v994, 4
        %v996 = vadd.f32 %v994, %v995
        %v997 = vrot.slane %v996, 2
        %v998 = vadd.f32 %v996, %v997
        %v999 = vrot.slane %v998, 1
        %v1000 = vadd.f32 %v998, %v999
        %v1001 = vadd.f32 %v876, %v908
        %v1002 = vadd.f32 %v1001, %v940
        %v1003 = vrot.slane %v1002, 4
        %v1004 = vadd.f32 %v1002, %v1003
        %v1005 = vrot.slane %v1004, 2
        %v1006 = vadd.f32 %v1004, %v1005
        %v1007 = vrot.slane %v1006, 1
        %v1008 = vadd.f32 %v1006, %v1007
        %v1009 = vadd.f32 %v878, %v910
        %v1010 = vadd.f32 %v1009, %v942
        %v1011 = vrot.slane %v1010, 4
        %v1012 = vadd.f32 %v1010, %v1011
        %v1013 = vrot.slane %v1012, 2
        %v1014 = vadd.f32 %v1012, %v1013
        %v1015 = vrot.slane %v1014, 1
        %v1016 = vadd.f32 %v1014, %v1015
        %v1017 = vadd.f32 %v880, %v912
        %v1018 = vadd.f32 %v1017, %v944
        %v1019 = vrot.slane %v1018, 4
        %v1020 = vadd.f32 %v1018, %v1019
        %v1021 = vrot.slane %v1020, 2
        %v1022 = vadd.f32 %v1020, %v1021
        %v1023 = vrot.slane %v1022, 1
        %v1024 = vadd.f32 %v1022, %v1023
        %v1025 = vadd.f32 %v882, %v914
        %v1026 = vadd.f32 %v1025, %v946
        %v1027 = vrot.slane %v1026, 4
        %v1028 = vadd.f32 %v1026, %v1027
        %v1029 = vrot.slane %v1028, 2
        %v1030 = vadd.f32 %v1028, %v1029
        %v1031 = vrot.slane %v1030, 1
        %v1032 = vadd.f32 %v1030, %v1031
        %v1033 = vadd.f32 %v884, %v916
        %v1034 = vadd.f32 %v1033, %v948
        %v1035 = vrot.slane %v1034, 4
        %v1036 = vadd.f32 %v1034, %v1035
        %v1037 = vrot.slane %v1036, 2
        %v1038 = vadd.f32 %v1036, %v1037
        %v1039 = vrot.slane %v1038, 1
        %v1040 = vadd.f32 %v1038, %v1039
        %v1041 = vadd.f32 %v886, %v918
        %v1042 = vadd.f32 %v1041, %v950
        %v1043 = vrot.slane %v1042, 4
        %v1044 = vadd.f32 %v1042, %v1043
        %v1045 = vrot.slane %v1044, 2
        %v1046 = vadd.f32 %v1044, %v1045
        %v1047 = vrot.slane %v1046, 1
        %v1048 = vadd.f32 %v1046, %v1047
        %v1049 = vadd.f32 %v888, %v920
        %v1050 = vadd.f32 %v1049, %v952
        %v1051 = vrot.slane %v1050, 4
        %v1052 = vadd.f32 %v1050, %v1051
        %v1053 = vrot.slane %v1052, 2
        %v1054 = vadd.f32 %v1052, %v1053
        %v1055 = vrot.slane %v1054, 1
        %v1056 = vadd.f32 %v1054, %v1055
        %v1057 = vadd.f32 %v890, %v922
        %v1058 = vadd.f32 %v1057, %v954
        %v1059 = vrot.slane %v1058, 4
        %v1060 = vadd.f32 %v1058, %v1059
        %v1061 = vrot.slane %v1060, 2
        %v1062 = vadd.f32 %v1060, %v1061
        %v1063 = vrot.slane %v1062, 1
        %v1064 = vadd.f32 %v1062, %v1063
        %v1065 = vadd.f32 %v892, %v924
        %v1066 = vadd.f32 %v1065, %v956
        %v1067 = vrot.slane %v1066, 4
        %v1068 = vadd.f32 %v1066, %v1067
        %v1069 = vrot.slane %v1068, 2
        %v1070 = vadd.f32 %v1068, %v1069
        %v1071 = vrot.slane %v1070, 1
        %v1072 = vadd.f32 %v1070, %v1071
        %v1073 = vadd.f32 %v894, %v926
        %v1074 = vadd.f32 %v1073, %v958
        %v1075 = vrot.slane %v1074, 4
        %v1076 = vadd.f32 %v1074, %v1075
        %v1077 = vrot.slane %v1076, 2
        %v1078 = vadd.f32 %v1076, %v1077
        %v1079 = vrot.slane %v1078, 1
        %v1080 = vadd.f32 %v1078, %v1079
        %v1081 = vadd.f32 %v896, %v928
        %v1082 = vadd.f32 %v1081, %v960
        %v1083 = vrot.slane %v1082, 4
        %v1084 = vadd.f32 %v1082, %v1083
        %v1085 = vrot.slane %v1084, 2
        %v1086 = vadd.f32 %v1084, %v1085
        %v1087 = vrot.slane %v1086, 1
        %v1088 = vadd.f32 %v1086, %v1087
        %v1089 = vrcp.pop %v968
        %v1090 = vrcp.pop %v976
        %v1091 = vrcp.pop %v984
        %v1092 = vrcp.pop %v992
        %v1093 = vrcp.pop %v1000
        %v1094 = vrcp.pop %v1008
        %v1095 = vrcp.pop %v1016
        %v1096 = vrcp.pop %v1024
        %v1097 = vrcp.pop %v1032
        %v1098 = vrcp.pop %v1040
        %v1099 = vrcp.pop %v1048
        %v1100 = vrcp.pop %v1056
        %v1101 = vrcp.pop %v1064
        %v1102 = vrcp.pop %v1072
        %v1103 = vrcp.pop %v1080
        %v1104 = vrcp.pop %v1088
        %v1105 = vmul.f32 %v866, %v1089
        %v1106 = vmul.f32 %v868, %v1090
        %v1107 = vmul.f32 %v870, %v1091
        %v1108 = vmul.f32 %v872, %v1092
        %v1109 = vmul.f32 %v874, %v1093
        %v1110 = vmul.f32 %v876, %v1094
        %v1111 = vmul.f32 %v878, %v1095
        %v1112 = vmul.f32 %v880, %v1096
        %v1113 = vmul.f32 %v882, %v1097
        %v1114 = vmul.f32 %v884, %v1098
        %v1115 = vmul.f32 %v886, %v1099
        %v1116 = vmul.f32 %v888, %v1100
        %v1117 = vmul.f32 %v890, %v1101
        %v1118 = vmul.f32 %v892, %v1102
        %v1119 = vmul.f32 %v894, %v1103
        %v1120 = vmul.f32 %v896, %v1104
        %v1121 = vmul.f32 %v898, %v1089
        %v1122 = vmul.f32 %v900, %v1090
        %v1123 = vmul.f32 %v902, %v1091
        %v1124 = vmul.f32 %v904, %v1092
        %v1125 = vmul.f32 %v906, %v1093
        %v1126 = vmul.f32 %v908, %v1094
        %v1127 = vmul.f32 %v910, %v1095
        %v1128 = vmul.f32 %v912, %v1096
        %v1129 = vmul.f32 %v914, %v1097
        %v1130 = vmul.f32 %v916, %v1098
        %v1131 = vmul.f32 %v918, %v1099
        %v1132 = vmul.f32 %v920, %v1100
        %v1133 = vmul.f32 %v922, %v1101
        %v1134 = vmul.f32 %v924, %v1102
        %v1135 = vmul.f32 %v926, %v1103
        %v1136 = vmul.f32 %v928, %v1104
        %v1137 = vmul.f32 %v930, %v1089
        %v1138 = vmul.f32 %v932, %v1090
        %v1139 = vmul.f32 %v934, %v1091
        %v1140 = vmul.f32 %v936, %v1092
        %v1141 = vmul.f32 %v938, %v1093
        %v1142 = vmul.f32 %v940, %v1094
        %v1143 = vmul.f32 %v942, %v1095
        %v1144 = vmul.f32 %v944, %v1096
        %v1145 = vmul.f32 %v946, %v1097
        %v1146 = vmul.f32 %v948, %v1098
        %v1147 = vmul.f32 %v950, %v1099
        %v1148 = vmul.f32 %v952, %v1100
        %v1149 = vmul.f32 %v954, %v1101
        %v1150 = vmul.f32 %v956, %v1102
        %v1151 = vmul.f32 %v958, %v1103
        %v1152 = vmul.f32 %v960, %v1104
        %v1153 = vlog2.pop %v968
        %v1154 = vmul.f32 %v1153, 0.6931472
        %v1155 = vlog2.pop %v976
        %v1156 = vmul.f32 %v1155, 0.6931472
        %v1157 = vlog2.pop %v984
        %v1158 = vmul.f32 %v1157, 0.6931472
        %v1159 = vlog2.pop %v992
        %v1160 = vmul.f32 %v1159, 0.6931472
        %v1161 = vlog2.pop %v1000
        %v1162 = vmul.f32 %v1161, 0.6931472
        %v1163 = vlog2.pop %v1008
        %v1164 = vmul.f32 %v1163, 0.6931472
        %v1165 = vlog2.pop %v1016
        %v1166 = vmul.f32 %v1165, 0.6931472
        %v1167 = vlog2.pop %v1024
        %v1168 = vmul.f32 %v1167, 0.6931472
        %v1169 = vlog2.pop %v1032
        %v1170 = vmul.f32 %v1169, 0.6931472
        %v1171 = vlog2.pop %v1040
        %v1172 = vmul.f32 %v1171, 0.6931472
        %v1173 = vlog2.pop %v1048
        %v1174 = vmul.f32 %v1173, 0.6931472
        %v1175 = vlog2.pop %v1056
        %v1176 = vmul.f32 %v1175, 0.6931472
        %v1177 = vlog2.pop %v1064
        %v1178 = vmul.f32 %v1177, 0.6931472
        %v1179 = vlog2.pop %v1072
        %v1180 = vmul.f32 %v1179, 0.6931472
        %v1181 = vlog2.pop %v1080
        %v1182 = vmul.f32 %v1181, 0.6931472
        %v1183 = vlog2.pop %v1088
        %v1184 = vmul.f32 %v1183, 0.6931472
        %v1185 = vlaneseq
        %v1186 = vshrl.u32 %v1185, 7
        %v1187 = vadd.s32 %v1186, 8
        %v1188 = vadd.s32 %v1186, 16
        %v1189 = vlaneseq
        %v1190 = vshrl.u32 %v1189, 7
        %v1191 = vsub.s32 0, %v1190
        %v1192 = vrot.slane %v687, %v1191
        %v1193 = vlaneseq
        %v1194 = vshrl.u32 %v1193, 7
        %v1195 = vsub.s32 1, %v1194
        %v1196 = vrot.slane %v687, %v1195
        %v1197 = vlaneseq
        %v1198 = vshrl.u32 %v1197, 7
        %v1199 = vsub.s32 2, %v1198
        %v1200 = vrot.slane %v687, %v1199
        %v1201 = vlaneseq
        %v1202 = vshrl.u32 %v1201, 7
        %v1203 = vsub.s32 3, %v1202
        %v1204 = vrot.slane %v687, %v1203
        %v1205 = vlaneseq
        %v1206 = vshrl.u32 %v1205, 7
        %v1207 = vsub.s32 4, %v1206
        %v1208 = vrot.slane %v687, %v1207
        %v1209 = vlaneseq
        %v1210 = vshrl.u32 %v1209, 7
        %v1211 = vsub.s32 5, %v1210
        %v1212 = vrot.slane %v687, %v1211
        %v1213 = vlaneseq
        %v1214 = vshrl.u32 %v1213, 7
        %v1215 = vsub.s32 6, %v1214
        %v1216 = vrot.slane %v687, %v1215
        %v1217 = vlaneseq
        %v1218 = vshrl.u32 %v1217, 7
        %v1219 = vsub.s32 7, %v1218
        %v1220 = vrot.slane %v687, %v1219
        %v1221 = vlaneseq
        %v1222 = vshrl.u32 %v1221, 7
        %v1223 = vsub.s32 0, %v1222
        %v1224 = vrot.slane %v688, %v1223
        %v1225 = vlaneseq
        %v1226 = vshrl.u32 %v1225, 7
        %v1227 = vsub.s32 1, %v1226
        %v1228 = vrot.slane %v688, %v1227
        %v1229 = vlaneseq
        %v1230 = vshrl.u32 %v1229, 7
        %v1231 = vsub.s32 2, %v1230
        %v1232 = vrot.slane %v688, %v1231
        %v1233 = vlaneseq
        %v1234 = vshrl.u32 %v1233, 7
        %v1235 = vsub.s32 3, %v1234
        %v1236 = vrot.slane %v688, %v1235
        %v1237 = vlaneseq
        %v1238 = vshrl.u32 %v1237, 7
        %v1239 = vsub.s32 4, %v1238
        %v1240 = vrot.slane %v688, %v1239
        %v1241 = vlaneseq
        %v1242 = vshrl.u32 %v1241, 7
        %v1243 = vsub.s32 5, %v1242
        %v1244 = vrot.slane %v688, %v1243
        %v1245 = vlaneseq
        %v1246 = vshrl.u32 %v1245, 7
        %v1247 = vsub.s32 6, %v1246
        %v1248 = vrot.slane %v688, %v1247
        %v1249 = vlaneseq
        %v1250 = vshrl.u32 %v1249, 7
        %v1251 = vsub.s32 7, %v1250
        %v1252 = vrot.slane %v688, %v1251
        %vm1253 = vcmp.eq.s32.totalorder %v1186, %v1192
        %vm1254 = vcmp.eq.s32.totalorder %v1186, %v1196
        %vm1255 = vcmp.eq.s32.totalorder %v1186, %v1200
        %vm1256 = vcmp.eq.s32.totalorder %v1186, %v1204
        %vm1257 = vcmp.eq.s32.totalorder %v1186, %v1208
        %vm1258 = vcmp.eq.s32.totalorder %v1186, %v1212
        %vm1259 = vcmp.eq.s32.totalorder %v1186, %v1216
        %vm1260 = vcmp.eq.s32.totalorder %v1186, %v1220
        %vm1261 = vcmp.eq.s32.totalorder %v1186, %v1224
        %vm1262 = vcmp.eq.s32.totalorder %v1186, %v1228
        %vm1263 = vcmp.eq.s32.totalorder %v1186, %v1232
        %vm1264 = vcmp.eq.s32.totalorder %v1186, %v1236
        %vm1265 = vcmp.eq.s32.totalorder %v1186, %v1240
        %vm1266 = vcmp.eq.s32.totalorder %v1186, %v1244
        %vm1267 = vcmp.eq.s32.totalorder %v1186, %v1248
        %vm1268 = vcmp.eq.s32.totalorder %v1186, %v1252
        %vm1269 = vcmp.eq.s32.totalorder %v1187, %v1192
        %vm1270 = vcmp.eq.s32.totalorder %v1187, %v1196
        %vm1271 = vcmp.eq.s32.totalorder %v1187, %v1200
        %vm1272 = vcmp.eq.s32.totalorder %v1187, %v1204
        %vm1273 = vcmp.eq.s32.totalorder %v1187, %v1208
        %vm1274 = vcmp.eq.s32.totalorder %v1187, %v1212
        %vm1275 = vcmp.eq.s32.totalorder %v1187, %v1216
        %vm1276 = vcmp.eq.s32.totalorder %v1187, %v1220
        %vm1277 = vcmp.eq.s32.totalorder %v1187, %v1224
        %vm1278 = vcmp.eq.s32.totalorder %v1187, %v1228
        %vm1279 = vcmp.eq.s32.totalorder %v1187, %v1232
        %vm1280 = vcmp.eq.s32.totalorder %v1187, %v1236
        %vm1281 = vcmp.eq.s32.totalorder %v1187, %v1240
        %vm1282 = vcmp.eq.s32.totalorder %v1187, %v1244
        %vm1283 = vcmp.eq.s32.totalorder %v1187, %v1248
        %vm1284 = vcmp.eq.s32.totalorder %v1187, %v1252
        %vm1285 = vcmp.eq.s32.totalorder %v1188, %v1192
        %vm1286 = vcmp.eq.s32.totalorder %v1188, %v1196
        %vm1287 = vcmp.eq.s32.totalorder %v1188, %v1200
        %vm1288 = vcmp.eq.s32.totalorder %v1188, %v1204
        %vm1289 = vcmp.eq.s32.totalorder %v1188, %v1208
        %vm1290 = vcmp.eq.s32.totalorder %v1188, %v1212
        %vm1291 = vcmp.eq.s32.totalorder %v1188, %v1216
        %vm1292 = vcmp.eq.s32.totalorder %v1188, %v1220
        %vm1293 = vcmp.eq.s32.totalorder %v1188, %v1224
        %vm1294 = vcmp.eq.s32.totalorder %v1188, %v1228
        %vm1295 = vcmp.eq.s32.totalorder %v1188, %v1232
        %vm1296 = vcmp.eq.s32.totalorder %v1188, %v1236
        %vm1297 = vcmp.eq.s32.totalorder %v1188, %v1240
        %vm1298 = vcmp.eq.s32.totalorder %v1188, %v1244
        %vm1299 = vcmp.eq.s32.totalorder %v1188, %v1248
        %vm1300 = vcmp.eq.s32.totalorder %v1188, %v1252
        %v1301 = vsel %vm1253, 1, 0
        %v1302 = vsel %vm1254, 1, 0
        %v1303 = vsel %vm1255, 1, 0
        %v1304 = vsel %vm1256, 1, 0
        %v1305 = vsel %vm1257, 1, 0
        %v1306 = vsel %vm1258, 1, 0
        %v1307 = vsel %vm1259, 1, 0
        %v1308 = vsel %vm1260, 1, 0
        %v1309 = vsel %vm1261, 1, 0
        %v1310 = vsel %vm1262, 1, 0
        %v1311 = vsel %vm1263, 1, 0
        %v1312 = vsel %vm1264, 1, 0
        %v1313 = vsel %vm1265, 1, 0
        %v1314 = vsel %vm1266, 1, 0
        %v1315 = vsel %vm1267, 1, 0
        %v1316 = vsel %vm1268, 1, 0
        %v1317 = vsel %vm1269, 1, 0
        %v1318 = vsel %vm1270, 1, 0
        %v1319 = vsel %vm1271, 1, 0
        %v1320 = vsel %vm1272, 1, 0
        %v1321 = vsel %vm1273, 1, 0
        %v1322 = vsel %vm1274, 1, 0
        %v1323 = vsel %vm1275, 1, 0
        %v1324 = vsel %vm1276, 1, 0
        %v1325 = vsel %vm1277, 1, 0
        %v1326 = vsel %vm1278, 1, 0
        %v1327 = vsel %vm1279, 1, 0
        %v1328 = vsel %vm1280, 1, 0
        %v1329 = vsel %vm1281, 1, 0
        %v1330 = vsel %vm1282, 1, 0
        %v1331 = vsel %vm1283, 1, 0
        %v1332 = vsel %vm1284, 1, 0
        %v1333 = vsel %vm1285, 1, 0
        %v1334 = vsel %vm1286, 1, 0
        %v1335 = vsel %vm1287, 1, 0
        %v1336 = vsel %vm1288, 1, 0
        %v1337 = vsel %vm1289, 1, 0
        %v1338 = vsel %vm1290, 1, 0
        %v1339 = vsel %vm1291, 1, 0
        %v1340 = vsel %vm1292, 1, 0
        %v1341 = vsel %vm1293, 1, 0
        %v1342 = vsel %vm1294, 1, 0
        %v1343 = vsel %vm1295, 1, 0
        %v1344 = vsel %vm1296, 1, 0
        %v1345 = vsel %vm1297, 1, 0
        %v1346 = vsel %vm1298, 1, 0
        %v1347 = vsel %vm1299, 1, 0
        %v1348 = vsel %vm1300, 1, 0
        %v1349 = vcvt.s32.f32 %v1301
        %v1350 = vcvt.s32.f32 %v1302
        %v1351 = vcvt.s32.f32 %v1303
        %v1352 = vcvt.s32.f32 %v1304
        %v1353 = vcvt.s32.f32 %v1305
        %v1354 = vcvt.s32.f32 %v1306
        %v1355 = vcvt.s32.f32 %v1307
        %v1356 = vcvt.s32.f32 %v1308
        %v1357 = vcvt.s32.f32 %v1309
        %v1358 = vcvt.s32.f32 %v1310
        %v1359 = vcvt.s32.f32 %v1311
        %v1360 = vcvt.s32.f32 %v1312
        %v1361 = vcvt.s32.f32 %v1313
        %v1362 = vcvt.s32.f32 %v1314
        %v1363 = vcvt.s32.f32 %v1315
        %v1364 = vcvt.s32.f32 %v1316
        %v1365 = vcvt.s32.f32 %v1317
        %v1366 = vcvt.s32.f32 %v1318
        %v1367 = vcvt.s32.f32 %v1319
        %v1368 = vcvt.s32.f32 %v1320
        %v1369 = vcvt.s32.f32 %v1321
        %v1370 = vcvt.s32.f32 %v1322
        %v1371 = vcvt.s32.f32 %v1323
        %v1372 = vcvt.s32.f32 %v1324
        %v1373 = vcvt.s32.f32 %v1325
        %v1374 = vcvt.s32.f32 %v1326
        %v1375 = vcvt.s32.f32 %v1327
        %v1376 = vcvt.s32.f32 %v1328
        %v1377 = vcvt.s32.f32 %v1329
        %v1378 = vcvt.s32.f32 %v1330
        %v1379 = vcvt.s32.f32 %v1331
        %v1380 = vcvt.s32.f32 %v1332
        %v1381 = vcvt.s32.f32 %v1333
        %v1382 = vcvt.s32.f32 %v1334
        %v1383 = vcvt.s32.f32 %v1335
        %v1384 = vcvt.s32.f32 %v1336
        %v1385 = vcvt.s32.f32 %v1337
        %v1386 = vcvt.s32.f32 %v1338
        %v1387 = vcvt.s32.f32 %v1339
        %v1388 = vcvt.s32.f32 %v1340
        %v1389 = vcvt.s32.f32 %v1341
        %v1390 = vcvt.s32.f32 %v1342
        %v1391 = vcvt.s32.f32 %v1343
        %v1392 = vcvt.s32.f32 %v1344
        %v1393 = vcvt.s32.f32 %v1345
        %v1394 = vcvt.s32.f32 %v1346
        %v1395 = vcvt.s32.f32 %v1347
        %v1396 = vcvt.s32.f32 %v1348
        %v1397 = vmul.f32 %v817, %v1349
        %v1398 = vmul.f32 %v818, %v1350
        %v1399 = vmul.f32 %v819, %v1351
        %v1400 = vmul.f32 %v820, %v1352
        %v1401 = vmul.f32 %v821, %v1353
        %v1402 = vmul.f32 %v822, %v1354
        %v1403 = vmul.f32 %v823, %v1355
        %v1404 = vmul.f32 %v824, %v1356
        %v1405 = vmul.f32 %v825, %v1357
        %v1406 = vmul.f32 %v826, %v1358
        %v1407 = vmul.f32 %v827, %v1359
        %v1408 = vmul.f32 %v828, %v1360
        %v1409 = vmul.f32 %v829, %v1361
        %v1410 = vmul.f32 %v830, %v1362
        %v1411 = vmul.f32 %v831, %v1363
        %v1412 = vmul.f32 %v832, %v1364
        %v1413 = vmul.f32 %v833, %v1365
        %v1414 = vmul.f32 %v834, %v1366
        %v1415 = vmul.f32 %v835, %v1367
        %v1416 = vmul.f32 %v836, %v1368
        %v1417 = vmul.f32 %v837, %v1369
        %v1418 = vmul.f32 %v838, %v1370
        %v1419 = vmul.f32 %v839, %v1371
        %v1420 = vmul.f32 %v840, %v1372
        %v1421 = vmul.f32 %v841, %v1373
        %v1422 = vmul.f32 %v842, %v1374
        %v1423 = vmul.f32 %v843, %v1375
        %v1424 = vmul.f32 %v844, %v1376
        %v1425 = vmul.f32 %v845, %v1377
        %v1426 = vmul.f32 %v846, %v1378
        %v1427 = vmul.f32 %v847, %v1379
        %v1428 = vmul.f32 %v848, %v1380
        %v1429 = vmul.f32 %v849, %v1381
        %v1430 = vmul.f32 %v850, %v1382
        %v1431 = vmul.f32 %v851, %v1383
        %v1432 = vmul.f32 %v852, %v1384
        %v1433 = vmul.f32 %v853, %v1385
        %v1434 = vmul.f32 %v854, %v1386
        %v1435 = vmul.f32 %v855, %v1387
        %v1436 = vmul.f32 %v856, %v1388
        %v1437 = vmul.f32 %v857, %v1389
        %v1438 = vmul.f32 %v858, %v1390
        %v1439 = vmul.f32 %v859, %v1391
        %v1440 = vmul.f32 %v860, %v1392
        %v1441 = vmul.f32 %v861, %v1393
        %v1442 = vmul.f32 %v862, %v1394
        %v1443 = vmul.f32 %v863, %v1395
        %v1444 = vmul.f32 %v864, %v1396
        %v1445 = vadd.f32 %v1397, %v1413
        %v1446 = vadd.f32 %v1445, %v1429
        %v1447 = vrot.slane %v1446, 4
        %v1448 = vadd.f32 %v1446, %v1447
        %v1449 = vrot.slane %v1448, 2
        %v1450 = vadd.f32 %v1448, %v1449
        %v1451 = vrot.slane %v1450, 1
        %v1452 = vadd.f32 %v1450, %v1451
        %v1453 = vadd.f32 %v1398, %v1414
        %v1454 = vadd.f32 %v1453, %v1430
        %v1455 = vrot.slane %v1454, 4
        %v1456 = vadd.f32 %v1454, %v1455
        %v1457 = vrot.slane %v1456, 2
        %v1458 = vadd.f32 %v1456, %v1457
        %v1459 = vrot.slane %v1458, 1
        %v1460 = vadd.f32 %v1458, %v1459
        %v1461 = vadd.f32 %v1399, %v1415
        %v1462 = vadd.f32 %v1461, %v1431
        %v1463 = vrot.slane %v1462, 4
        %v1464 = vadd.f32 %v1462, %v1463
        %v1465 = vrot.slane %v1464, 2
        %v1466 = vadd.f32 %v1464, %v1465
        %v1467 = vrot.slane %v1466, 1
        %v1468 = vadd.f32 %v1466, %v1467
        %v1469 = vadd.f32 %v1400, %v1416
        %v1470 = vadd.f32 %v1469, %v1432
        %v1471 = vrot.slane %v1470, 4
        %v1472 = vadd.f32 %v1470, %v1471
        %v1473 = vrot.slane %v1472, 2
        %v1474 = vadd.f32 %v1472, %v1473
        %v1475 = vrot.slane %v1474, 1
        %v1476 = vadd.f32 %v1474, %v1475
        %v1477 = vadd.f32 %v1401, %v1417
        %v1478 = vadd.f32 %v1477, %v1433
        %v1479 = vrot.slane %v1478, 4
        %v1480 = vadd.f32 %v1478, %v1479
        %v1481 = vrot.slane %v1480, 2
        %v1482 = vadd.f32 %v1480, %v1481
        %v1483 = vrot.slane %v1482, 1
        %v1484 = vadd.f32 %v1482, %v1483
        %v1485 = vadd.f32 %v1402, %v1418
        %v1486 = vadd.f32 %v1485, %v1434
        %v1487 = vrot.slane %v1486, 4
        %v1488 = vadd.f32 %v1486, %v1487
        %v1489 = vrot.slane %v1488, 2
        %v1490 = vadd.f32 %v1488, %v1489
        %v1491 = vrot.slane %v1490, 1
        %v1492 = vadd.f32 %v1490, %v1491
        %v1493 = vadd.f32 %v1403, %v1419
        %v1494 = vadd.f32 %v1493, %v1435
        %v1495 = vrot.slane %v1494, 4
        %v1496 = vadd.f32 %v1494, %v1495
        %v1497 = vrot.slane %v1496, 2
        %v1498 = vadd.f32 %v1496, %v1497
        %v1499 = vrot.slane %v1498, 1
        %v1500 = vadd.f32 %v1498, %v1499
        %v1501 = vadd.f32 %v1404, %v1420
        %v1502 = vadd.f32 %v1501, %v1436
        %v1503 = vrot.slane %v1502, 4
        %v1504 = vadd.f32 %v1502, %v1503
        %v1505 = vrot.slane %v1504, 2
        %v1506 = vadd.f32 %v1504, %v1505
        %v1507 = vrot.slane %v1506, 1
        %v1508 = vadd.f32 %v1506, %v1507
        %v1509 = vadd.f32 %v1405, %v1421
        %v1510 = vadd.f32 %v1509, %v1437
        %v1511 = vrot.slane %v1510, 4
        %v1512 = vadd.f32 %v1510, %v1511
        %v1513 = vrot.slane %v1512, 2
        %v1514 = vadd.f32 %v1512, %v1513
        %v1515 = vrot.slane %v1514, 1
        %v1516 = vadd.f32 %v1514, %v1515
        %v1517 = vadd.f32 %v1406, %v1422
        %v1518 = vadd.f32 %v1517, %v1438
        %v1519 = vrot.slane %v1518, 4
        %v1520 = vadd.f32 %v1518, %v1519
        %v1521 = vrot.slane %v1520, 2
        %v1522 = vadd.f32 %v1520, %v1521
        %v1523 = vrot.slane %v1522, 1
        %v1524 = vadd.f32 %v1522, %v1523
        %v1525 = vadd.f32 %v1407, %v1423
        %v1526 = vadd.f32 %v1525, %v1439
        %v1527 = vrot.slane %v1526, 4
        %v1528 = vadd.f32 %v1526, %v1527
        %v1529 = vrot.slane %v1528, 2
        %v1530 = vadd.f32 %v1528, %v1529
        %v1531 = vrot.slane %v1530, 1
        %v1532 = vadd.f32 %v1530, %v1531
        %v1533 = vadd.f32 %v1408, %v1424
        %v1534 = vadd.f32 %v1533, %v1440
        %v1535 = vrot.slane %v1534, 4
        %v1536 = vadd.f32 %v1534, %v1535
        %v1537 = vrot.slane %v1536, 2
        %v1538 = vadd.f32 %v1536, %v1537
        %v1539 = vrot.slane %v1538, 1
        %v1540 = vadd.f32 %v1538, %v1539
        %v1541 = vadd.f32 %v1409, %v1425
        %v1542 = vadd.f32 %v1541, %v1441
        %v1543 = vrot.slane %v1542, 4
        %v1544 = vadd.f32 %v1542, %v1543
        %v1545 = vrot.slane %v1544, 2
        %v1546 = vadd.f32 %v1544, %v1545
        %v1547 = vrot.slane %v1546, 1
        %v1548 = vadd.f32 %v1546, %v1547
        %v1549 = vadd.f32 %v1410, %v1426
        %v1550 = vadd.f32 %v1549, %v1442
        %v1551 = vrot.slane %v1550, 4
        %v1552 = vadd.f32 %v1550, %v1551
        %v1553 = vrot.slane %v1552, 2
        %v1554 = vadd.f32 %v1552, %v1553
        %v1555 = vrot.slane %v1554, 1
        %v1556 = vadd.f32 %v1554, %v1555
        %v1557 = vadd.f32 %v1411, %v1427
        %v1558 = vadd.f32 %v1557, %v1443
        %v1559 = vrot.slane %v1558, 4
        %v1560 = vadd.f32 %v1558, %v1559
        %v1561 = vrot.slane %v1560, 2
        %v1562 = vadd.f32 %v1560, %v1561
        %v1563 = vrot.slane %v1562, 1
        %v1564 = vadd.f32 %v1562, %v1563
        %v1565 = vadd.f32 %v1412, %v1428
        %v1566 = vadd.f32 %v1565, %v1444
        %v1567 = vrot.slane %v1566, 4
        %v1568 = vadd.f32 %v1566, %v1567
        %v1569 = vrot.slane %v1568, 2
        %v1570 = vadd.f32 %v1568, %v1569
        %v1571 = vrot.slane %v1570, 1
        %v1572 = vadd.f32 %v1570, %v1571
        %v1573 = vsub.f32 %v1154, %v1452
        %v1574 = vsub.f32 %v1156, %v1460
        %v1575 = vsub.f32 %v1158, %v1468
        %v1576 = vsub.f32 %v1160, %v1476
        %v1577 = vsub.f32 %v1162, %v1484
        %v1578 = vsub.f32 %v1164, %v1492
        %v1579 = vsub.f32 %v1166, %v1500
        %v1580 = vsub.f32 %v1168, %v1508
        %v1581 = vsub.f32 %v1170, %v1516
        %v1582 = vsub.f32 %v1172, %v1524
        %v1583 = vsub.f32 %v1174, %v1532
        %v1584 = vsub.f32 %v1176, %v1540
        %v1585 = vsub.f32 %v1178, %v1548
        %v1586 = vsub.f32 %v1180, %v1556
        %v1587 = vsub.f32 %v1182, %v1564
        %v1588 = vsub.f32 %v1184, %v1572
        %v1605 = vcombine.low %v1573, %v1574
        %v1606 = vcombine.low %v1575, %v1576
        %v1607 = vcombine.low %v1577, %v1578
        %v1608 = vcombine.low %v1579, %v1580
        %v1610 = vunpack.c.l.s4 1966171168
        %v1611 = vunpack.c.0.s8 %v1610
        %v1612 = vlaneseq
        %v1613 = vshrl.u32 %v1612, 7
        %v1614 = vsub.s32 %v1611, %v1613
        %v1615 = vrot.slane %v1605, %v1614
        %v1617 = vunpack.c.l.s4 1966171168
        %v1618 = vunpack.c.0.s8 %v1617
        %v1619 = vlaneseq
        %v1620 = vshrl.u32 %v1619, 7
        %v1621 = vsub.s32 %v1618, %v1620
        %v1622 = vrot.slane %v1606, %v1621
        %v1624 = vunpack.c.l.s4 1966171168
        %v1625 = vunpack.c.0.s8 %v1624
        %v1626 = vlaneseq
        %v1627 = vshrl.u32 %v1626, 7
        %v1628 = vsub.s32 %v1625, %v1627
        %v1629 = vrot.slane %v1607, %v1628
        %v1631 = vunpack.c.l.s4 1966171168
        %v1632 = vunpack.c.0.s8 %v1631
        %v1633 = vlaneseq
        %v1634 = vshrl.u32 %v1633, 7
        %v1635 = vsub.s32 %v1632, %v1634
        %v1636 = vrot.slane %v1608, %v1635
        %v1637 = vcombine.low %v1615, %v1622
        %v1638 = vcombine.low %v1629, %v1636
        %v1640 = vunpack.c.l.s4 1966171168
        %v1641 = vunpack.c.0.s8 %v1640
        %v1642 = vlaneseq
        %v1643 = vshrl.u32 %v1642, 7
        %v1644 = vsub.s32 %v1641, %v1643
        %v1645 = vrot.slane %v1637, %v1644
        %v1647 = vunpack.c.l.s4 1966171168
        %v1648 = vunpack.c.0.s8 %v1647
        %v1649 = vlaneseq
        %v1650 = vshrl.u32 %v1649, 7
        %v1651 = vsub.s32 %v1648, %v1650
        %v1652 = vrot.slane %v1638, %v1651
        %v1653 = vcombine.low %v1645, %v1652
        %v1654 = vcombine.low %v1581, %v1582
        %v1655 = vcombine.low %v1583, %v1584
        %v1656 = vcombine.low %v1585, %v1586
        %v1657 = vcombine.low %v1587, %v1588
        %v1659 = vunpack.c.l.s4 1966171168
        %v1660 = vunpack.c.0.s8 %v1659
        %v1661 = vlaneseq
        %v1662 = vshrl.u32 %v1661, 7
        %v1663 = vsub.s32 %v1660, %v1662
        %v1664 = vrot.slane %v1654, %v1663
        %v1666 = vunpack.c.l.s4 1966171168
        %v1667 = vunpack.c.0.s8 %v1666
        %v1668 = vlaneseq
        %v1669 = vshrl.u32 %v1668, 7
        %v1670 = vsub.s32 %v1667, %v1669
        %v1671 = vrot.slane %v1655, %v1670
        %v1673 = vunpack.c.l.s4 1966171168
        %v1674 = vunpack.c.0.s8 %v1673
        %v1675 = vlaneseq
        %v1676 = vshrl.u32 %v1675, 7
        %v1677 = vsub.s32 %v1674, %v1676
        %v1678 = vrot.slane %v1656, %v1677
        %v1680 = vunpack.c.l.s4 1966171168
        %v1681 = vunpack.c.0.s8 %v1680
        %v1682 = vlaneseq
        %v1683 = vshrl.u32 %v1682, 7
        %v1684 = vsub.s32 %v1681, %v1683
        %v1685 = vrot.slane %v1657, %v1684
        %v1686 = vcombine.low %v1664, %v1671
        %v1687 = vcombine.low %v1678, %v1685
        %v1689 = vunpack.c.l.s4 1966171168
        %v1690 = vunpack.c.0.s8 %v1689
        %v1691 = vlaneseq
        %v1692 = vshrl.u32 %v1691, 7
        %v1693 = vsub.s32 %v1690, %v1692
        %v1694 = vrot.slane %v1686, %v1693
        %v1696 = vunpack.c.l.s4 1966171168
        %v1697 = vunpack.c.0.s8 %v1696
        %v1698 = vlaneseq
        %v1699 = vshrl.u32 %v1698, 7
        %v1700 = vsub.s32 %v1697, %v1699
        %v1701 = vrot.slane %v1687, %v1700
        %v1702 = vcombine.low %v1694, %v1701
        %1705 = vst [vmem:[%s583] sm:$0xff] %v1653
        %1706 = vst [vmem:[%s583 + $0x8] sm:$0xff] %v1702
        %v1707 = vmul.f32 %v1105, %v1349
        %v1708 = vmul.f32 %v1106, %v1350
        %v1709 = vmul.f32 %v1107, %v1351
        %v1710 = vmul.f32 %v1108, %v1352
        %v1711 = vmul.f32 %v1109, %v1353
        %v1712 = vmul.f32 %v1110, %v1354
        %v1713 = vmul.f32 %v1111, %v1355
        %v1714 = vmul.f32 %v1112, %v1356
        %v1715 = vmul.f32 %v1113, %v1357
        %v1716 = vmul.f32 %v1114, %v1358
        %v1717 = vmul.f32 %v1115, %v1359
        %v1718 = vmul.f32 %v1116, %v1360
        %v1719 = vmul.f32 %v1117, %v1361
        %v1720 = vmul.f32 %v1118, %v1362
        %v1721 = vmul.f32 %v1119, %v1363
        %v1722 = vmul.f32 %v1120, %v1364
        %v1723 = vmul.f32 %v1121, %v1365
        %v1724 = vmul.f32 %v1122, %v1366
        %v1725 = vmul.f32 %v1123, %v1367
        %v1726 = vmul.f32 %v1124, %v1368
        %v1727 = vmul.f32 %v1125, %v1369
        %v1728 = vmul.f32 %v1126, %v1370
        %v1729 = vmul.f32 %v1127, %v1371
        %v1730 = vmul.f32 %v1128, %v1372
        %v1731 = vmul.f32 %v1129, %v1373
        %v1732 = vmul.f32 %v1130, %v1374
        %v1733 = vmul.f32 %v1131, %v1375
        %v1734 = vmul.f32 %v1132, %v1376
        %v1735 = vmul.f32 %v1133, %v1377
        %v1736 = vmul.f32 %v1134, %v1378
        %v1737 = vmul.f32 %v1135, %v1379
        %v1738 = vmul.f32 %v1136, %v1380
        %v1739 = vmul.f32 %v1137, %v1381
        %v1740 = vmul.f32 %v1138, %v1382
        %v1741 = vmul.f32 %v1139, %v1383
        %v1742 = vmul.f32 %v1140, %v1384
        %v1743 = vmul.f32 %v1141, %v1385
        %v1744 = vmul.f32 %v1142, %v1386
        %v1745 = vmul.f32 %v1143, %v1387
        %v1746 = vmul.f32 %v1144, %v1388
        %v1747 = vmul.f32 %v1145, %v1389
        %v1748 = vmul.f32 %v1146, %v1390
        %v1749 = vmul.f32 %v1147, %v1391
        %v1750 = vmul.f32 %v1148, %v1392
        %v1751 = vmul.f32 %v1149, %v1393
        %v1752 = vmul.f32 %v1150, %v1394
        %v1753 = vmul.f32 %v1151, %v1395
        %v1754 = vmul.f32 %v1152, %v1396
        %v1755 = vadd.f32 %v1707, %v1708
        %v1756 = vadd.f32 %v1755, %v1709
        %v1757 = vadd.f32 %v1756, %v1710
        %v1758 = vadd.f32 %v1757, %v1711
        %v1759 = vadd.f32 %v1758, %v1712
        %v1760 = vadd.f32 %v1759, %v1713
        %v1761 = vadd.f32 %v1760, %v1714
        %v1762 = vadd.f32 %v1761, %v1715
        %v1763 = vadd.f32 %v1762, %v1716
        %v1764 = vadd.f32 %v1763, %v1717
        %v1765 = vadd.f32 %v1764, %v1718
        %v1766 = vadd.f32 %v1765, %v1719
        %v1767 = vadd.f32 %v1766, %v1720
        %v1768 = vadd.f32 %v1767, %v1721
        %v1769 = vadd.f32 %v1768, %v1722
        %1770 = vadd.xlane.f32.xlu0 %v1769
        %v1771 = vpop.xlane.xlu0 %1770
        %v1772 = vadd.f32 %v1723, %v1724
        %v1773 = vadd.f32 %v1772, %v1725
        %v1774 = vadd.f32 %v1773, %v1726
        %v1775 = vadd.f32 %v1774, %v1727
        %v1776 = vadd.f32 %v1775, %v1728
        %v1777 = vadd.f32 %v1776, %v1729
        %v1778 = vadd.f32 %v1777, %v1730
        %v1779 = vadd.f32 %v1778, %v1731
        %v1780 = vadd.f32 %v1779, %v1732
        %v1781 = vadd.f32 %v1780, %v1733
        %v1782 = vadd.f32 %v1781, %v1734
        %v1783 = vadd.f32 %v1782, %v1735
        %v1784 = vadd.f32 %v1783, %v1736
        %v1785 = vadd.f32 %v1784, %v1737
        %v1786 = vadd.f32 %v1785, %v1738
        %1787 = vadd.xlane.f32.xlu0 %v1786
        %v1788 = vpop.xlane.xlu0 %1787
        %v1789 = vadd.f32 %v1739, %v1740
        %v1790 = vadd.f32 %v1789, %v1741
        %v1791 = vadd.f32 %v1790, %v1742
        %v1792 = vadd.f32 %v1791, %v1743
        %v1793 = vadd.f32 %v1792, %v1744
        %v1794 = vadd.f32 %v1793, %v1745
        %v1795 = vadd.f32 %v1794, %v1746
        %v1796 = vadd.f32 %v1795, %v1747
        %v1797 = vadd.f32 %v1796, %v1748
        %v1798 = vadd.f32 %v1797, %v1749
        %v1799 = vadd.f32 %v1798, %v1750
        %v1800 = vadd.f32 %v1799, %v1751
        %v1801 = vadd.f32 %v1800, %v1752
        %v1802 = vadd.f32 %v1801, %v1753
        %v1803 = vadd.f32 %v1802, %v1754
        %1804 = vadd.xlane.f32.xlu0 %v1803
        %v1805 = vpop.xlane.xlu0 %1804
        %v1806 = vld [vmem:[%s598] sm:$0xff]
        %v1807 = vld [vmem:[%s598 + $0x8] sm:$0xff]
        %v1808 = vld [vmem:[%s598 + $0x10] sm:$0xff]
        %v1809 = vadd.f32 %v1806, %v1771
        %v1810 = vadd.f32 %v1807, %v1788
        %v1811 = vadd.f32 %v1808, %v1805
        %vm1812 = vcmask 7168
        %1813 = vst.msk [vmem:[%s598] sm:$0xff] %vm1812, %v1809
        %1814 = vst.msk [vmem:[%s598 + $0x8] sm:$0xff] %vm1812, %v1810
        %1815 = vst.msk [vmem:[%s598 + $0x10] sm:$0xff] %vm1812, %v1811
        %v1816 = vld [vmem:[%s603] sm:$0xff]
        %v1817 = vld [vmem:[%s603 + $0x8] sm:$0xff]
        %v1818 = vld [vmem:[%s603 + $0x10] sm:$0xff]
        %v1819 = vadd.f32 %v1105, %v1106
        %v1820 = vadd.f32 %v1819, %v1107
        %v1821 = vadd.f32 %v1820, %v1108
        %v1822 = vadd.f32 %v1821, %v1109
        %v1823 = vadd.f32 %v1822, %v1110
        %v1824 = vadd.f32 %v1823, %v1111
        %v1825 = vadd.f32 %v1824, %v1112
        %v1826 = vadd.f32 %v1825, %v1113
        %v1827 = vadd.f32 %v1826, %v1114
        %v1828 = vadd.f32 %v1827, %v1115
        %v1829 = vadd.f32 %v1828, %v1116
        %v1830 = vadd.f32 %v1829, %v1117
        %v1831 = vadd.f32 %v1830, %v1118
        %v1832 = vadd.f32 %v1831, %v1119
        %v1833 = vadd.f32 %v1832, %v1120
        %1834 = vadd.xlane.f32.xlu0 %v1833
        %v1835 = vpop.xlane.xlu0 %1834
        %v1836 = vadd.f32 %v1121, %v1122
        %v1837 = vadd.f32 %v1836, %v1123
        %v1838 = vadd.f32 %v1837, %v1124
        %v1839 = vadd.f32 %v1838, %v1125
        %v1840 = vadd.f32 %v1839, %v1126
        %v1841 = vadd.f32 %v1840, %v1127
        %v1842 = vadd.f32 %v1841, %v1128
        %v1843 = vadd.f32 %v1842, %v1129
        %v1844 = vadd.f32 %v1843, %v1130
        %v1845 = vadd.f32 %v1844, %v1131
        %v1846 = vadd.f32 %v1845, %v1132
        %v1847 = vadd.f32 %v1846, %v1133
        %v1848 = vadd.f32 %v1847, %v1134
        %v1849 = vadd.f32 %v1848, %v1135
        %v1850 = vadd.f32 %v1849, %v1136
        %1851 = vadd.xlane.f32.xlu0 %v1850
        %v1852 = vpop.xlane.xlu0 %1851
        %v1853 = vadd.f32 %v1137, %v1138
        %v1854 = vadd.f32 %v1853, %v1139
        %v1855 = vadd.f32 %v1854, %v1140
        %v1856 = vadd.f32 %v1855, %v1141
        %v1857 = vadd.f32 %v1856, %v1142
        %v1858 = vadd.f32 %v1857, %v1143
        %v1859 = vadd.f32 %v1858, %v1144
        %v1860 = vadd.f32 %v1859, %v1145
        %v1861 = vadd.f32 %v1860, %v1146
        %v1862 = vadd.f32 %v1861, %v1147
        %v1863 = vadd.f32 %v1862, %v1148
        %v1864 = vadd.f32 %v1863, %v1149
        %v1865 = vadd.f32 %v1864, %v1150
        %v1866 = vadd.f32 %v1865, %v1151
        %v1867 = vadd.f32 %v1866, %v1152
        %1868 = vadd.xlane.f32.xlu0 %v1867
        %v1869 = vpop.xlane.xlu0 %1868
        %v1870 = vsub.f32 %v1835, %v1771
        %v1871 = vsub.f32 %v1852, %v1788
        %v1872 = vsub.f32 %v1869, %v1805
        %v1873 = vadd.f32 %v1816, %v1870
        %v1874 = vadd.f32 %v1817, %v1871
        %v1875 = vadd.f32 %v1818, %v1872
        %1876 = vst.msk [vmem:[%s603] sm:$0xff] %vm1812, %v1873
        %1877 = vst.msk [vmem:[%s603 + $0x8] sm:$0xff] %vm1812, %v1874
        %1878 = vst.msk [vmem:[%s603 + $0x10] sm:$0xff] %vm1812, %v1875
        %v1879 = vld [vmem:[%s608] sm:$0xff]
        %v1880 = vld [vmem:[%s608 + $0x8] sm:$0xff]
        %v1881 = vld [vmem:[%s608 + $0x10] sm:$0xff]
        %v1882 = vadd.f32 %v1349, %v1350
        %v1883 = vadd.f32 %v1882, %v1351
        %v1884 = vadd.f32 %v1883, %v1352
        %v1885 = vadd.f32 %v1884, %v1353
        %v1886 = vadd.f32 %v1885, %v1354
        %v1887 = vadd.f32 %v1886, %v1355
        %v1888 = vadd.f32 %v1887, %v1356
        %v1889 = vadd.f32 %v1888, %v1357
        %v1890 = vadd.f32 %v1889, %v1358
        %v1891 = vadd.f32 %v1890, %v1359
        %v1892 = vadd.f32 %v1891, %v1360
        %v1893 = vadd.f32 %v1892, %v1361
        %v1894 = vadd.f32 %v1893, %v1362
        %v1895 = vadd.f32 %v1894, %v1363
        %v1896 = vadd.f32 %v1895, %v1364
        %1897 = vadd.xlane.f32.xlu0 %v1896
        %v1898 = vpop.xlane.xlu0 %1897
        %v1899 = vadd.f32 %v1365, %v1366
        %v1900 = vadd.f32 %v1899, %v1367
        %v1901 = vadd.f32 %v1900, %v1368
        %v1902 = vadd.f32 %v1901, %v1369
        %v1903 = vadd.f32 %v1902, %v1370
        %v1904 = vadd.f32 %v1903, %v1371
        %v1905 = vadd.f32 %v1904, %v1372
        %v1906 = vadd.f32 %v1905, %v1373
        %v1907 = vadd.f32 %v1906, %v1374
        %v1908 = vadd.f32 %v1907, %v1375
        %v1909 = vadd.f32 %v1908, %v1376
        %v1910 = vadd.f32 %v1909, %v1377
        %v1911 = vadd.f32 %v1910, %v1378
        %v1912 = vadd.f32 %v1911, %v1379
        %v1913 = vadd.f32 %v1912, %v1380
        %1914 = vadd.xlane.f32.xlu0 %v1913
        %v1915 = vpop.xlane.xlu0 %1914
        %v1916 = vadd.f32 %v1381, %v1382
        %v1917 = vadd.f32 %v1916, %v1383
        %v1918 = vadd.f32 %v1917, %v1384
        %v1919 = vadd.f32 %v1918, %v1385
        %v1920 = vadd.f32 %v1919, %v1386
        %v1921 = vadd.f32 %v1920, %v1387
        %v1922 = vadd.f32 %v1921, %v1388
        %v1923 = vadd.f32 %v1922, %v1389
        %v1924 = vadd.f32 %v1923, %v1390
        %v1925 = vadd.f32 %v1924, %v1391
        %v1926 = vadd.f32 %v1925, %v1392
        %v1927 = vadd.f32 %v1926, %v1393
        %v1928 = vadd.f32 %v1927, %v1394
        %v1929 = vadd.f32 %v1928, %v1395
        %v1930 = vadd.f32 %v1929, %v1396
        %1931 = vadd.xlane.f32.xlu0 %v1930
        %v1932 = vpop.xlane.xlu0 %1931
        %v1933 = vsub.f32 %v1898, %v1771
        %v1934 = vsub.f32 %v1915, %v1788
        %v1935 = vsub.f32 %v1932, %v1805
        %v1936 = vadd.f32 %v1879, %v1933
        %v1937 = vadd.f32 %v1880, %v1934
        %v1938 = vadd.f32 %v1881, %v1935
        %1939 = vst.msk [vmem:[%s608] sm:$0xff] %vm1812, %v1936
        %1940 = vst.msk [vmem:[%s608 + $0x8] sm:$0xff] %vm1812, %v1937
        %1941 = vst.msk [vmem:[%s608 + $0x10] sm:$0xff] %vm1812, %v1938
        %v1942 = vld [vmem:[%s2] sm:$0x1f]
        %vm1943 = vcmask 195584
        %v1945 = vsel %vm1943, %v1942, 0
        %1947 = vmatprep.subr.mxu0 0.0
        %1948 = vmatpush1.msra.mxu0 0.0
        %1949 = vmatprep.subr.mxu0 0.0
        %1950 = vmatpush1.msra.mxu0 0.0
        %1951 = vmatprep.subr.mxu0 0.0
        %1952 = vmatpush1.msra.mxu0 0.0
        %1953 = vmatprep.subr.mxu0 0.0
        %1954 = vmatpush1.msra.mxu0 0.0
        %1955 = vmatprep.subr.mxu0 0.0
        %1956 = vmatpush1.msra.mxu0 0.0
        %1957 = vmatprep.subr.mxu0 0.0
        %1958 = vmatpush1.msra.mxu0 0.0
        %1959 = vmatprep.subr.mxu0 0.0
        %1960 = vmatpush1.msra.mxu0 0.0
        %1961 = vmatprep.subr.mxu0 0.0
        %1962 = vmatpush1.msra.mxu0 0.0
        %1963 = vmatprep.subr.mxu0 0.0
        %1964 = vmatpush1.msra.mxu0 0.0
        %1965 = vmatprep.subr.mxu0 0.0
        %1966 = vmatpush1.msra.mxu0 0.0
        %1967 = vmatprep.subr.mxu0 0.0
        %1968 = vmatpush1.msra.mxu0 0.0
        %1969 = vmatprep.subr.mxu0 0.0
        %1970 = vmatpush1.msra.mxu0 0.0
        %1971 = vmatprep.subr.mxu0 0.0
        %1972 = vmatpush1.msra.mxu0 0.0
        %1973 = vmatprep.subr.mxu0 %v672
        %1974 = vmatpush1.msra.mxu0 %v671
        %1975 = vmatprep.subr.mxu0 %v656
        %1976 = vmatpush1.msra.mxu0 %v655
        %1977 = vmatprep.subr.mxu0 %v640
        %1978 = vmatpush1.msra.mxu0 %v639
        %1979 = vmatprep.subr.mxu0 0.0
        %1980 = vmatpush2.msra.mxu0 0.0
        %1981 = vmatprep.subr.mxu0 0.0
        %1982 = vmatpush2.msra.mxu0 0.0
        %1983 = vmatprep.subr.mxu0 0.0
        %1984 = vmatpush2.msra.mxu0 0.0
        %1985 = vmatprep.subr.mxu0 0.0
        %1986 = vmatpush2.msra.mxu0 0.0
        %1987 = vmatprep.subr.mxu0 0.0
        %1988 = vmatpush2.msra.mxu0 0.0
        %1989 = vmatprep.subr.mxu0 0.0
        %1990 = vmatpush2.msra.mxu0 0.0
        %1991 = vmatprep.subr.mxu0 0.0
        %1992 = vmatpush2.msra.mxu0 0.0
        %1993 = vmatprep.subr.mxu0 0.0
        %1994 = vmatpush2.msra.mxu0 0.0
        %1995 = vmatprep.subr.mxu0 0.0
        %1996 = vmatpush2.msra.mxu0 0.0
        %1997 = vmatprep.subr.mxu0 0.0
        %1998 = vmatpush2.msra.mxu0 0.0
        %1999 = vmatprep.subr.mxu0 0.0
        %2000 = vmatpush2.msra.mxu0 0.0
        %2001 = vmatprep.subr.mxu0 0.0
        %2002 = vmatpush2.msra.mxu0 0.0
        %2003 = vmatprep.subr.mxu0 0.0
        %2004 = vmatpush2.msra.mxu0 0.0
        %2005 = vmatprep.subr.mxu0 0.0
        %2006 = vmatpush2.msra.mxu0 0.0
        %2007 = vmatprep.subr.mxu0 0.0
        %2008 = vmatpush2.msra.mxu0 0.0
        %2009 = vmatprep.subr.mxu0 0.0
        %2010 = vmatpush2.msra.mxu0 0.0
        %2011 = vmatprep.mubr.f32.mxu0 0.0
        %2012 = vmatmul.mubr.f32.gmra.mxu0 %v1945
        %v2013 = vpop.f32.mrf.mxu0
        %v2014 = vadd.f32 0.0, %v2013
        %v2015 = vpop.f32.mrf.mxu0
        %v2016 = vadd.f32 0.0, %v2015
        %2017 = vdwg.mxu0
        %2018 = vmatprep.subr.mxu0 0.0
        %2019 = vmatpush1.msra.mxu0 0.0
        %2020 = vmatprep.subr.mxu0 0.0
        %2021 = vmatpush1.msra.mxu0 0.0
        %2022 = vmatprep.subr.mxu0 0.0
        %2023 = vmatpush1.msra.mxu0 0.0
        %2024 = vmatprep.subr.mxu0 0.0
        %2025 = vmatpush1.msra.mxu0 0.0
        %2026 = vmatprep.subr.mxu0 0.0
        %2027 = vmatpush1.msra.mxu0 0.0
        %2028 = vmatprep.subr.mxu0 0.0
        %2029 = vmatpush1.msra.mxu0 0.0
        %2030 = vmatprep.subr.mxu0 0.0
        %2031 = vmatpush1.msra.mxu0 0.0
        %2032 = vmatprep.subr.mxu0 0.0
        %2033 = vmatpush1.msra.mxu0 0.0
        %2034 = vmatprep.subr.mxu0 0.0
        %2035 = vmatpush1.msra.mxu0 0.0
        %2036 = vmatprep.subr.mxu0 0.0
        %2037 = vmatpush1.msra.mxu0 0.0
        %2038 = vmatprep.subr.mxu0 0.0
        %2039 = vmatpush1.msra.mxu0 0.0
        %2040 = vmatprep.subr.mxu0 0.0
        %2041 = vmatpush1.msra.mxu0 0.0
        %2042 = vmatprep.subr.mxu0 0.0
        %2043 = vmatpush1.msra.mxu0 0.0
        %2044 = vmatprep.subr.mxu0 %v674
        %2045 = vmatpush1.msra.mxu0 %v673
        %2046 = vmatprep.subr.mxu0 %v658
        %2047 = vmatpush1.msra.mxu0 %v657
        %2048 = vmatprep.subr.mxu0 %v642
        %2049 = vmatpush1.msra.mxu0 %v641
        %2050 = vmatprep.subr.mxu0 0.0
        %2051 = vmatpush2.msra.mxu0 0.0
        %2052 = vmatprep.subr.mxu0 0.0
        %2053 = vmatpush2.msra.mxu0 0.0
        %2054 = vmatprep.subr.mxu0 0.0
        %2055 = vmatpush2.msra.mxu0 0.0
        %2056 = vmatprep.subr.mxu0 0.0
        %2057 = vmatpush2.msra.mxu0 0.0
        %2058 = vmatprep.subr.mxu0 0.0
        %2059 = vmatpush2.msra.mxu0 0.0
        %2060 = vmatprep.subr.mxu0 0.0
        %2061 = vmatpush2.msra.mxu0 0.0
        %2062 = vmatprep.subr.mxu0 0.0
        %2063 = vmatpush2.msra.mxu0 0.0
        %2064 = vmatprep.subr.mxu0 0.0
        %2065 = vmatpush2.msra.mxu0 0.0
        %2066 = vmatprep.subr.mxu0 0.0
        %2067 = vmatpush2.msra.mxu0 0.0
        %2068 = vmatprep.subr.mxu0 0.0
        %2069 = vmatpush2.msra.mxu0 0.0
        %2070 = vmatprep.subr.mxu0 0.0
        %2071 = vmatpush2.msra.mxu0 0.0
        %2072 = vmatprep.subr.mxu0 0.0
        %2073 = vmatpush2.msra.mxu0 0.0
        %2074 = vmatprep.subr.mxu0 0.0
        %2075 = vmatpush2.msra.mxu0 0.0
        %2076 = vmatprep.subr.mxu0 0.0
        %2077 = vmatpush2.msra.mxu0 0.0
        %2078 = vmatprep.subr.mxu0 0.0
        %2079 = vmatpush2.msra.mxu0 0.0
        %2080 = vmatprep.subr.mxu0 0.0
        %2081 = vmatpush2.msra.mxu0 0.0
        %2082 = vmatprep.mubr.f32.mxu0 0.0
        %2083 = vmatmul.mubr.f32.gmra.mxu0 %v1945
        %v2084 = vpop.f32.mrf.mxu0
        %v2085 = vadd.f32 0.0, %v2084
        %v2086 = vpop.f32.mrf.mxu0
        %v2087 = vadd.f32 0.0, %v2086
        %2088 = vdwg.mxu0
        %2089 = vmatprep.subr.mxu0 0.0
        %2090 = vmatpush1.msra.mxu0 0.0
        %2091 = vmatprep.subr.mxu0 0.0
        %2092 = vmatpush1.msra.mxu0 0.0
        %2093 = vmatprep.subr.mxu0 0.0
        %2094 = vmatpush1.msra.mxu0 0.0
        %2095 = vmatprep.subr.mxu0 0.0
        %2096 = vmatpush1.msra.mxu0 0.0
        %2097 = vmatprep.subr.mxu0 0.0
        %2098 = vmatpush1.msra.mxu0 0.0
        %2099 = vmatprep.subr.mxu0 0.0
        %2100 = vmatpush1.msra.mxu0 0.0
        %2101 = vmatprep.subr.mxu0 0.0
        %2102 = vmatpush1.msra.mxu0 0.0
        %2103 = vmatprep.subr.mxu0 0.0
        %2104 = vmatpush1.msra.mxu0 0.0
        %2105 = vmatprep.subr.mxu0 0.0
        %2106 = vmatpush1.msra.mxu0 0.0
        %2107 = vmatprep.subr.mxu0 0.0
        %2108 = vmatpush1.msra.mxu0 0.0
        %2109 = vmatprep.subr.mxu0 0.0
        %2110 = vmatpush1.msra.mxu0 0.0
        %2111 = vmatprep.subr.mxu0 0.0
        %2112 = vmatpush1.msra.mxu0 0.0
        %2113 = vmatprep.subr.mxu0 0.0
        %2114 = vmatpush1.msra.mxu0 0.0
        %2115 = vmatprep.subr.mxu0 %v676
        %2116 = vmatpush1.msra.mxu0 %v675
        %2117 = vmatprep.subr.mxu0 %v660
        %2118 = vmatpush1.msra.mxu0 %v659
        %2119 = vmatprep.subr.mxu0 %v644
        %2120 = vmatpush1.msra.mxu0 %v643
        %2121 = vmatprep.subr.mxu0 0.0
        %2122 = vmatpush2.msra.mxu0 0.0
        %2123 = vmatprep.subr.mxu0 0.0
        %2124 = vmatpush2.msra.mxu0 0.0
        %2125 = vmatprep.subr.mxu0 0.0
        %2126 = vmatpush2.msra.mxu0 0.0
        %2127 = vmatprep.subr.mxu0 0.0
        %2128 = vmatpush2.msra.mxu0 0.0
        %2129 = vmatprep.subr.mxu0 0.0
        %2130 = vmatpush2.msra.mxu0 0.0
        %2131 = vmatprep.subr.mxu0 0.0
        %2132 = vmatpush2.msra.mxu0 0.0
        %2133 = vmatprep.subr.mxu0 0.0
        %2134 = vmatpush2.msra.mxu0 0.0
        %2135 = vmatprep.subr.mxu0 0.0
        %2136 = vmatpush2.msra.mxu0 0.0
        %2137 = vmatprep.subr.mxu0 0.0
        %2138 = vmatpush2.msra.mxu0 0.0
        %2139 = vmatprep.subr.mxu0 0.0
        %2140 = vmatpush2.msra.mxu0 0.0
        %2141 = vmatprep.subr.mxu0 0.0
        %2142 = vmatpush2.msra.mxu0 0.0
        %2143 = vmatprep.subr.mxu0 0.0
        %2144 = vmatpush2.msra.mxu0 0.0
        %2145 = vmatprep.subr.mxu0 0.0
        %2146 = vmatpush2.msra.mxu0 0.0
        %2147 = vmatprep.subr.mxu0 0.0
        %2148 = vmatpush2.msra.mxu0 0.0
        %2149 = vmatprep.subr.mxu0 0.0
        %2150 = vmatpush2.msra.mxu0 0.0
        %2151 = vmatprep.subr.mxu0 0.0
        %2152 = vmatpush2.msra.mxu0 0.0
        %2153 = vmatprep.mubr.f32.mxu0 0.0
        %2154 = vmatmul.mubr.f32.gmra.mxu0 %v1945
        %v2155 = vpop.f32.mrf.mxu0
        %v2156 = vadd.f32 0.0, %v2155
        %v2157 = vpop.f32.mrf.mxu0
        %v2158 = vadd.f32 0.0, %v2157
        %2159 = vdwg.mxu0
        %2160 = vmatprep.subr.mxu0 0.0
        %2161 = vmatpush1.msra.mxu0 0.0
        %2162 = vmatprep.subr.mxu0 0.0
        %2163 = vmatpush1.msra.mxu0 0.0
        %2164 = vmatprep.subr.mxu0 0.0
        %2165 = vmatpush1.msra.mxu0 0.0
        %2166 = vmatprep.subr.mxu0 0.0
        %2167 = vmatpush1.msra.mxu0 0.0
        %2168 = vmatprep.subr.mxu0 0.0
        %2169 = vmatpush1.msra.mxu0 0.0
        %2170 = vmatprep.subr.mxu0 0.0
        %2171 = vmatpush1.msra.mxu0 0.0
        %2172 = vmatprep.subr.mxu0 0.0
        %2173 = vmatpush1.msra.mxu0 0.0
        %2174 = vmatprep.subr.mxu0 0.0
        %2175 = vmatpush1.msra.mxu0 0.0
        %2176 = vmatprep.subr.mxu0 0.0
        %2177 = vmatpush1.msra.mxu0 0.0
        %2178 = vmatprep.subr.mxu0 0.0
        %2179 = vmatpush1.msra.mxu0 0.0
        %2180 = vmatprep.subr.mxu0 0.0
        %2181 = vmatpush1.msra.mxu0 0.0
        %2182 = vmatprep.subr.mxu0 0.0
        %2183 = vmatpush1.msra.mxu0 0.0
        %2184 = vmatprep.subr.mxu0 0.0
        %2185 = vmatpush1.msra.mxu0 0.0
        %2186 = vmatprep.subr.mxu0 %v678
        %2187 = vmatpush1.msra.mxu0 %v677
        %2188 = vmatprep.subr.mxu0 %v662
        %2189 = vmatpush1.msra.mxu0 %v661
        %2190 = vmatprep.subr.mxu0 %v646
        %2191 = vmatpush1.msra.mxu0 %v645
        %2192 = vmatprep.subr.mxu0 0.0
        %2193 = vmatpush2.msra.mxu0 0.0
        %2194 = vmatprep.subr.mxu0 0.0
        %2195 = vmatpush2.msra.mxu0 0.0
        %2196 = vmatprep.subr.mxu0 0.0
        %2197 = vmatpush2.msra.mxu0 0.0
        %2198 = vmatprep.subr.mxu0 0.0
        %2199 = vmatpush2.msra.mxu0 0.0
        %2200 = vmatprep.subr.mxu0 0.0
        %2201 = vmatpush2.msra.mxu0 0.0
        %2202 = vmatprep.subr.mxu0 0.0
        %2203 = vmatpush2.msra.mxu0 0.0
        %2204 = vmatprep.subr.mxu0 0.0
        %2205 = vmatpush2.msra.mxu0 0.0
        %2206 = vmatprep.subr.mxu0 0.0
        %2207 = vmatpush2.msra.mxu0 0.0
        %2208 = vmatprep.subr.mxu0 0.0
        %2209 = vmatpush2.msra.mxu0 0.0
        %2210 = vmatprep.subr.mxu0 0.0
        %2211 = vmatpush2.msra.mxu0 0.0
        %2212 = vmatprep.subr.mxu0 0.0
        %2213 = vmatpush2.msra.mxu0 0.0
        %2214 = vmatprep.subr.mxu0 0.0
        %2215 = vmatpush2.msra.mxu0 0.0
        %2216 = vmatprep.subr.mxu0 0.0
        %2217 = vmatpush2.msra.mxu0 0.0
        %2218 = vmatprep.subr.mxu0 0.0
        %2219 = vmatpush2.msra.mxu0 0.0
        %2220 = vmatprep.subr.mxu0 0.0
        %2221 = vmatpush2.msra.mxu0 0.0
        %2222 = vmatprep.subr.mxu0 0.0
        %2223 = vmatpush2.msra.mxu0 0.0
        %2224 = vmatprep.mubr.f32.mxu0 0.0
        %2225 = vmatmul.mubr.f32.gmra.mxu0 %v1945
        %v2226 = vpop.f32.mrf.mxu0
        %v2227 = vadd.f32 0.0, %v2226
        %v2228 = vpop.f32.mrf.mxu0
        %v2229 = vadd.f32 0.0, %v2228
        %2230 = vdwg.mxu0
        %2231 = vmatprep.subr.mxu0 0.0
        %2232 = vmatpush1.msra.mxu0 0.0
        %2233 = vmatprep.subr.mxu0 0.0
        %2234 = vmatpush1.msra.mxu0 0.0
        %2235 = vmatprep.subr.mxu0 0.0
        %2236 = vmatpush1.msra.mxu0 0.0
        %2237 = vmatprep.subr.mxu0 0.0
        %2238 = vmatpush1.msra.mxu0 0.0
        %2239 = vmatprep.subr.mxu0 0.0
        %2240 = vmatpush1.msra.mxu0 0.0
        %2241 = vmatprep.subr.mxu0 0.0
        %2242 = vmatpush1.msra.mxu0 0.0
        %2243 = vmatprep.subr.mxu0 0.0
        %2244 = vmatpush1.msra.mxu0 0.0
        %2245 = vmatprep.subr.mxu0 0.0
        %2246 = vmatpush1.msra.mxu0 0.0
        %2247 = vmatprep.subr.mxu0 0.0
        %2248 = vmatpush1.msra.mxu0 0.0
        %2249 = vmatprep.subr.mxu0 0.0
        %2250 = vmatpush1.msra.mxu0 0.0
        %2251 = vmatprep.subr.mxu0 0.0
        %2252 = vmatpush1.msra.mxu0 0.0
        %2253 = vmatprep.subr.mxu0 0.0
        %2254 = vmatpush1.msra.mxu0 0.0
        %2255 = vmatprep.subr.mxu0 0.0
        %2256 = vmatpush1.msra.mxu0 0.0
        %2257 = vmatprep.subr.mxu0 %v680
        %2258 = vmatpush1.msra.mxu0 %v679
        %2259 = vmatprep.subr.mxu0 %v664
        %2260 = vmatpush1.msra.mxu0 %v663
        %2261 = vmatprep.subr.mxu0 %v648
        %2262 = vmatpush1.msra.mxu0 %v647
        %2263 = vmatprep.subr.mxu0 0.0
        %2264 = vmatpush2.msra.mxu0 0.0
        %2265 = vmatprep.subr.mxu0 0.0
        %2266 = vmatpush2.msra.mxu0 0.0
        %2267 = vmatprep.subr.mxu0 0.0
        %2268 = vmatpush2.msra.mxu0 0.0
        %2269 = vmatprep.subr.mxu0 0.0
        %2270 = vmatpush2.msra.mxu0 0.0
        %2271 = vmatprep.subr.mxu0 0.0
        %2272 = vmatpush2.msra.mxu0 0.0
        %2273 = vmatprep.subr.mxu0 0.0
        %2274 = vmatpush2.msra.mxu0 0.0
        %2275 = vmatprep.subr.mxu0 0.0
        %2276 = vmatpush2.msra.mxu0 0.0
        %2277 = vmatprep.subr.mxu0 0.0
        %2278 = vmatpush2.msra.mxu0 0.0
        %2279 = vmatprep.subr.mxu0 0.0
        %2280 = vmatpush2.msra.mxu0 0.0
        %2281 = vmatprep.subr.mxu0 0.0
        %2282 = vmatpush2.msra.mxu0 0.0
        %2283 = vmatprep.subr.mxu0 0.0
        %2284 = vmatpush2.msra.mxu0 0.0
        %2285 = vmatprep.subr.mxu0 0.0
        %2286 = vmatpush2.msra.mxu0 0.0
        %2287 = vmatprep.subr.mxu0 0.0
        %2288 = vmatpush2.msra.mxu0 0.0
        %2289 = vmatprep.subr.mxu0 0.0
        %2290 = vmatpush2.msra.mxu0 0.0
        %2291 = vmatprep.subr.mxu0 0.0
        %2292 = vmatpush2.msra.mxu0 0.0
        %2293 = vmatprep.subr.mxu0 0.0
        %2294 = vmatpush2.msra.mxu0 0.0
        %2295 = vmatprep.mubr.f32.mxu0 0.0
        %2296 = vmatmul.mubr.f32.gmra.mxu0 %v1945
        %v2297 = vpop.f32.mrf.mxu0
        %v2298 = vadd.f32 0.0, %v2297
        %v2299 = vpop.f32.mrf.mxu0
        %v2300 = vadd.f32 0.0, %v2299
        %2301 = vdwg.mxu0
        %2302 = vmatprep.subr.mxu0 0.0
        %2303 = vmatpush1.msra.mxu0 0.0
        %2304 = vmatprep.subr.mxu0 0.0
        %2305 = vmatpush1.msra.mxu0 0.0
        %2306 = vmatprep.subr.mxu0 0.0
        %2307 = vmatpush1.msra.mxu0 0.0
        %2308 = vmatprep.subr.mxu0 0.0
        %2309 = vmatpush1.msra.mxu0 0.0
        %2310 = vmatprep.subr.mxu0 0.0
        %2311 = vmatpush1.msra.mxu0 0.0
        %2312 = vmatprep.subr.mxu0 0.0
        %2313 = vmatpush1.msra.mxu0 0.0
        %2314 = vmatprep.subr.mxu0 0.0
        %2315 = vmatpush1.msra.mxu0 0.0
        %2316 = vmatprep.subr.mxu0 0.0
        %2317 = vmatpush1.msra.mxu0 0.0
        %2318 = vmatprep.subr.mxu0 0.0
        %2319 = vmatpush1.msra.mxu0 0.0
        %2320 = vmatprep.subr.mxu0 0.0
        %2321 = vmatpush1.msra.mxu0 0.0
        %2322 = vmatprep.subr.mxu0 0.0
        %2323 = vmatpush1.msra.mxu0 0.0
        %2324 = vmatprep.subr.mxu0 0.0
        %2325 = vmatpush1.msra.mxu0 0.0
        %2326 = vmatprep.subr.mxu0 0.0
        %2327 = vmatpush1.msra.mxu0 0.0
        %2328 = vmatprep.subr.mxu0 %v682
        %2329 = vmatpush1.msra.mxu0 %v681
        %2330 = vmatprep.subr.mxu0 %v666
        %2331 = vmatpush1.msra.mxu0 %v665
        %2332 = vmatprep.subr.mxu0 %v650
        %2333 = vmatpush1.msra.mxu0 %v649
        %2334 = vmatprep.subr.mxu0 0.0
        %2335 = vmatpush2.msra.mxu0 0.0
        %2336 = vmatprep.subr.mxu0 0.0
        %2337 = vmatpush2.msra.mxu0 0.0
        %2338 = vmatprep.subr.mxu0 0.0
        %2339 = vmatpush2.msra.mxu0 0.0
        %2340 = vmatprep.subr.mxu0 0.0
        %2341 = vmatpush2.msra.mxu0 0.0
        %2342 = vmatprep.subr.mxu0 0.0
        %2343 = vmatpush2.msra.mxu0 0.0
        %2344 = vmatprep.subr.mxu0 0.0
        %2345 = vmatpush2.msra.mxu0 0.0
        %2346 = vmatprep.subr.mxu0 0.0
        %2347 = vmatpush2.msra.mxu0 0.0
        %2348 = vmatprep.subr.mxu0 0.0
        %2349 = vmatpush2.msra.mxu0 0.0
        %2350 = vmatprep.subr.mxu0 0.0
        %2351 = vmatpush2.msra.mxu0 0.0
        %2352 = vmatprep.subr.mxu0 0.0
        %2353 = vmatpush2.msra.mxu0 0.0
        %2354 = vmatprep.subr.mxu0 0.0
        %2355 = vmatpush2.msra.mxu0 0.0
        %2356 = vmatprep.subr.mxu0 0.0
        %2357 = vmatpush2.msra.mxu0 0.0
        %2358 = vmatprep.subr.mxu0 0.0
        %2359 = vmatpush2.msra.mxu0 0.0
        %2360 = vmatprep.subr.mxu0 0.0
        %2361 = vmatpush2.msra.mxu0 0.0
        %2362 = vmatprep.subr.mxu0 0.0
        %2363 = vmatpush2.msra.mxu0 0.0
        %2364 = vmatprep.subr.mxu0 0.0
        %2365 = vmatpush2.msra.mxu0 0.0
        %2366 = vmatprep.mubr.f32.mxu0 0.0
        %2367 = vmatmul.mubr.f32.gmra.mxu0 %v1945
        %v2368 = vpop.f32.mrf.mxu0
        %v2369 = vadd.f32 0.0, %v2368
        %v2370 = vpop.f32.mrf.mxu0
        %v2371 = vadd.f32 0.0, %v2370
        %2372 = vdwg.mxu0
        %2373 = vmatprep.subr.mxu0 0.0
        %2374 = vmatpush1.msra.mxu0 0.0
        %2375 = vmatprep.subr.mxu0 0.0
        %2376 = vmatpush1.msra.mxu0 0.0
        %2377 = vmatprep.subr.mxu0 0.0
        %2378 = vmatpush1.msra.mxu0 0.0
        %2379 = vmatprep.subr.mxu0 0.0
        %2380 = vmatpush1.msra.mxu0 0.0
        %2381 = vmatprep.subr.mxu0 0.0
        %2382 = vmatpush1.msra.mxu0 0.0
        %2383 = vmatprep.subr.mxu0 0.0
        %2384 = vmatpush1.msra.mxu0 0.0
        %2385 = vmatprep.subr.mxu0 0.0
        %2386 = vmatpush1.msra.mxu0 0.0
        %2387 = vmatprep.subr.mxu0 0.0
        %2388 = vmatpush1.msra.mxu0 0.0
        %2389 = vmatprep.subr.mxu0 0.0
        %2390 = vmatpush1.msra.mxu0 0.0
        %2391 = vmatprep.subr.mxu0 0.0
        %2392 = vmatpush1.msra.mxu0 0.0
        %2393 = vmatprep.subr.mxu0 0.0
        %2394 = vmatpush1.msra.mxu0 0.0
        %2395 = vmatprep.subr.mxu0 0.0
        %2396 = vmatpush1.msra.mxu0 0.0
        %2397 = vmatprep.subr.mxu0 0.0
        %2398 = vmatpush1.msra.mxu0 0.0
        %2399 = vmatprep.subr.mxu0 %v684
        %2400 = vmatpush1.msra.mxu0 %v683
        %2401 = vmatprep.subr.mxu0 %v668
        %2402 = vmatpush1.msra.mxu0 %v667
        %2403 = vmatprep.subr.mxu0 %v652
        %2404 = vmatpush1.msra.mxu0 %v651
        %2405 = vmatprep.subr.mxu0 0.0
        %2406 = vmatpush2.msra.mxu0 0.0
        %2407 = vmatprep.subr.mxu0 0.0
        %2408 = vmatpush2.msra.mxu0 0.0
        %2409 = vmatprep.subr.mxu0 0.0
        %2410 = vmatpush2.msra.mxu0 0.0
        %2411 = vmatprep.subr.mxu0 0.0
        %2412 = vmatpush2.msra.mxu0 0.0
        %2413 = vmatprep.subr.mxu0 0.0
        %2414 = vmatpush2.msra.mxu0 0.0
        %2415 = vmatprep.subr.mxu0 0.0
        %2416 = vmatpush2.msra.mxu0 0.0
        %2417 = vmatprep.subr.mxu0 0.0
        %2418 = vmatpush2.msra.mxu0 0.0
        %2419 = vmatprep.subr.mxu0 0.0
        %2420 = vmatpush2.msra.mxu0 0.0
        %2421 = vmatprep.subr.mxu0 0.0
        %2422 = vmatpush2.msra.mxu0 0.0
        %2423 = vmatprep.subr.mxu0 0.0
        %2424 = vmatpush2.msra.mxu0 0.0
        %2425 = vmatprep.subr.mxu0 0.0
        %2426 = vmatpush2.msra.mxu0 0.0
        %2427 = vmatprep.subr.mxu0 0.0
        %2428 = vmatpush2.msra.mxu0 0.0
        %2429 = vmatprep.subr.mxu0 0.0
        %2430 = vmatpush2.msra.mxu0 0.0
        %2431 = vmatprep.subr.mxu0 0.0
        %2432 = vmatpush2.msra.mxu0 0.0
        %2433 = vmatprep.subr.mxu0 0.0
        %2434 = vmatpush2.msra.mxu0 0.0
        %2435 = vmatprep.subr.mxu0 0.0
        %2436 = vmatpush2.msra.mxu0 0.0
        %2437 = vmatprep.mubr.f32.mxu0 0.0
        %2438 = vmatmul.mubr.f32.gmra.mxu0 %v1945
        %v2439 = vpop.f32.mrf.mxu0
        %v2440 = vadd.f32 0.0, %v2439
        %v2441 = vpop.f32.mrf.mxu0
        %v2442 = vadd.f32 0.0, %v2441
        %2443 = vdwg.mxu0
        %2444 = vmatprep.subr.mxu0 0.0
        %2445 = vmatpush1.msra.mxu0 0.0
        %2446 = vmatprep.subr.mxu0 0.0
        %2447 = vmatpush1.msra.mxu0 0.0
        %2448 = vmatprep.subr.mxu0 0.0
        %2449 = vmatpush1.msra.mxu0 0.0
        %2450 = vmatprep.subr.mxu0 0.0
        %2451 = vmatpush1.msra.mxu0 0.0
        %2452 = vmatprep.subr.mxu0 0.0
        %2453 = vmatpush1.msra.mxu0 0.0
        %2454 = vmatprep.subr.mxu0 0.0
        %2455 = vmatpush1.msra.mxu0 0.0
        %2456 = vmatprep.subr.mxu0 0.0
        %2457 = vmatpush1.msra.mxu0 0.0
        %2458 = vmatprep.subr.mxu0 0.0
        %2459 = vmatpush1.msra.mxu0 0.0
        %2460 = vmatprep.subr.mxu0 0.0
        %2461 = vmatpush1.msra.mxu0 0.0
        %2462 = vmatprep.subr.mxu0 0.0
        %2463 = vmatpush1.msra.mxu0 0.0
        %2464 = vmatprep.subr.mxu0 0.0
        %2465 = vmatpush1.msra.mxu0 0.0
        %2466 = vmatprep.subr.mxu0 0.0
        %2467 = vmatpush1.msra.mxu0 0.0
        %2468 = vmatprep.subr.mxu0 0.0
        %2469 = vmatpush1.msra.mxu0 0.0
        %2470 = vmatprep.subr.mxu0 %v686
        %2471 = vmatpush1.msra.mxu0 %v685
        %2472 = vmatprep.subr.mxu0 %v670
        %2473 = vmatpush1.msra.mxu0 %v669
        %2474 = vmatprep.subr.mxu0 %v654
        %2475 = vmatpush1.msra.mxu0 %v653
        %2476 = vmatprep.subr.mxu0 0.0
        %2477 = vmatpush2.msra.mxu0 0.0
        %2478 = vmatprep.subr.mxu0 0.0
        %2479 = vmatpush2.msra.mxu0 0.0
        %2480 = vmatprep.subr.mxu0 0.0
        %2481 = vmatpush2.msra.mxu0 0.0
        %2482 = vmatprep.subr.mxu0 0.0
        %2483 = vmatpush2.msra.mxu0 0.0
        %2484 = vmatprep.subr.mxu0 0.0
        %2485 = vmatpush2.msra.mxu0 0.0
        %2486 = vmatprep.subr.mxu0 0.0
        %2487 = vmatpush2.msra.mxu0 0.0
        %2488 = vmatprep.subr.mxu0 0.0
        %2489 = vmatpush2.msra.mxu0 0.0
        %2490 = vmatprep.subr.mxu0 0.0
        %2491 = vmatpush2.msra.mxu0 0.0
        %2492 = vmatprep.subr.mxu0 0.0
        %2493 = vmatpush2.msra.mxu0 0.0
        %2494 = vmatprep.subr.mxu0 0.0
        %2495 = vmatpush2.msra.mxu0 0.0
        %2496 = vmatprep.subr.mxu0 0.0
        %2497 = vmatpush2.msra.mxu0 0.0
        %2498 = vmatprep.subr.mxu0 0.0
        %2499 = vmatpush2.msra.mxu0 0.0
        %2500 = vmatprep.subr.mxu0 0.0
        %2501 = vmatpush2.msra.mxu0 0.0
        %2502 = vmatprep.subr.mxu0 0.0
        %2503 = vmatpush2.msra.mxu0 0.0
        %2504 = vmatprep.subr.mxu0 0.0
        %2505 = vmatpush2.msra.mxu0 0.0
        %2506 = vmatprep.subr.mxu0 0.0
        %2507 = vmatpush2.msra.mxu0 0.0
        %2508 = vmatprep.mubr.f32.mxu0 0.0
        %2509 = vmatmul.mubr.f32.gmra.mxu0 %v1945
        %v2510 = vpop.f32.mrf.mxu0
        %v2511 = vadd.f32 0.0, %v2510
        %v2512 = vpop.f32.mrf.mxu0
        %v2513 = vadd.f32 0.0, %v2512
        %2514 = vdwg.mxu0
        %vm2515 = vcmp.eq.s32.totalorder %v687, 0
        %vm2516 = vcmp.eq.s32.totalorder %v688, 0
        %vm2517 = vcmp.le.s32.totalorder %v687, 6
        %vm2518 = vcmp.le.s32.totalorder %v688, 6
        %vm2519 = vcmp.le.s32.totalorder %v687, 9
        %vm2520 = vcmp.le.s32.totalorder %v688, 9
        %vm2521 = vcmp.le.s32.totalorder %v687, 17
        %vm2522 = vcmp.le.s32.totalorder %v688, 17
        %v2523 = vsel %vm2521, 3, 4
        %v2524 = vsel %vm2522, 3, 4
        %v2525 = vsel %vm2519, 2, %v2523
        %v2526 = vsel %vm2520, 2, %v2524
        %v2527 = vsel %vm2517, 1, %v2525
        %v2528 = vsel %vm2518, 1, %v2526
        %v2529 = vsel %vm2515, 0, %v2527
        %v2530 = vsel %vm2516, 0, %v2528
        %vm2531 = vcmask 1044480
        %v2532 = vsel %vm2531, %v2014, -inf
        %v2533 = vrot.slane %v2532, 4
        %v2534 = vmax.f32 %v2532, %v2533
        %v2535 = vrot.slane %v2534, 2
        %v2536 = vmax.f32 %v2534, %v2535
        %v2537 = vrot.slane %v2536, 1
        %v2538 = vmax.f32 %v2536, %v2537
        %v2539 = vsel %vm2531, %v2016, -inf
        %v2540 = vrot.slane %v2539, 4
        %v2541 = vmax.f32 %v2539, %v2540
        %v2542 = vrot.slane %v2541, 2
        %v2543 = vmax.f32 %v2541, %v2542
        %v2544 = vrot.slane %v2543, 1
        %v2545 = vmax.f32 %v2543, %v2544
        %v2546 = vsel %vm2531, %v2085, -inf
        %v2547 = vrot.slane %v2546, 4
        %v2548 = vmax.f32 %v2546, %v2547
        %v2549 = vrot.slane %v2548, 2
        %v2550 = vmax.f32 %v2548, %v2549
        %v2551 = vrot.slane %v2550, 1
        %v2552 = vmax.f32 %v2550, %v2551
        %v2553 = vsel %vm2531, %v2087, -inf
        %v2554 = vrot.slane %v2553, 4
        %v2555 = vmax.f32 %v2553, %v2554
        %v2556 = vrot.slane %v2555, 2
        %v2557 = vmax.f32 %v2555, %v2556
        %v2558 = vrot.slane %v2557, 1
        %v2559 = vmax.f32 %v2557, %v2558
        %v2560 = vsel %vm2531, %v2156, -inf
        %v2561 = vrot.slane %v2560, 4
        %v2562 = vmax.f32 %v2560, %v2561
        %v2563 = vrot.slane %v2562, 2
        %v2564 = vmax.f32 %v2562, %v2563
        %v2565 = vrot.slane %v2564, 1
        %v2566 = vmax.f32 %v2564, %v2565
        %v2567 = vsel %vm2531, %v2158, -inf
        %v2568 = vrot.slane %v2567, 4
        %v2569 = vmax.f32 %v2567, %v2568
        %v2570 = vrot.slane %v2569, 2
        %v2571 = vmax.f32 %v2569, %v2570
        %v2572 = vrot.slane %v2571, 1
        %v2573 = vmax.f32 %v2571, %v2572
        %v2574 = vsel %vm2531, %v2227, -inf
        %v2575 = vrot.slane %v2574, 4
        %v2576 = vmax.f32 %v2574, %v2575
        %v2577 = vrot.slane %v2576, 2
        %v2578 = vmax.f32 %v2576, %v2577
        %v2579 = vrot.slane %v2578, 1
        %v2580 = vmax.f32 %v2578, %v2579
        %v2581 = vsel %vm2531, %v2229, -inf
        %v2582 = vrot.slane %v2581, 4
        %v2583 = vmax.f32 %v2581, %v2582
        %v2584 = vrot.slane %v2583, 2
        %v2585 = vmax.f32 %v2583, %v2584
        %v2586 = vrot.slane %v2585, 1
        %v2587 = vmax.f32 %v2585, %v2586
        %v2588 = vsel %vm2531, %v2298, -inf
        %v2589 = vrot.slane %v2588, 4
        %v2590 = vmax.f32 %v2588, %v2589
        %v2591 = vrot.slane %v2590, 2
        %v2592 = vmax.f32 %v2590, %v2591
        %v2593 = vrot.slane %v2592, 1
        %v2594 = vmax.f32 %v2592, %v2593
        %v2595 = vsel %vm2531, %v2300, -inf
        %v2596 = vrot.slane %v2595, 4
        %v2597 = vmax.f32 %v2595, %v2596
        %v2598 = vrot.slane %v2597, 2
        %v2599 = vmax.f32 %v2597, %v2598
        %v2600 = vrot.slane %v2599, 1
        %v2601 = vmax.f32 %v2599, %v2600
        %v2602 = vsel %vm2531, %v2369, -inf
        %v2603 = vrot.slane %v2602, 4
        %v2604 = vmax.f32 %v2602, %v2603
        %v2605 = vrot.slane %v2604, 2
        %v2606 = vmax.f32 %v2604, %v2605
        %v2607 = vrot.slane %v2606, 1
        %v2608 = vmax.f32 %v2606, %v2607
        %v2609 = vsel %vm2531, %v2371, -inf
        %v2610 = vrot.slane %v2609, 4
        %v2611 = vmax.f32 %v2609, %v2610
        %v2612 = vrot.slane %v2611, 2
        %v2613 = vmax.f32 %v2611, %v2612
        %v2614 = vrot.slane %v2613, 1
        %v2615 = vmax.f32 %v2613, %v2614
        %v2616 = vsel %vm2531, %v2440, -inf
        %v2617 = vrot.slane %v2616, 4
        %v2618 = vmax.f32 %v2616, %v2617
        %v2619 = vrot.slane %v2618, 2
        %v2620 = vmax.f32 %v2618, %v2619
        %v2621 = vrot.slane %v2620, 1
        %v2622 = vmax.f32 %v2620, %v2621
        %v2623 = vsel %vm2531, %v2442, -inf
        %v2624 = vrot.slane %v2623, 4
        %v2625 = vmax.f32 %v2623, %v2624
        %v2626 = vrot.slane %v2625, 2
        %v2627 = vmax.f32 %v2625, %v2626
        %v2628 = vrot.slane %v2627, 1
        %v2629 = vmax.f32 %v2627, %v2628
        %v2630 = vsel %vm2531, %v2511, -inf
        %v2631 = vrot.slane %v2630, 4
        %v2632 = vmax.f32 %v2630, %v2631
        %v2633 = vrot.slane %v2632, 2
        %v2634 = vmax.f32 %v2632, %v2633
        %v2635 = vrot.slane %v2634, 1
        %v2636 = vmax.f32 %v2634, %v2635
        %v2637 = vsel %vm2531, %v2513, -inf
        %v2638 = vrot.slane %v2637, 4
        %v2639 = vmax.f32 %v2637, %v2638
        %v2640 = vrot.slane %v2639, 2
        %v2641 = vmax.f32 %v2639, %v2640
        %v2642 = vrot.slane %v2641, 1
        %v2643 = vmax.f32 %v2641, %v2642
        %v2644 = vsub.f32 %v2014, %v2538
        %v2645 = vsub.f32 %v2016, %v2545
        %v2646 = vsub.f32 %v2085, %v2552
        %v2647 = vsub.f32 %v2087, %v2559
        %v2648 = vsub.f32 %v2156, %v2566
        %v2649 = vsub.f32 %v2158, %v2573
        %v2650 = vsub.f32 %v2227, %v2580
        %v2651 = vsub.f32 %v2229, %v2587
        %v2652 = vsub.f32 %v2298, %v2594
        %v2653 = vsub.f32 %v2300, %v2601
        %v2654 = vsub.f32 %v2369, %v2608
        %v2655 = vsub.f32 %v2371, %v2615
        %v2656 = vsub.f32 %v2440, %v2622
        %v2657 = vsub.f32 %v2442, %v2629
        %v2658 = vsub.f32 %v2511, %v2636
        %v2659 = vsub.f32 %v2513, %v2643
        %v2660 = vmul.f32 %v2644, 1.442695
        %v2661 = vpow.pop %v2660
        %v2662 = vmul.f32 %v2645, 1.442695
        %v2663 = vpow.pop %v2662
        %v2664 = vmul.f32 %v2646, 1.442695
        %v2665 = vpow.pop %v2664
        %v2666 = vmul.f32 %v2647, 1.442695
        %v2667 = vpow.pop %v2666
        %v2668 = vmul.f32 %v2648, 1.442695
        %v2669 = vpow.pop %v2668
        %v2670 = vmul.f32 %v2649, 1.442695
        %v2671 = vpow.pop %v2670
        %v2672 = vmul.f32 %v2650, 1.442695
        %v2673 = vpow.pop %v2672
        %v2674 = vmul.f32 %v2651, 1.442695
        %v2675 = vpow.pop %v2674
        %v2676 = vmul.f32 %v2652, 1.442695
        %v2677 = vpow.pop %v2676
        %v2678 = vmul.f32 %v2653, 1.442695
        %v2679 = vpow.pop %v2678
        %v2680 = vmul.f32 %v2654, 1.442695
        %v2681 = vpow.pop %v2680
        %v2682 = vmul.f32 %v2655, 1.442695
        %v2683 = vpow.pop %v2682
        %v2684 = vmul.f32 %v2656, 1.442695
        %v2685 = vpow.pop %v2684
        %v2686 = vmul.f32 %v2657, 1.442695
        %v2687 = vpow.pop %v2686
        %v2688 = vmul.f32 %v2658, 1.442695
        %v2689 = vpow.pop %v2688
        %v2690 = vmul.f32 %v2659, 1.442695
        %v2691 = vpow.pop %v2690
        %v2692 = vsel %vm2531, %v2661, 0.0
        %v2693 = vrot.slane %v2692, 4
        %v2694 = vadd.f32 %v2692, %v2693
        %v2695 = vrot.slane %v2694, 2
        %v2696 = vadd.f32 %v2694, %v2695
        %v2697 = vrot.slane %v2696, 1
        %v2698 = vadd.f32 %v2696, %v2697
        %v2699 = vsel %vm2531, %v2663, 0.0
        %v2700 = vrot.slane %v2699, 4
        %v2701 = vadd.f32 %v2699, %v2700
        %v2702 = vrot.slane %v2701, 2
        %v2703 = vadd.f32 %v2701, %v2702
        %v2704 = vrot.slane %v2703, 1
        %v2705 = vadd.f32 %v2703, %v2704
        %v2706 = vsel %vm2531, %v2665, 0.0
        %v2707 = vrot.slane %v2706, 4
        %v2708 = vadd.f32 %v2706, %v2707
        %v2709 = vrot.slane %v2708, 2
        %v2710 = vadd.f32 %v2708, %v2709
        %v2711 = vrot.slane %v2710, 1
        %v2712 = vadd.f32 %v2710, %v2711
        %v2713 = vsel %vm2531, %v2667, 0.0
        %v2714 = vrot.slane %v2713, 4
        %v2715 = vadd.f32 %v2713, %v2714
        %v2716 = vrot.slane %v2715, 2
        %v2717 = vadd.f32 %v2715, %v2716
        %v2718 = vrot.slane %v2717, 1
        %v2719 = vadd.f32 %v2717, %v2718
        %v2720 = vsel %vm2531, %v2669, 0.0
        %v2721 = vrot.slane %v2720, 4
        %v2722 = vadd.f32 %v2720, %v2721
        %v2723 = vrot.slane %v2722, 2
        %v2724 = vadd.f32 %v2722, %v2723
        %v2725 = vrot.slane %v2724, 1
        %v2726 = vadd.f32 %v2724, %v2725
        %v2727 = vsel %vm2531, %v2671, 0.0
        %v2728 = vrot.slane %v2727, 4
        %v2729 = vadd.f32 %v2727, %v2728
        %v2730 = vrot.slane %v2729, 2
        %v2731 = vadd.f32 %v2729, %v2730
        %v2732 = vrot.slane %v2731, 1
        %v2733 = vadd.f32 %v2731, %v2732
        %v2734 = vsel %vm2531, %v2673, 0.0
        %v2735 = vrot.slane %v2734, 4
        %v2736 = vadd.f32 %v2734, %v2735
        %v2737 = vrot.slane %v2736, 2
        %v2738 = vadd.f32 %v2736, %v2737
        %v2739 = vrot.slane %v2738, 1
        %v2740 = vadd.f32 %v2738, %v2739
        %v2741 = vsel %vm2531, %v2675, 0.0
        %v2742 = vrot.slane %v2741, 4
        %v2743 = vadd.f32 %v2741, %v2742
        %v2744 = vrot.slane %v2743, 2
        %v2745 = vadd.f32 %v2743, %v2744
        %v2746 = vrot.slane %v2745, 1
        %v2747 = vadd.f32 %v2745, %v2746
        %v2748 = vsel %vm2531, %v2677, 0.0
        %v2749 = vrot.slane %v2748, 4
        %v2750 = vadd.f32 %v2748, %v2749
        %v2751 = vrot.slane %v2750, 2
        %v2752 = vadd.f32 %v2750, %v2751
        %v2753 = vrot.slane %v2752, 1
        %v2754 = vadd.f32 %v2752, %v2753
        %v2755 = vsel %vm2531, %v2679, 0.0
        %v2756 = vrot.slane %v2755, 4
        %v2757 = vadd.f32 %v2755, %v2756
        %v2758 = vrot.slane %v2757, 2
        %v2759 = vadd.f32 %v2757, %v2758
        %v2760 = vrot.slane %v2759, 1
        %v2761 = vadd.f32 %v2759, %v2760
        %v2762 = vsel %vm2531, %v2681, 0.0
        %v2763 = vrot.slane %v2762, 4
        %v2764 = vadd.f32 %v2762, %v2763
        %v2765 = vrot.slane %v2764, 2
        %v2766 = vadd.f32 %v2764, %v2765
        %v2767 = vrot.slane %v2766, 1
        %v2768 = vadd.f32 %v2766, %v2767
        %v2769 = vsel %vm2531, %v2683, 0.0
        %v2770 = vrot.slane %v2769, 4
        %v2771 = vadd.f32 %v2769, %v2770
        %v2772 = vrot.slane %v2771, 2
        %v2773 = vadd.f32 %v2771, %v2772
        %v2774 = vrot.slane %v2773, 1
        %v2775 = vadd.f32 %v2773, %v2774
        %v2776 = vsel %vm2531, %v2685, 0.0
        %v2777 = vrot.slane %v2776, 4
        %v2778 = vadd.f32 %v2776, %v2777
        %v2779 = vrot.slane %v2778, 2
        %v2780 = vadd.f32 %v2778, %v2779
        %v2781 = vrot.slane %v2780, 1
        %v2782 = vadd.f32 %v2780, %v2781
        %v2783 = vsel %vm2531, %v2687, 0.0
        %v2784 = vrot.slane %v2783, 4
        %v2785 = vadd.f32 %v2783, %v2784
        %v2786 = vrot.slane %v2785, 2
        %v2787 = vadd.f32 %v2785, %v2786
        %v2788 = vrot.slane %v2787, 1
        %v2789 = vadd.f32 %v2787, %v2788
        %v2790 = vsel %vm2531, %v2689, 0.0
        %v2791 = vrot.slane %v2790, 4
        %v2792 = vadd.f32 %v2790, %v2791
        %v2793 = vrot.slane %v2792, 2
        %v2794 = vadd.f32 %v2792, %v2793
        %v2795 = vrot.slane %v2794, 1
        %v2796 = vadd.f32 %v2794, %v2795
        %v2797 = vsel %vm2531, %v2691, 0.0
        %v2798 = vrot.slane %v2797, 4
        %v2799 = vadd.f32 %v2797, %v2798
        %v2800 = vrot.slane %v2799, 2
        %v2801 = vadd.f32 %v2799, %v2800
        %v2802 = vrot.slane %v2801, 1
        %v2803 = vadd.f32 %v2801, %v2802
        %v2804 = vrcp.pop %v2698
        %v2805 = vrcp.pop %v2705
        %v2806 = vrcp.pop %v2712
        %v2807 = vrcp.pop %v2719
        %v2808 = vrcp.pop %v2726
        %v2809 = vrcp.pop %v2733
        %v2810 = vrcp.pop %v2740
        %v2811 = vrcp.pop %v2747
        %v2812 = vrcp.pop %v2754
        %v2813 = vrcp.pop %v2761
        %v2814 = vrcp.pop %v2768
        %v2815 = vrcp.pop %v2775
        %v2816 = vrcp.pop %v2782
        %v2817 = vrcp.pop %v2789
        %v2818 = vrcp.pop %v2796
        %v2819 = vrcp.pop %v2803
        %v2820 = vmul.f32 %v2661, %v2804
        %v2821 = vmul.f32 %v2663, %v2805
        %v2822 = vmul.f32 %v2665, %v2806
        %v2823 = vmul.f32 %v2667, %v2807
        %v2824 = vmul.f32 %v2669, %v2808
        %v2825 = vmul.f32 %v2671, %v2809
        %v2826 = vmul.f32 %v2673, %v2810
        %v2827 = vmul.f32 %v2675, %v2811
        %v2828 = vmul.f32 %v2677, %v2812
        %v2829 = vmul.f32 %v2679, %v2813
        %v2830 = vmul.f32 %v2681, %v2814
        %v2831 = vmul.f32 %v2683, %v2815
        %v2832 = vmul.f32 %v2685, %v2816
        %v2833 = vmul.f32 %v2687, %v2817
        %v2834 = vmul.f32 %v2689, %v2818
        %v2835 = vmul.f32 %v2691, %v2819
        %v2836 = vlog2.pop %v2698
        %v2837 = vmul.f32 %v2836, 0.6931472
        %v2838 = vlog2.pop %v2705
        %v2839 = vmul.f32 %v2838, 0.6931472
        %v2840 = vlog2.pop %v2712
        %v2841 = vmul.f32 %v2840, 0.6931472
        %v2842 = vlog2.pop %v2719
        %v2843 = vmul.f32 %v2842, 0.6931472
        %v2844 = vlog2.pop %v2726
        %v2845 = vmul.f32 %v2844, 0.6931472
        %v2846 = vlog2.pop %v2733
        %v2847 = vmul.f32 %v2846, 0.6931472
        %v2848 = vlog2.pop %v2740
        %v2849 = vmul.f32 %v2848, 0.6931472
        %v2850 = vlog2.pop %v2747
        %v2851 = vmul.f32 %v2850, 0.6931472
        %v2852 = vlog2.pop %v2754
        %v2853 = vmul.f32 %v2852, 0.6931472
        %v2854 = vlog2.pop %v2761
        %v2855 = vmul.f32 %v2854, 0.6931472
        %v2856 = vlog2.pop %v2768
        %v2857 = vmul.f32 %v2856, 0.6931472
        %v2858 = vlog2.pop %v2775
        %v2859 = vmul.f32 %v2858, 0.6931472
        %v2860 = vlog2.pop %v2782
        %v2861 = vmul.f32 %v2860, 0.6931472
        %v2862 = vlog2.pop %v2789
        %v2863 = vmul.f32 %v2862, 0.6931472
        %v2864 = vlog2.pop %v2796
        %v2865 = vmul.f32 %v2864, 0.6931472
        %v2866 = vlog2.pop %v2803
        %v2867 = vmul.f32 %v2866, 0.6931472
        %v2868 = vlaneseq
        %v2869 = vshrl.u32 %v2868, 7
        %v2870 = vsub.s32 0, %v2869
        %v2871 = vrot.slane %v2529, %v2870
        %v2872 = vlaneseq
        %v2873 = vshrl.u32 %v2872, 7
        %v2874 = vsub.s32 1, %v2873
        %v2875 = vrot.slane %v2529, %v2874
        %v2876 = vlaneseq
        %v2877 = vshrl.u32 %v2876, 7
        %v2878 = vsub.s32 2, %v2877
        %v2879 = vrot.slane %v2529, %v2878
        %v2880 = vlaneseq
        %v2881 = vshrl.u32 %v2880, 7
        %v2882 = vsub.s32 3, %v2881
        %v2883 = vrot.slane %v2529, %v2882
        %v2884 = vlaneseq
        %v2885 = vshrl.u32 %v2884, 7
        %v2886 = vsub.s32 4, %v2885
        %v2887 = vrot.slane %v2529, %v2886
        %v2888 = vlaneseq
        %v2889 = vshrl.u32 %v2888, 7
        %v2890 = vsub.s32 5, %v2889
        %v2891 = vrot.slane %v2529, %v2890
        %v2892 = vlaneseq
        %v2893 = vshrl.u32 %v2892, 7
        %v2894 = vsub.s32 6, %v2893
        %v2895 = vrot.slane %v2529, %v2894
        %v2896 = vlaneseq
        %v2897 = vshrl.u32 %v2896, 7
        %v2898 = vsub.s32 7, %v2897
        %v2899 = vrot.slane %v2529, %v2898
        %v2900 = vlaneseq
        %v2901 = vshrl.u32 %v2900, 7
        %v2902 = vsub.s32 0, %v2901
        %v2903 = vrot.slane %v2530, %v2902
        %v2904 = vlaneseq
        %v2905 = vshrl.u32 %v2904, 7
        %v2906 = vsub.s32 1, %v2905
        %v2907 = vrot.slane %v2530, %v2906
        %v2908 = vlaneseq
        %v2909 = vshrl.u32 %v2908, 7
        %v2910 = vsub.s32 2, %v2909
        %v2911 = vrot.slane %v2530, %v2910
        %v2912 = vlaneseq
        %v2913 = vshrl.u32 %v2912, 7
        %v2914 = vsub.s32 3, %v2913
        %v2915 = vrot.slane %v2530, %v2914
        %v2916 = vlaneseq
        %v2917 = vshrl.u32 %v2916, 7
        %v2918 = vsub.s32 4, %v2917
        %v2919 = vrot.slane %v2530, %v2918
        %v2920 = vlaneseq
        %v2921 = vshrl.u32 %v2920, 7
        %v2922 = vsub.s32 5, %v2921
        %v2923 = vrot.slane %v2530, %v2922
        %v2924 = vlaneseq
        %v2925 = vshrl.u32 %v2924, 7
        %v2926 = vsub.s32 6, %v2925
        %v2927 = vrot.slane %v2530, %v2926
        %v2928 = vlaneseq
        %v2929 = vshrl.u32 %v2928, 7
        %v2930 = vsub.s32 7, %v2929
        %v2931 = vrot.slane %v2530, %v2930
        %vm2932 = vcmp.eq.s32.totalorder %v1186, %v2871
        %vm2933 = vcmp.eq.s32.totalorder %v1186, %v2875
        %vm2934 = vcmp.eq.s32.totalorder %v1186, %v2879
        %vm2935 = vcmp.eq.s32.totalorder %v1186, %v2883
        %vm2936 = vcmp.eq.s32.totalorder %v1186, %v2887
        %vm2937 = vcmp.eq.s32.totalorder %v1186, %v2891
        %vm2938 = vcmp.eq.s32.totalorder %v1186, %v2895
        %vm2939 = vcmp.eq.s32.totalorder %v1186, %v2899
        %vm2940 = vcmp.eq.s32.totalorder %v1186, %v2903
        %vm2941 = vcmp.eq.s32.totalorder %v1186, %v2907
        %vm2942 = vcmp.eq.s32.totalorder %v1186, %v2911
        %vm2943 = vcmp.eq.s32.totalorder %v1186, %v2915
        %vm2944 = vcmp.eq.s32.totalorder %v1186, %v2919
        %vm2945 = vcmp.eq.s32.totalorder %v1186, %v2923
        %vm2946 = vcmp.eq.s32.totalorder %v1186, %v2927
        %vm2947 = vcmp.eq.s32.totalorder %v1186, %v2931
        %v2948 = vsel %vm2932, 1, 0
        %v2949 = vsel %vm2933, 1, 0
        %v2950 = vsel %vm2934, 1, 0
        %v2951 = vsel %vm2935, 1, 0
        %v2952 = vsel %vm2936, 1, 0
        %v2953 = vsel %vm2937, 1, 0
        %v2954 = vsel %vm2938, 1, 0
        %v2955 = vsel %vm2939, 1, 0
        %v2956 = vsel %vm2940, 1, 0
        %v2957 = vsel %vm2941, 1, 0
        %v2958 = vsel %vm2942, 1, 0
        %v2959 = vsel %vm2943, 1, 0
        %v2960 = vsel %vm2944, 1, 0
        %v2961 = vsel %vm2945, 1, 0
        %v2962 = vsel %vm2946, 1, 0
        %v2963 = vsel %vm2947, 1, 0
        %v2964 = vcvt.s32.f32 %v2948
        %v2965 = vcvt.s32.f32 %v2949
        %v2966 = vcvt.s32.f32 %v2950
        %v2967 = vcvt.s32.f32 %v2951
        %v2968 = vcvt.s32.f32 %v2952
        %v2969 = vcvt.s32.f32 %v2953
        %v2970 = vcvt.s32.f32 %v2954
        %v2971 = vcvt.s32.f32 %v2955
        %v2972 = vcvt.s32.f32 %v2956
        %v2973 = vcvt.s32.f32 %v2957
        %v2974 = vcvt.s32.f32 %v2958
        %v2975 = vcvt.s32.f32 %v2959
        %v2976 = vcvt.s32.f32 %v2960
        %v2977 = vcvt.s32.f32 %v2961
        %v2978 = vcvt.s32.f32 %v2962
        %v2979 = vcvt.s32.f32 %v2963
        %v2980 = vmul.f32 %v2644, %v2964
        %v2981 = vmul.f32 %v2645, %v2965
        %v2982 = vmul.f32 %v2646, %v2966
        %v2983 = vmul.f32 %v2647, %v2967
        %v2984 = vmul.f32 %v2648, %v2968
        %v2985 = vmul.f32 %v2649, %v2969
        %v2986 = vmul.f32 %v2650, %v2970
        %v2987 = vmul.f32 %v2651, %v2971
        %v2988 = vmul.f32 %v2652, %v2972
        %v2989 = vmul.f32 %v2653, %v2973
        %v2990 = vmul.f32 %v2654, %v2974
        %v2991 = vmul.f32 %v2655, %v2975
        %v2992 = vmul.f32 %v2656, %v2976
        %v2993 = vmul.f32 %v2657, %v2977
        %v2994 = vmul.f32 %v2658, %v2978
        %v2995 = vmul.f32 %v2659, %v2979
        %v2996 = vsel %vm2531, %v2980, 0.0
        %v2997 = vrot.slane %v2996, 4
        %v2998 = vadd.f32 %v2996, %v2997
        %v2999 = vrot.slane %v2998, 2
        %v3000 = vadd.f32 %v2998, %v2999
        %v3001 = vrot.slane %v3000, 1
        %v3002 = vadd.f32 %v3000, %v3001
        %v3003 = vsel %vm2531, %v2981, 0.0
        %v3004 = vrot.slane %v3003, 4
        %v3005 = vadd.f32 %v3003, %v3004
        %v3006 = vrot.slane %v3005, 2
        %v3007 = vadd.f32 %v3005, %v3006
        %v3008 = vrot.slane %v3007, 1
        %v3009 = vadd.f32 %v3007, %v3008
        %v3010 = vsel %vm2531, %v2982, 0.0
        %v3011 = vrot.slane %v3010, 4
        %v3012 = vadd.f32 %v3010, %v3011
        %v3013 = vrot.slane %v3012, 2
        %v3014 = vadd.f32 %v3012, %v3013
        %v3015 = vrot.slane %v3014, 1
        %v3016 = vadd.f32 %v3014, %v3015
        %v3017 = vsel %vm2531, %v2983, 0.0
        %v3018 = vrot.slane %v3017, 4
        %v3019 = vadd.f32 %v3017, %v3018
        %v3020 = vrot.slane %v3019, 2
        %v3021 = vadd.f32 %v3019, %v3020
        %v3022 = vrot.slane %v3021, 1
        %v3023 = vadd.f32 %v3021, %v3022
        %v3024 = vsel %vm2531, %v2984, 0.0
        %v3025 = vrot.slane %v3024, 4
        %v3026 = vadd.f32 %v3024, %v3025
        %v3027 = vrot.slane %v3026, 2
        %v3028 = vadd.f32 %v3026, %v3027
        %v3029 = vrot.slane %v3028, 1
        %v3030 = vadd.f32 %v3028, %v3029
        %v3031 = vsel %vm2531, %v2985, 0.0
        %v3032 = vrot.slane %v3031, 4
        %v3033 = vadd.f32 %v3031, %v3032
        %v3034 = vrot.slane %v3033, 2
        %v3035 = vadd.f32 %v3033, %v3034
        %v3036 = vrot.slane %v3035, 1
        %v3037 = vadd.f32 %v3035, %v3036
        %v3038 = vsel %vm2531, %v2986, 0.0
        %v3039 = vrot.slane %v3038, 4
        %v3040 = vadd.f32 %v3038, %v3039
        %v3041 = vrot.slane %v3040, 2
        %v3042 = vadd.f32 %v3040, %v3041
        %v3043 = vrot.slane %v3042, 1
        %v3044 = vadd.f32 %v3042, %v3043
        %v3045 = vsel %vm2531, %v2987, 0.0
        %v3046 = vrot.slane %v3045, 4
        %v3047 = vadd.f32 %v3045, %v3046
        %v3048 = vrot.slane %v3047, 2
        %v3049 = vadd.f32 %v3047, %v3048
        %v3050 = vrot.slane %v3049, 1
        %v3051 = vadd.f32 %v3049, %v3050
        %v3052 = vsel %vm2531, %v2988, 0.0
        %v3053 = vrot.slane %v3052, 4
        %v3054 = vadd.f32 %v3052, %v3053
        %v3055 = vrot.slane %v3054, 2
        %v3056 = vadd.f32 %v3054, %v3055
        %v3057 = vrot.slane %v3056, 1
        %v3058 = vadd.f32 %v3056, %v3057
        %v3059 = vsel %vm2531, %v2989, 0.0
        %v3060 = vrot.slane %v3059, 4
        %v3061 = vadd.f32 %v3059, %v3060
        %v3062 = vrot.slane %v3061, 2
        %v3063 = vadd.f32 %v3061, %v3062
        %v3064 = vrot.slane %v3063, 1
        %v3065 = vadd.f32 %v3063, %v3064
        %v3066 = vsel %vm2531, %v2990, 0.0
        %v3067 = vrot.slane %v3066, 4
        %v3068 = vadd.f32 %v3066, %v3067
        %v3069 = vrot.slane %v3068, 2
        %v3070 = vadd.f32 %v3068, %v3069
        %v3071 = vrot.slane %v3070, 1
        %v3072 = vadd.f32 %v3070, %v3071
        %v3073 = vsel %vm2531, %v2991, 0.0
        %v3074 = vrot.slane %v3073, 4
        %v3075 = vadd.f32 %v3073, %v3074
        %v3076 = vrot.slane %v3075, 2
        %v3077 = vadd.f32 %v3075, %v3076
        %v3078 = vrot.slane %v3077, 1
        %v3079 = vadd.f32 %v3077, %v3078
        %v3080 = vsel %vm2531, %v2992, 0.0
        %v3081 = vrot.slane %v3080, 4
        %v3082 = vadd.f32 %v3080, %v3081
        %v3083 = vrot.slane %v3082, 2
        %v3084 = vadd.f32 %v3082, %v3083
        %v3085 = vrot.slane %v3084, 1
        %v3086 = vadd.f32 %v3084, %v3085
        %v3087 = vsel %vm2531, %v2993, 0.0
        %v3088 = vrot.slane %v3087, 4
        %v3089 = vadd.f32 %v3087, %v3088
        %v3090 = vrot.slane %v3089, 2
        %v3091 = vadd.f32 %v3089, %v3090
        %v3092 = vrot.slane %v3091, 1
        %v3093 = vadd.f32 %v3091, %v3092
        %v3094 = vsel %vm2531, %v2994, 0.0
        %v3095 = vrot.slane %v3094, 4
        %v3096 = vadd.f32 %v3094, %v3095
        %v3097 = vrot.slane %v3096, 2
        %v3098 = vadd.f32 %v3096, %v3097
        %v3099 = vrot.slane %v3098, 1
        %v3100 = vadd.f32 %v3098, %v3099
        %v3101 = vsel %vm2531, %v2995, 0.0
        %v3102 = vrot.slane %v3101, 4
        %v3103 = vadd.f32 %v3101, %v3102
        %v3104 = vrot.slane %v3103, 2
        %v3105 = vadd.f32 %v3103, %v3104
        %v3106 = vrot.slane %v3105, 1
        %v3107 = vadd.f32 %v3105, %v3106
        %v3108 = vsub.f32 %v2837, %v3002
        %v3109 = vsub.f32 %v2839, %v3009
        %v3110 = vsub.f32 %v2841, %v3016
        %v3111 = vsub.f32 %v2843, %v3023
        %v3112 = vsub.f32 %v2845, %v3030
        %v3113 = vsub.f32 %v2847, %v3037
        %v3114 = vsub.f32 %v2849, %v3044
        %v3115 = vsub.f32 %v2851, %v3051
        %v3116 = vsub.f32 %v2853, %v3058
        %v3117 = vsub.f32 %v2855, %v3065
        %v3118 = vsub.f32 %v2857, %v3072
        %v3119 = vsub.f32 %v2859, %v3079
        %v3120 = vsub.f32 %v2861, %v3086
        %v3121 = vsub.f32 %v2863, %v3093
        %v3122 = vsub.f32 %v2865, %v3100
        %v3123 = vsub.f32 %v2867, %v3107
        %v3140 = vcombine.low %v3108, %v3109
        %v3141 = vcombine.low %v3110, %v3111
        %v3142 = vcombine.low %v3112, %v3113
        %v3143 = vcombine.low %v3114, %v3115
        %v3145 = vunpack.c.l.s4 1966171168
        %v3146 = vunpack.c.0.s8 %v3145
        %v3147 = vlaneseq
        %v3148 = vshrl.u32 %v3147, 7
        %v3149 = vsub.s32 %v3146, %v3148
        %v3150 = vrot.slane %v3140, %v3149
        %v3152 = vunpack.c.l.s4 1966171168
        %v3153 = vunpack.c.0.s8 %v3152
        %v3154 = vlaneseq
        %v3155 = vshrl.u32 %v3154, 7
        %v3156 = vsub.s32 %v3153, %v3155
        %v3157 = vrot.slane %v3141, %v3156
        %v3159 = vunpack.c.l.s4 1966171168
        %v3160 = vunpack.c.0.s8 %v3159
        %v3161 = vlaneseq
        %v3162 = vshrl.u32 %v3161, 7
        %v3163 = vsub.s32 %v3160, %v3162
        %v3164 = vrot.slane %v3142, %v3163
        %v3166 = vunpack.c.l.s4 1966171168
        %v3167 = vunpack.c.0.s8 %v3166
        %v3168 = vlaneseq
        %v3169 = vshrl.u32 %v3168, 7
        %v3170 = vsub.s32 %v3167, %v3169
        %v3171 = vrot.slane %v3143, %v3170
        %v3172 = vcombine.low %v3150, %v3157
        %v3173 = vcombine.low %v3164, %v3171
        %v3175 = vunpack.c.l.s4 1966171168
        %v3176 = vunpack.c.0.s8 %v3175
        %v3177 = vlaneseq
        %v3178 = vshrl.u32 %v3177, 7
        %v3179 = vsub.s32 %v3176, %v3178
        %v3180 = vrot.slane %v3172, %v3179
        %v3182 = vunpack.c.l.s4 1966171168
        %v3183 = vunpack.c.0.s8 %v3182
        %v3184 = vlaneseq
        %v3185 = vshrl.u32 %v3184, 7
        %v3186 = vsub.s32 %v3183, %v3185
        %v3187 = vrot.slane %v3173, %v3186
        %v3188 = vcombine.low %v3180, %v3187
        %v3189 = vcombine.low %v3116, %v3117
        %v3190 = vcombine.low %v3118, %v3119
        %v3191 = vcombine.low %v3120, %v3121
        %v3192 = vcombine.low %v3122, %v3123
        %v3194 = vunpack.c.l.s4 1966171168
        %v3195 = vunpack.c.0.s8 %v3194
        %v3196 = vlaneseq
        %v3197 = vshrl.u32 %v3196, 7
        %v3198 = vsub.s32 %v3195, %v3197
        %v3199 = vrot.slane %v3189, %v3198
        %v3201 = vunpack.c.l.s4 1966171168
        %v3202 = vunpack.c.0.s8 %v3201
        %v3203 = vlaneseq
        %v3204 = vshrl.u32 %v3203, 7
        %v3205 = vsub.s32 %v3202, %v3204
        %v3206 = vrot.slane %v3190, %v3205
        %v3208 = vunpack.c.l.s4 1966171168
        %v3209 = vunpack.c.0.s8 %v3208
        %v3210 = vlaneseq
        %v3211 = vshrl.u32 %v3210, 7
        %v3212 = vsub.s32 %v3209, %v3211
        %v3213 = vrot.slane %v3191, %v3212
        %v3215 = vunpack.c.l.s4 1966171168
        %v3216 = vunpack.c.0.s8 %v3215
        %v3217 = vlaneseq
        %v3218 = vshrl.u32 %v3217, 7
        %v3219 = vsub.s32 %v3216, %v3218
        %v3220 = vrot.slane %v3192, %v3219
        %v3221 = vcombine.low %v3199, %v3206
        %v3222 = vcombine.low %v3213, %v3220
        %v3224 = vunpack.c.l.s4 1966171168
        %v3225 = vunpack.c.0.s8 %v3224
        %v3226 = vlaneseq
        %v3227 = vshrl.u32 %v3226, 7
        %v3228 = vsub.s32 %v3225, %v3227
        %v3229 = vrot.slane %v3221, %v3228
        %v3231 = vunpack.c.l.s4 1966171168
        %v3232 = vunpack.c.0.s8 %v3231
        %v3233 = vlaneseq
        %v3234 = vshrl.u32 %v3233, 7
        %v3235 = vsub.s32 %v3232, %v3234
        %v3236 = vrot.slane %v3222, %v3235
        %v3237 = vcombine.low %v3229, %v3236
        %3240 = vst [vmem:[%s592] sm:$0xff] %v3188
        %3241 = vst [vmem:[%s592 + $0x8] sm:$0xff] %v3237
        %v3242 = vmul.f32 %v2820, %v2964
        %v3243 = vmul.f32 %v2821, %v2965
        %v3244 = vmul.f32 %v2822, %v2966
        %v3245 = vmul.f32 %v2823, %v2967
        %v3246 = vmul.f32 %v2824, %v2968
        %v3247 = vmul.f32 %v2825, %v2969
        %v3248 = vmul.f32 %v2826, %v2970
        %v3249 = vmul.f32 %v2827, %v2971
        %v3250 = vmul.f32 %v2828, %v2972
        %v3251 = vmul.f32 %v2829, %v2973
        %v3252 = vmul.f32 %v2830, %v2974
        %v3253 = vmul.f32 %v2831, %v2975
        %v3254 = vmul.f32 %v2832, %v2976
        %v3255 = vmul.f32 %v2833, %v2977
        %v3256 = vmul.f32 %v2834, %v2978
        %v3257 = vmul.f32 %v2835, %v2979
        %v3258 = vsel %vm2531, %v3242, 0.0
        %v3259 = vsel %vm2531, %v3243, 0.0
        %v3260 = vadd.f32 %v3258, %v3259
        %v3261 = vsel %vm2531, %v3244, 0.0
        %v3262 = vadd.f32 %v3260, %v3261
        %v3263 = vsel %vm2531, %v3245, 0.0
        %v3264 = vadd.f32 %v3262, %v3263
        %v3265 = vsel %vm2531, %v3246, 0.0
        %v3266 = vadd.f32 %v3264, %v3265
        %v3267 = vsel %vm2531, %v3247, 0.0
        %v3268 = vadd.f32 %v3266, %v3267
        %v3269 = vsel %vm2531, %v3248, 0.0
        %v3270 = vadd.f32 %v3268, %v3269
        %v3271 = vsel %vm2531, %v3249, 0.0
        %v3272 = vadd.f32 %v3270, %v3271
        %v3273 = vsel %vm2531, %v3250, 0.0
        %v3274 = vadd.f32 %v3272, %v3273
        %v3275 = vsel %vm2531, %v3251, 0.0
        %v3276 = vadd.f32 %v3274, %v3275
        %v3277 = vsel %vm2531, %v3252, 0.0
        %v3278 = vadd.f32 %v3276, %v3277
        %v3279 = vsel %vm2531, %v3253, 0.0
        %v3280 = vadd.f32 %v3278, %v3279
        %v3281 = vsel %vm2531, %v3254, 0.0
        %v3282 = vadd.f32 %v3280, %v3281
        %v3283 = vsel %vm2531, %v3255, 0.0
        %v3284 = vadd.f32 %v3282, %v3283
        %v3285 = vsel %vm2531, %v3256, 0.0
        %v3286 = vadd.f32 %v3284, %v3285
        %v3287 = vsel %vm2531, %v3257, 0.0
        %v3288 = vadd.f32 %v3286, %v3287
        %3289 = vadd.xlane.f32.xlu0 %v3288
        %v3290 = vpop.xlane.xlu0 %3289
        %v3291 = vld [vmem:[%s612] sm:$0x1f]
        %v3292 = vadd.f32 %v3291, %v3290
        %vm3293 = vcmask 4096
        %3294 = vst.msk [vmem:[%s612] sm:$0x1f] %vm3293, %v3292
        %v3295 = vld [vmem:[%s616] sm:$0x1f]
        %v3296 = vsel %vm2531, %v2820, 0.0
        %v3297 = vsel %vm2531, %v2821, 0.0
        %v3298 = vadd.f32 %v3296, %v3297
        %v3299 = vsel %vm2531, %v2822, 0.0
        %v3300 = vadd.f32 %v3298, %v3299
        %v3301 = vsel %vm2531, %v2823, 0.0
        %v3302 = vadd.f32 %v3300, %v3301
        %v3303 = vsel %vm2531, %v2824, 0.0
        %v3304 = vadd.f32 %v3302, %v3303
        %v3305 = vsel %vm2531, %v2825, 0.0
        %v3306 = vadd.f32 %v3304, %v3305
        %v3307 = vsel %vm2531, %v2826, 0.0
        %v3308 = vadd.f32 %v3306, %v3307
        %v3309 = vsel %vm2531, %v2827, 0.0
        %v3310 = vadd.f32 %v3308, %v3309
        %v3311 = vsel %vm2531, %v2828, 0.0
        %v3312 = vadd.f32 %v3310, %v3311
        %v3313 = vsel %vm2531, %v2829, 0.0
        %v3314 = vadd.f32 %v3312, %v3313
        %v3315 = vsel %vm2531, %v2830, 0.0
        %v3316 = vadd.f32 %v3314, %v3315
        %v3317 = vsel %vm2531, %v2831, 0.0
        %v3318 = vadd.f32 %v3316, %v3317
        %v3319 = vsel %vm2531, %v2832, 0.0
        %v3320 = vadd.f32 %v3318, %v3319
        %v3321 = vsel %vm2531, %v2833, 0.0
        %v3322 = vadd.f32 %v3320, %v3321
        %v3323 = vsel %vm2531, %v2834, 0.0
        %v3324 = vadd.f32 %v3322, %v3323
        %v3325 = vsel %vm2531, %v2835, 0.0
        %v3326 = vadd.f32 %v3324, %v3325
        %3327 = vadd.xlane.f32.xlu0 %v3326
        %v3328 = vpop.xlane.xlu0 %3327
        %v3329 = vsub.f32 %v3328, %v3290
        %v3330 = vadd.f32 %v3295, %v3329
        %3331 = vst.msk [vmem:[%s616] sm:$0x1f] %vm3293, %v3330
        %v3332 = vld [vmem:[%s620] sm:$0x1f]
        %v3333 = vsel %vm2531, %v2964, 0.0
        %v3334 = vsel %vm2531, %v2965, 0.0
        %v3335 = vadd.f32 %v3333, %v3334
        %v3336 = vsel %vm2531, %v2966, 0.0
        %v3337 = vadd.f32 %v3335, %v3336
        %v3338 = vsel %vm2531, %v2967, 0.0
        %v3339 = vadd.f32 %v3337, %v3338
        %v3340 = vsel %vm2531, %v2968, 0.0
        %v3341 = vadd.f32 %v3339, %v3340
        %v3342 = vsel %vm2531, %v2969, 0.0
        %v3343 = vadd.f32 %v3341, %v3342
        %v3344 = vsel %vm2531, %v2970, 0.0
        %v3345 = vadd.f32 %v3343, %v3344
        %v3346 = vsel %vm2531, %v2971, 0.0
        %v3347 = vadd.f32 %v3345, %v3346
        %v3348 = vsel %vm2531, %v2972, 0.0
        %v3349 = vadd.f32 %v3347, %v3348
        %v3350 = vsel %vm2531, %v2973, 0.0
        %v3351 = vadd.f32 %v3349, %v3350
        %v3352 = vsel %vm2531, %v2974, 0.0
        %v3353 = vadd.f32 %v3351, %v3352
        %v3354 = vsel %vm2531, %v2975, 0.0
        %v3355 = vadd.f32 %v3353, %v3354
        %v3356 = vsel %vm2531, %v2976, 0.0
        %v3357 = vadd.f32 %v3355, %v3356
        %v3358 = vsel %vm2531, %v2977, 0.0
        %v3359 = vadd.f32 %v3357, %v3358
        %v3360 = vsel %vm2531, %v2978, 0.0
        %v3361 = vadd.f32 %v3359, %v3360
        %v3362 = vsel %vm2531, %v2979, 0.0
        %v3363 = vadd.f32 %v3361, %v3362
        %3364 = vadd.xlane.f32.xlu0 %v3363
        %v3365 = vpop.xlane.xlu0 %3364
        %v3366 = vsub.f32 %v3365, %v3290
        %v3367 = vadd.f32 %v3332, %v3366
        %3368 = vst.msk [vmem:[%s620] sm:$0x1f] %vm3293, %v3367
        %s3369 = smul.u32 16, %s27
        %p3370 = scmp.lt.s32.totalorder %s26, 1
        %s3371 = scalar_select %p3370, %s26, 1
        %p3372 = scmp.lt.s32.totalorder %s3369, 31
        %s3373 = scalar_select %p3372, %s3369, 31
        %s3374 = smul.addr %s3371, 32
        %s3375 = sadd.s32 %s3373, %s3374
        %s3376 = scalar_lea.vmem %s3, %s3375
        %s3377 = smul.u32 16, %s27
        %p3378 = scmp.lt.s32.totalorder %s26, 1
        %s3379 = scalar_select %p3378, %s26, 1
        %p3380 = scmp.lt.s32.totalorder %s3377, 31
        %s3381 = scalar_select %p3380, %s3377, 31
        %s3382 = smul.addr %s3379, 32
        %s3383 = sadd.s32 %s3381, %s3382
        %s3384 = scalar_lea.vmem %s4, %s3383
        %p3385 = scmp.lt.s32.totalorder %s26, 1
        %s3386 = scalar_select %p3385, %s26, 1
        %s3387 = smul.addr %s3386, 3
        %s3388 = smul.addr %s3387, 8
        %s3389 = scalar_lea.vmem %s5, %s3388
        %p3390 = scmp.lt.s32.totalorder %s26, 1
        %s3391 = scalar_select %p3390, %s26, 1
        %s3392 = smul.addr %s3391, 3
        %s3393 = smul.addr %s3392, 8
        %s3394 = scalar_lea.vmem %s6, %s3393
        %p3395 = scmp.lt.s32.totalorder %s26, 1
        %s3396 = scalar_select %p3395, %s26, 1
        %s3397 = smul.addr %s3396, 3
        %s3398 = smul.addr %s3397, 8
        %s3399 = scalar_lea.vmem %s7, %s3398
        %p3400 = scmp.lt.s32.totalorder %s26, 1
        %s3401 = scalar_select %p3400, %s26, 1
        %s3402 = smul.addr %s3401, 8
        %s3403 = scalar_lea.vmem %s8, %s3402
        %p3404 = scmp.lt.s32.totalorder %s26, 1
        %s3405 = scalar_select %p3404, %s26, 1
        %s3406 = smul.addr %s3405, 8
        %s3407 = scalar_lea.vmem %s9, %s3406
        %p3408 = scmp.lt.s32.totalorder %s26, 1
        %s3409 = scalar_select %p3408, %s26, 1
        %s3410 = smul.addr %s3409, 8
        %s3411 = scalar_lea.vmem %s10, %s3410
        // Predicated region
        $region60: #{region_dc_and_topk_loss.1} parent=50 // pred_check
          %p3412 = pneg %p131
        $region61: #{region_dc_and_topk_loss.1} parent=50 // pred_check_branch
          %3414 = sbr.rel (%p3412) target = $region63
        $region62: #{region_dc_and_topk_loss.1} parent=50 // pred_region
          %s3415 = smul.u32 16, %s27
        $region63: #{region_dc_and_topk_loss.1} parent=50 // pred_fallthru
          _
        // Predicated region
        $region64: #{region_dc_and_topk_loss.1} parent=50 // pred_check
          %p3416 = pneg %p159
        $region65: #{region_dc_and_topk_loss.1} parent=50 // pred_check_branch
          %3418 = sbr.rel (%p3416) target = $region67
        $region66: #{region_dc_and_topk_loss.1} parent=50 // pred_region
          %s3419 = smul.u32 16, %s27
        $region67: #{region_dc_and_topk_loss.1} parent=50 // pred_fallthru
          _
        // Predicated region
        $region68: #{region_dc_and_topk_loss.1} parent=50 // pred_check
          %p3420 = pneg %p185
        $region69: #{region_dc_and_topk_loss.1} parent=50 // pred_check_branch
          %3422 = sbr.rel (%p3420) target = $region71
        $region70: #{region_dc_and_topk_loss.1} parent=50 // pred_region
          _
        $region71: #{region_dc_and_topk_loss.1} parent=50 // pred_fallthru
          _
        // Predicated region
        $region72: #{region_dc_and_topk_loss.1} parent=50 // pred_check
          %p3423 = pneg %p211
        $region73: #{region_dc_and_topk_loss.1} parent=50 // pred_check_branch
          %3425 = sbr.rel (%p3423) target = $region75
        $region74: #{region_dc_and_topk_loss.1} parent=50 // pred_region
          _
        $region75: #{region_dc_and_topk_loss.1} parent=50 // pred_fallthru
          _
        // Predicated region
        $region76: #{region_dc_and_topk_loss.1} parent=50 // pred_check
          %p3426 = pneg %p237
        $region77: #{region_dc_and_topk_loss.1} parent=50 // pred_check_branch
          %3428 = sbr.rel (%p3426) target = $region79
        $region78: #{region_dc_and_topk_loss.1} parent=50 // pred_region
          _
        $region79: #{region_dc_and_topk_loss.1} parent=50 // pred_fallthru
          _
        // Predicated region
        $region80: #{region_dc_and_topk_loss.1} parent=50 // pred_check
          %p3429 = pneg %p263
        $region81: #{region_dc_and_topk_loss.1} parent=50 // pred_check_branch
          %3431 = sbr.rel (%p3429) target = $region83
        $region82: #{region_dc_and_topk_loss.1} parent=50 // pred_region
          _
        $region83: #{region_dc_and_topk_loss.1} parent=50 // pred_fallthru
          _
        // Predicated region
        $region84: #{region_dc_and_topk_loss.1} parent=50 // pred_check
          %p3432 = pneg %p289
        $region85: #{region_dc_and_topk_loss.1} parent=50 // pred_check_branch
          %3434 = sbr.rel (%p3432) target = $region87
        $region86: #{region_dc_and_topk_loss.1} parent=50 // pred_region
          _
        $region87: #{region_dc_and_topk_loss.1} parent=50 // pred_fallthru
          _
        // Predicated region
        $region88: #{region_dc_and_topk_loss.1} parent=50 // pred_check
          %p3435 = pneg %p315
        $region89: #{region_dc_and_topk_loss.1} parent=50 // pred_check_branch
          %3437 = sbr.rel (%p3435) target = $region91
        $region90: #{region_dc_and_topk_loss.1} parent=50 // pred_region
          _
        $region91: #{region_dc_and_topk_loss.1} parent=50 // pred_fallthru
          _
      $region51: #{region_dc_and_topk_loss.1} parent=5 // pred_fallthru
        _
      %p3438 = scmp.le.s32.totalorder 2, %s17
      // Predicated region
      $region92: #{region_dc_and_topk_loss.1} parent=5 // pred_check
        %p3439 = pneg %p3438
      $region93: #{region_dc_and_topk_loss.1} parent=5 // pred_check_branch
        %3441 = sbr.rel (%p3439) target = $region95
      $region94: #{region_dc_and_topk_loss.1} parent=5 // pred_region
        %s3442 = ssub.s32 %s17, 2
        // Predicated region
        $region96: #{region_dc_and_topk_loss.1} parent=94 // pred_check
          %p3443 = pneg %p137
        $region97: #{region_dc_and_topk_loss.1} parent=94 // pred_check_branch
          %3445 = sbr.rel (%p3443) target = $region99
        $region98: #{region_dc_and_topk_loss.1} parent=94 // pred_region
          %s3446 = smul.u32 16, %s29
          %p3447 = scmp.lt.s32.totalorder %s28, 1
          %s3448 = scalar_select %p3447, %s28, 1
          %p3449 = scmp.lt.s32.totalorder %s3446, 31
          %s3450 = scalar_select %p3449, %s3446, 31
          %s3451 = smul.addr %s3448, 32
          %s3452 = sadd.s32 %s3450, %s3451
          %s3453 = scalar_lea.vmem %s3, %s3452
        $region99: #{region_dc_and_topk_loss.1} parent=94 // pred_fallthru
          _
        // Predicated region
        $region100: #{region_dc_and_topk_loss.1} parent=94 // pred_check
          %p3454 = pneg %p165
        $region101: #{region_dc_and_topk_loss.1} parent=94 // pred_check_branch
          %3456 = sbr.rel (%p3454) target = $region103
        $region102: #{region_dc_and_topk_loss.1} parent=94 // pred_region
          %s3457 = smul.u32 16, %s29
          %p3458 = scmp.lt.s32.totalorder %s28, 1
          %s3459 = scalar_select %p3458, %s28, 1
          %p3460 = scmp.lt.s32.totalorder %s3457, 31
          %s3461 = scalar_select %p3460, %s3457, 31
          %s3462 = smul.addr %s3459, 32
          %s3463 = sadd.s32 %s3461, %s3462
          %s3464 = scalar_lea.vmem %s4, %s3463
        $region103: #{region_dc_and_topk_loss.1} parent=94 // pred_fallthru
          _
        // Predicated region
        $region104: #{region_dc_and_topk_loss.1} parent=94 // pred_check
          %p3465 = pneg %p191
        $region105: #{region_dc_and_topk_loss.1} parent=94 // pred_check_branch
          %3467 = sbr.rel (%p3465) target = $region107
        $region106: #{region_dc_and_topk_loss.1} parent=94 // pred_region
          %p3468 = scmp.lt.s32.totalorder %s28, 1
          %s3469 = scalar_select %p3468, %s28, 1
          %s3470 = smul.addr %s3469, 3
          %s3471 = smul.addr %s3470, 8
          %s3472 = scalar_lea.vmem %s5, %s3471
        $region107: #{region_dc_and_topk_loss.1} parent=94 // pred_fallthru
          _
        // Predicated region
        $region108: #{region_dc_and_topk_loss.1} parent=94 // pred_check
          %p3473 = pneg %p217
        $region109: #{region_dc_and_topk_loss.1} parent=94 // pred_check_branch
          %3475 = sbr.rel (%p3473) target = $region111
        $region110: #{region_dc_and_topk_loss.1} parent=94 // pred_region
          %p3476 = scmp.lt.s32.totalorder %s28, 1
          %s3477 = scalar_select %p3476, %s28, 1
          %s3478 = smul.addr %s3477, 3
          %s3479 = smul.addr %s3478, 8
          %s3480 = scalar_lea.vmem %s6, %s3479
        $region111: #{region_dc_and_topk_loss.1} parent=94 // pred_fallthru
          _
        // Predicated region
        $region112: #{region_dc_and_topk_loss.1} parent=94 // pred_check
          %p3481 = pneg %p243
        $region113: #{region_dc_and_topk_loss.1} parent=94 // pred_check_branch
          %3483 = sbr.rel (%p3481) target = $region115
        $region114: #{region_dc_and_topk_loss.1} parent=94 // pred_region
          %p3484 = scmp.lt.s32.totalorder %s28, 1
          %s3485 = scalar_select %p3484, %s28, 1
          %s3486 = smul.addr %s3485, 3
          %s3487 = smul.addr %s3486, 8
          %s3488 = scalar_lea.vmem %s7, %s3487
        $region115: #{region_dc_and_topk_loss.1} parent=94 // pred_fallthru
          _
        // Predicated region
        $region116: #{region_dc_and_topk_loss.1} parent=94 // pred_check
          %p3489 = pneg %p269
        $region117: #{region_dc_and_topk_loss.1} parent=94 // pred_check_branch
          %3491 = sbr.rel (%p3489) target = $region119
        $region118: #{region_dc_and_topk_loss.1} parent=94 // pred_region
          %p3492 = scmp.lt.s32.totalorder %s28, 1
          %s3493 = scalar_select %p3492, %s28, 1
          %s3494 = smul.addr %s3493, 8
          %s3495 = scalar_lea.vmem %s8, %s3494
        $region119: #{region_dc_and_topk_loss.1} parent=94 // pred_fallthru
          _
        // Predicated region
        $region120: #{region_dc_and_topk_loss.1} parent=94 // pred_check
          %p3496 = pneg %p295
        $region121: #{region_dc_and_topk_loss.1} parent=94 // pred_check_branch
          %3498 = sbr.rel (%p3496) target = $region123
        $region122: #{region_dc_and_topk_loss.1} parent=94 // pred_region
          %p3499 = scmp.lt.s32.totalorder %s28, 1
          %s3500 = scalar_select %p3499, %s28, 1
          %s3501 = smul.addr %s3500, 8
          %s3502 = scalar_lea.vmem %s9, %s3501
        $region123: #{region_dc_and_topk_loss.1} parent=94 // pred_fallthru
          _
        // Predicated region
        $region124: #{region_dc_and_topk_loss.1} parent=94 // pred_check
          %p3503 = pneg %p321
        $region125: #{region_dc_and_topk_loss.1} parent=94 // pred_check_branch
          %3505 = sbr.rel (%p3503) target = $region127
        $region126: #{region_dc_and_topk_loss.1} parent=94 // pred_region
          %p3506 = scmp.lt.s32.totalorder %s28, 1
          %s3507 = scalar_select %p3506, %s28, 1
          %s3508 = smul.addr %s3507, 8
          %s3509 = scalar_lea.vmem %s10, %s3508
        $region127: #{region_dc_and_topk_loss.1} parent=94 // pred_fallthru
          _
      $region95: #{region_dc_and_topk_loss.1} parent=5 // pred_fallthru
        _
    $region6: #{region_dc_and_topk_loss.1} parent=1 // loop_footer
      %s21 = sadd.s32 1, %s17
    $region7: #{region_dc_and_topk_loss.1} parent=1 // loop_footer_branch
      %16 = sbr.rel target = $region3
    $region8: #{region_dc_and_topk_loss.1} parent=1 // loop_exit
      _

</llo_original>
